<compile_context>
chip_gen: v7x
topology: tpu7x:2x2x1
jax: 0.10.0
libtpu: 0.0.40
codegen_flags: <defaults>
</compile_context>

<pallas_src>
import functools

import jax
import jax.numpy as jnp
from jax import lax
from jax.experimental import pallas as pl
from jax.experimental.pallas import tpu as pltpu


# Matmul operand dtype: bf16 feeds the MXU at full rate on v5e/v6e/v7x while all
# accumulation and all LayerNorm / softmax / SiLU math stays in float32.
# Set both to jnp.float32 to recover (near) bit-exact f32 reference numerics.
MATMUL_DTYPE = jnp.bfloat16
ACT_DTYPE = jnp.bfloat16          # inter-kernel activation storage dtype

# Explicit scoped-VMEM budget (v7x has only 64 MiB physical VMEM; 32 MiB is safe
# on every generation and far exceeds what these per-batch blocks need).
_VMEM_LIMIT_BYTES = 32 * 1024 * 1024


# ----------------------------------------------------------------------------
# In-kernel helpers
# ----------------------------------------------------------------------------
def _silu(y):
    return y * jax.nn.sigmoid(y)


def _ln(x, g, b, eps):
    """LayerNorm over the last dim (biased variance, like torch.nn.LayerNorm)."""
    mu = jnp.mean(x, axis=-1, keepdims=True)
    xc = x - mu
    var = jnp.mean(xc * xc, axis=-1, keepdims=True)
    return xc * lax.rsqrt(var + eps) * g + b


def _edge_masks(shape):
    """Boolean masks for the first / last row along axis 0 (built once per kernel)."""
    row = lax.broadcasted_iota(jnp.int32, shape, 0)
    return row == 0, row == shape[0] - 1


def _width_taps(x, first_row, last_row):
    """Return (x_{w-1}, x_w, x_{w+1}) along axis 0 with zero padding.

    These are the three active taps of a 3x3 conv (padding=1) when H == 1, built
    entirely in VMEM with XLU rolls.  pltpu.roll only accepts non-negative
    shifts, so the "+1" tap uses the equivalent circular shift of (W - 1) and
    masks the wrapped row.
    """
    w = x.shape[0]
    left = jnp.where(first_row, 0.0, pltpu.roll(x, shift=1, axis=0))
    right = jnp.where(last_row, 0.0, pltpu.roll(x, shift=w - 1, axis=0))
    return left, x, right


# ----------------------------------------------------------------------------
# Pallas kernels
# ----------------------------------------------------------------------------
def stem_kernel(x_ref, w1_ref, s1_ref, b1_ref, w2_ref, s2_ref, b2_ref, o_ref):
    """Fused conv1(3-tap)+BN+SiLU -> conv2(1x1)+BN+SiLU on one (W, Cin) batch tile.

    The three shifted taps are concatenated along the contraction dim so conv1
    is a single MXU matmul with K = 3*Cin (accumulation inside the MXU).
    """
    cdt = w1_ref.dtype
    x = x_ref[...].astype(jnp.float32)                           # (W, Cin)
    first, last = _edge_masks(x.shape)
    xl, xm, xr = _width_taps(x, first, last)
    taps = jnp.concatenate([xl, xm, xr], axis=-1).astype(cdt)    # (W, 3*Cin)
    y = jnp.dot(taps, w1_ref[...], preferred_element_type=jnp.float32)
    y = _silu(y * s1_ref[...] + b1_ref[...])                     # conv1 + BN + SiLU
    y = jnp.dot(y.astype(cdt), w2_ref[...], preferred_element_type=jnp.float32)
    o = _silu(y * s2_ref[...] + b2_ref[...])                     # conv2 + BN + SiLU
    o_ref[...] = o.astype(o_ref.dtype)


def blocks_kernel(x_ref, n1g, n1b, wqkv, bqkv, wp, pb, n2g, n2b,
                  f1w, f1b, f2w, f2b, fng, fnb, o_ref, res_ref,
                  *, num_heads, eps, final_eps):
    """All SVTR Blocks (prenorm=False) fused over the depth grid axis.

    grid = (B, depth); depth is "arbitrary".  The residual stream lives in a
    VMEM scratch across depth steps; per-block weights are selected by the
    depth grid coordinate via their BlockSpec index maps.  The encoder-level
    final LayerNorm (eps=1e-6) is applied at the last depth step.

    Attention: x += proj(softmax(qh @ kh^T) @ vh); QKV is ONE (N,C)x(C,3C)
    matmul (scale pre-folded into the Q columns), heads are split with a
    reshape + major-dim transpose (lane dim untouched), and the head merge is
    done by a single (N,C)x(C,C) projection matmul.
    """
    d = pl.program_id(1)
    nd = pl.num_programs(1)
    cdt = wqkv.dtype

    @pl.when(d == 0)
    def _():                                                     # load residual once per batch
        res_ref[...] = x_ref[...].astype(jnp.float32)

    x = res_ref[...]                                             # (N, C) f32 residual
    n_seq, c = x.shape
    nh = num_heads
    hd = c // nh

    # --- Global mixer (multi-head self-attention) ---
    xn = _ln(x, n1g[...], n1b[...], eps)
    qkv = jnp.dot(xn.astype(cdt), wqkv[...],
                  preferred_element_type=jnp.float32) + bqkv[...]            # (N, 3C)
    qkv = jnp.transpose(qkv.reshape(n_seq, 3 * nh, hd), (1, 0, 2))           # (3nh, N, hd)
    q = qkv[:nh].astype(cdt)                                                 # scale pre-folded
    k = qkv[nh:2 * nh].astype(cdt)
    v = qkv[2 * nh:].astype(cdt)

    s = jnp.einsum('hqd,hkd->hqk', q, k, preferred_element_type=jnp.float32)  # (nh, N, N)
    s = s - jnp.max(s, axis=-1, keepdims=True)
    p = jnp.exp(s)
    p = p * pl.reciprocal(jnp.sum(p, axis=-1, keepdims=True), approx=True)

    ctx = jnp.einsum('hqk,hkd->hqd', p.astype(cdt), v,
                     preferred_element_type=jnp.float32)                      # (nh, N, hd)
    ctx = jnp.transpose(ctx, (1, 0, 2)).reshape(n_seq, c)                     # (N, C)
    x = x + jnp.dot(ctx.astype(cdt), wp[...],
                    preferred_element_type=jnp.float32) + pb[...]

    # --- MLP (fc1 -> SiLU -> fc2) ---
    xn2 = _ln(x, n2g[...], n2b[...], eps)
    h1 = jnp.dot(xn2.astype(cdt), f1w[...], preferred_element_type=jnp.float32) + f1b[...]
    h1 = _silu(h1)
    h2 = jnp.dot(h1.astype(cdt), f2w[...], preferred_element_type=jnp.float32) + f2b[...]
    x = x + h2

    res_ref[...] = x                                             # carry residual to next block

    @pl.when(d == nd - 1)
    def _():                                                     # fused final LayerNorm
        o_ref[...] = _ln(x, fng[...], fnb[...], final_eps).astype(o_ref.dtype)


def tail_kernel(z_ref, h_ref, w3_ref, s3_ref, b3_ref, w4_ref, s4_ref, b4_ref,
                w5_ref, s5_ref, b5_ref, o_ref):
    """Fused conv3(1x1) + channel-concat(h, z) + conv4(3-tap) + conv1x1 (all +BN+SiLU).

    The channel concat and the 3 width taps of conv4 are all folded into ONE
    matmul with K = 6*Cin by concatenating [h_l, h_m, h_r, z_l, z_m, z_r] along
    the contraction dim (weight rows pre-ordered to match host-side).
    """
    cdt = w3_ref.dtype
    z = z_ref[...].astype(cdt)                                   # (W, hidden) bf16 activation
    y3 = jnp.dot(z, w3_ref[...], preferred_element_type=jnp.float32)
    y3 = _silu(y3 * s3_ref[...] + b3_ref[...])                   # conv3: (W, Cin)
    h = h_ref[...].astype(jnp.float32)                           # guide, (W, Cin)

    first, last = _edge_masks(h.shape)
    hl, hm, hr = _width_taps(h, first, last)
    zl, zm, zr = _width_taps(y3, first, last)
    taps = jnp.concatenate([hl, hm, hr, zl, zm, zr], axis=-1).astype(cdt)  # (W, 6*Cin)

    y4 = jnp.dot(taps, w4_ref[...], preferred_element_type=jnp.float32)
    y4 = _silu(y4 * s4_ref[...] + b4_ref[...])                   # conv4: (W, Cin//8)

    y5 = jnp.dot(y4.astype(cdt), w5_ref[...], preferred_element_type=jnp.float32)
    y5 = _silu(y5 * s5_ref[...] + b5_ref[...])                   # conv1x1: (W, dims)
    o_ref[...] = y5.astype(o_ref.dtype)


# ----------------------------------------------------------------------------
# Pallas wrappers
# ----------------------------------------------------------------------------
def _batched_spec(tail_shape, ngrid=1):
    """Per-batch block: leading batch axis squeezed out of the kernel ref."""
    nz = len(tail_shape)
    return pl.BlockSpec((None,) + tuple(tail_shape),
                        lambda b, *rest, n=nz: (b,) + (0,) * n)


def _const_specs(arrays):
    """Weights: constant index map -> stay VMEM-resident across grid steps."""
    # TODO(synk): pipeline_mode=pl.Buffered(1) would single-buffer these truly
    # constant blocks and free VMEM headroom on v7x; default double-buffering
    # is kept here for maximal compatibility.
    return [pl.BlockSpec(a.shape, lambda *idx, n=a.ndim: (0,) * n) for a in arrays]


def _depth_specs(arrays):
    """Per-block weights stacked on a leading depth axis, indexed by grid axis 1."""
    return [pl.BlockSpec((None,) + a.shape[1:],
                         lambda b, d, n=a.ndim: (d,) + (0,) * (n - 1))
            for a in arrays]


def _compiler_params(dimension_semantics):
    return pltpu.CompilerParams(dimension_semantics=dimension_semantics,
                                vmem_limit_bytes=_VMEM_LIMIT_BYTES)


def stem_conv(x_bwc, c1, c2, wdtype):
    """conv1 (3x3, pad=1) + BN + SiLU -> conv2 (1x1) + BN + SiLU, fused."""
    B, W, cin = x_bwc.shape
    ch = c2["w"].shape[1]
    w1 = c1["w"].reshape(3 * cin, -1).astype(wdtype)             # taps along contraction dim
    weights = (
        w1, c1["scale"].reshape(1, -1), c1["bias"].reshape(1, -1),
        c2["w"].astype(wdtype), c2["scale"].reshape(1, -1), c2["bias"].reshape(1, -1),
    )
    return pl.pallas_call(
        stem_kernel,
        out_shape=jax.ShapeDtypeStruct((B, W, ch), ACT_DTYPE),
        grid=(B,),
        in_specs=[_batched_spec((W, cin))] + _const_specs(weights),
        out_specs=_batched_spec((W, ch)),
        compiler_params=_compiler_params(("parallel",)),
    )(x_bwc, *weights)


def _stack_block_params(blocks, C, num_heads, wdtype):
    """Stack per-block params over depth; fold the attention scale into Q."""
    hd = C // num_heads
    scale = float(hd) ** -0.5

    def fold_qkv_w(bp):                                           # (C, 3C), cols [q|k|v]
        return bp["qkv_w"].at[:, :C].multiply(scale).astype(wdtype)

    def fold_qkv_b(bp):                                           # (3C,)
        return bp["qkv_b"].at[:C].multiply(scale).reshape(1, 3 * C)

    st = lambda f: jnp.stack([f(bp) for bp in blocks], axis=0)
    hidden = blocks[0]["fc1_w"].shape[1]
    return (
        st(lambda bp: bp["n1g"].reshape(1, C)), st(lambda bp: bp["n1b"].reshape(1, C)),
        st(fold_qkv_w), st(fold_qkv_b),
        st(lambda bp: bp["proj_w"].astype(wdtype)), st(lambda bp: bp["proj_b"].reshape(1, C)),
        st(lambda bp: bp["n2g"].reshape(1, C)), st(lambda bp: bp["n2b"].reshape(1, C)),
        st(lambda bp: bp["fc1_w"].astype(wdtype)), st(lambda bp: bp["fc1_b"].reshape(1, hidden)),
        st(lambda bp: bp["fc2_w"].astype(wdtype)), st(lambda bp: bp["fc2_b"].reshape(1, C)),
    )


def svtr_blocks(x, blocks, norm_g, norm_b, num_heads, wdtype):
    """All transformer blocks + the final encoder LayerNorm in ONE pallas_call."""
    B, N, C = x.shape
    assert C % num_heads == 0, "num_heads must divide hidden_dims"
    depth = len(blocks)
    stacked = _stack_block_params(blocks, C, num_heads, wdtype)
    fng = norm_g.reshape(1, C)
    fnb = norm_b.reshape(1, C)

    kernel = functools.partial(blocks_kernel, num_heads=num_heads,
                               eps=1e-5, final_eps=1e-6)
    # TODO(synk): for large W, flash-tile the sequence axis inside the kernel
    # instead of holding the full (nh, N, N) attention matrix in VMEM.
    return pl.pallas_call(
        kernel,
        out_shape=jax.ShapeDtypeStruct((B, N, C), ACT_DTYPE),
        grid=(B, depth),
        in_specs=[pl.BlockSpec((None, N, C), lambda b, d: (b, 0, 0))]
                 + _depth_specs(stacked)
                 + _const_specs((fng, fnb)),
        out_specs=pl.BlockSpec((None, N, C), lambda b, d: (b, 0, 0)),
        scratch_shapes=[pltpu.VMEM((N, C), jnp.float32)],         # residual stream
        compiler_params=_compiler_params(("parallel", "arbitrary")),
    )(x, *stacked, fng, fnb)


def tail_conv(z_bwc, h_bwc, c3, c4, c1x1, wdtype):
    """conv3 (1x1) -> concat(h, .) -> conv4 (3x3) -> conv1x1, all +BN+SiLU, fused."""
    B, W, ch = z_bwc.shape
    cin = h_bwc.shape[-1]
    dims = c1x1["w"].shape[1]
    w4 = c4["w"]                                                  # (3, 2*cin, cin//8) tap-major
    # Row order must match the in-kernel tap concat [hl, hm, hr, zl, zm, zr]:
    w4h = w4[:, :cin, :].reshape(3 * cin, -1)                     # taps acting on guide h
    w4z = w4[:, cin:, :].reshape(3 * cin, -1)                     # taps acting on conv3 output
    w4_full = jnp.concatenate([w4h, w4z], axis=0).astype(wdtype)  # (6*cin, cin//8)
    weights = (
        c3["w"].astype(wdtype), c3["scale"].reshape(1, -1), c3["bias"].reshape(1, -1),
        w4_full, c4["scale"].reshape(1, -1), c4["bias"].reshape(1, -1),
        c1x1["w"].astype(wdtype), c1x1["scale"].reshape(1, -1), c1x1["bias"].reshape(1, -1),
    )
    return pl.pallas_call(
        tail_kernel,
        out_shape=jax.ShapeDtypeStruct((B, W, dims), jnp.float32),
        grid=(B,),
        in_specs=[_batched_spec((W, ch)), _batched_spec((W, cin))] + _const_specs(weights),
        out_specs=_batched_spec((W, dims)),
        compiler_params=_compiler_params(("parallel",)),
    )(z_bwc, h_bwc, *weights)


# ----------------------------------------------------------------------------
# Parameter initialization (deterministic, synthetic, kernel-ready layouts)
# ----------------------------------------------------------------------------
def make_conv_params(key, cin, cout, ksize):
    k1, k2, k3, k4, k5 = jax.random.split(key, 5)
    w = jax.random.normal(k1, (cout, cin, ksize, ksize), jnp.float32) * 0.1
    gamma = 1.0 + 0.1 * jax.random.normal(k2, (cout,), jnp.float32)
    beta = 0.1 * jax.random.normal(k3, (cout,), jnp.float32)
    mean = 0.1 * jax.random.normal(k4, (cout,), jnp.float32)
    var = 1.0 + 0.1 * jnp.abs(jax.random.normal(k5, (cout,), jnp.float32))
    scale = gamma / jnp.sqrt(var + 1e-5)                          # folded BatchNorm (eval mode)
    bias = beta - mean * scale
    if ksize == 1:
        wmat = w[:, :, 0, 0].T                                    # (cin, cout)
    else:
        # H == 1 -> only the middle kernel row is active; stack taps tap-major:
        # wmat[kw, ci, co] = w[co, ci, 1, kw]  (kw=0: x_{w-1}, 1: x_w, 2: x_{w+1})
        wmat = jnp.transpose(w[:, :, 1, :], (2, 1, 0))            # (3, cin, cout)
    return {"w": wmat, "scale": scale, "bias": bias}


def make_block_params(key, dim, mlp_ratio):
    ks = jax.random.split(key, 4)
    hidden = int(dim * mlp_ratio)
    z = jnp.zeros
    # qkv_w is stored as (dim, 3*dim) with y = x @ qkv_w (i.e. torch W.T); the
    # per-head column order within each of q/k/v matches torch's reshape(.., nh, hd).
    return {
        "n1g": jnp.ones((dim,), jnp.float32), "n1b": z((dim,), jnp.float32),
        "qkv_w": 0.02 * jax.random.normal(ks[0], (dim, 3 * dim), jnp.float32),
        "qkv_b": z((3 * dim,), jnp.float32),
        "proj_w": 0.02 * jax.random.normal(ks[1], (dim, dim), jnp.float32),
        "proj_b": z((dim,), jnp.float32),
        "n2g": jnp.ones((dim,), jnp.float32), "n2b": z((dim,), jnp.float32),
        "fc1_w": 0.02 * jax.random.normal(ks[2], (dim, hidden), jnp.float32),
        "fc1_b": z((hidden,), jnp.float32),
        "fc2_w": 0.02 * jax.random.normal(ks[3], (hidden, dim), jnp.float32),
        "fc2_b": z((dim,), jnp.float32),
    }


def init_params(key, in_channels, dims, depth, hidden_dims, mlp_ratio):
    keys = jax.random.split(key, 5 + depth)
    p = {}
    p["conv1"] = make_conv_params(keys[0], in_channels, in_channels // 8, 3)
    p["conv2"] = make_conv_params(keys[1], in_channels // 8, hidden_dims, 1)
    p["blocks"] = [make_block_params(keys[5 + i], hidden_dims, mlp_ratio)
                   for i in range(depth)]
    p["norm_g"] = jnp.ones((hidden_dims,), jnp.float32)
    p["norm_b"] = jnp.zeros((hidden_dims,), jnp.float32)
    p["conv3"] = make_conv_params(keys[2], hidden_dims, in_channels, 1)
    p["conv4"] = make_conv_params(keys[3], 2 * in_channels, in_channels // 8, 3)
    p["conv1x1"] = make_conv_params(keys[4], in_channels // 8, dims, 1)
    return p


# ----------------------------------------------------------------------------
# Full forward
# ----------------------------------------------------------------------------
def svtr_encoder_forward(x_nchw, params, *, num_heads, wdtype=MATMUL_DTYPE):
    # TODO(synk): Dropout / DropPath / attn-drop (train-time stochastic ops) have
    # no kernel equivalent here; implemented as identity (eval semantics).
    B, Cin, H, W = x_nchw.shape
    assert H == 1, "SVTREncoder forward requires H == 1 (torch.squeeze(dim=2))"
    assert len(params["blocks"]) >= 1

    # use_guide=True: z = detached copy of x; h = z (channels-last view of x)
    h_bwc = jnp.transpose(x_nchw[:, :, 0, :], (0, 2, 1))          # (B, W, Cin)

    # conv1(3x3)+BN+SiLU -> conv2(1x1)+BN+SiLU, fused in one kernel
    z = stem_conv(h_bwc, params["conv1"], params["conv2"], wdtype)    # (B, W, hidden) bf16

    # squeeze(dim=2) + transpose(2,1) -> sequence (B, N=W, C); all blocks + final
    # LayerNorm fused into a single pallas_call with grid=(B, depth).
    z = svtr_blocks(z, params["blocks"], params["norm_g"], params["norm_b"],
                    num_heads, wdtype)                            # (B, N, C) bf16

    # exact semantics of: z.reshape(B, H, W, C) followed by .view(B, C, H, W)
    # (a raw flat reinterpretation in torch, NOT a permute), then back to
    # channels-last (B, W, C) for the 1x1 conv3.
    C = z.shape[-1]
    z = jnp.transpose(z.reshape(B, C, W), (0, 2, 1))              # (B, W, hidden)

    # conv3(1x1) -> concat((h, z), channel) -> conv4(3x3) -> conv1x1, fused
    z = tail_conv(z, h_bwc, params["conv3"], params["conv4"], params["conv1x1"],
                  wdtype)                                         # (B, W, dims) f32

    return jnp.transpose(z, (0, 2, 1))[:, :, None, :]             # NCHW (B, dims, 1, W)


# ----------------------------------------------------------------------------
if __name__ == "__main__":
    B, in_channels, H, W = 2, 16, 1, 16
    dims, depth, hidden_dims, num_heads, mlp_ratio = 32, 2, 32, 8, 2.0

    key = jax.random.PRNGKey(0)
    kx, kp = jax.random.split(key)
    x = jax.random.normal(kx, (B, in_channels, H, W), jnp.float32)
    params = init_params(kp, in_channels, dims, depth, hidden_dims, mlp_ratio)

    fwd = jax.jit(functools.partial(svtr_encoder_forward, num_heads=num_heads))
    out = jax.block_until_ready(fwd(x, params))
    assert out.shape == (B, dims, 1, W), out.shape
    assert bool(jnp.all(jnp.isfinite(out)))
    print("KERNEL_OK")
</pallas_src>

<mosaic_0001>
module attributes {stable_mosaic.version = 11 : i64} {
  func.func @stem_kernel(%arg0: i32, %arg1: memref<1x16x16xf32, #tpu.memory_space<vmem>>, %arg2: memref<48x2xbf16, #tpu.memory_space<vmem>>, %arg3: memref<1x2xf32, #tpu.memory_space<vmem>>, %arg4: memref<1x2xf32, #tpu.memory_space<vmem>>, %arg5: memref<2x32xbf16, #tpu.memory_space<vmem>>, %arg6: memref<1x32xf32, #tpu.memory_space<vmem>>, %arg7: memref<1x32xf32, #tpu.memory_space<vmem>>, %arg8: memref<1x16x32xbf16, #tpu.memory_space<vmem>>) attributes {dimension_semantics = [#tpu.dimension_semantics<parallel>], iteration_bounds = array<i64: 2>, scalar_prefetch = 0 : i64, scratch_operands = 0 : i64, tpu.core_type = #tpu.core_type<tc>, window_params = [{transform_indices = @transform_0, window_bounds = array<i64: 1, 16, 16>}, {pipeline_mode = #tpu.pipeline_mode<synchronous>, transform_indices = @transform_1, window_bounds = array<i64: 48, 2>}, {pipeline_mode = #tpu.pipeline_mode<synchronous>, transform_indices = @transform_2, window_bounds = array<i64: 1, 2>}, {pipeline_mode = #tpu.pipeline_mode<synchronous>, transform_indices = @transform_3, window_bounds = array<i64: 1, 2>}, {pipeline_mode = #tpu.pipeline_mode<synchronous>, transform_indices = @transform_4, window_bounds = array<i64: 2, 32>}, {pipeline_mode = #tpu.pipeline_mode<synchronous>, transform_indices = @transform_5, window_bounds = array<i64: 1, 32>}, {pipeline_mode = #tpu.pipeline_mode<synchronous>, transform_indices = @transform_6, window_bounds = array<i64: 1, 32>}, {transform_indices = @transform_7, window_bounds = array<i64: 1, 16, 32>}]} {
    %c0 = arith.constant 0 : index
    %c0_0 = arith.constant 0 : index
    %c0_1 = arith.constant 0 : index
    %0 = vector.load %arg1[%c0, %c0_0, %c0_1] : memref<1x16x16xf32, #tpu.memory_space<vmem>>, vector<1x16x16xf32>
    %1 = vector.shape_cast %0 : vector<1x16x16xf32> to vector<16x16xf32>
    %2 = tpu.iota {dimensions = array<i32: 0>} : vector<16x16xi32>
    %c0_i32 = arith.constant 0 : i32
    %3 = vector.broadcast %c0_i32 : i32 to vector<16x16xi32>
    %4 = arith.cmpi eq, %2, %3 : vector<16x16xi32>
    %c15_i32 = arith.constant 15 : i32
    %5 = vector.broadcast %c15_i32 : i32 to vector<16x16xi32>
    %6 = arith.cmpi eq, %2, %5 : vector<16x16xi32>
    %c1_i32 = arith.constant 1 : i32
    %7 = tpu.dynamic_rotate %1 by %c1_i32 dim 0 : vector<16x16xf32>, i32 -> vector<16x16xf32>
    %cst = arith.constant 0.000000e+00 : f32
    %8 = vector.broadcast %cst : f32 to vector<16x16xf32>
    %9 = arith.select %4, %8, %7 : vector<16x16xi1>, vector<16x16xf32>
    %c15_i32_2 = arith.constant 15 : i32
    %10 = tpu.dynamic_rotate %1 by %c15_i32_2 dim 0 : vector<16x16xf32>, i32 -> vector<16x16xf32>
    %cst_3 = arith.constant 0.000000e+00 : f32
    %11 = vector.broadcast %cst_3 : f32 to vector<16x16xf32>
    %12 = arith.select %6, %11, %10 : vector<16x16xi1>, vector<16x16xf32>
    %13 = tpu.concatenate %9, %1, %12 in 1 : vector<16x16xf32>, vector<16x16xf32>, vector<16x16xf32> -> vector<16x48xf32>
    %14 = arith.truncf %13 : vector<16x48xf32> to vector<16x48xbf16>
    %c0_4 = arith.constant 0 : index
    %c0_5 = arith.constant 0 : index
    %15 = vector.load %arg2[%c0_4, %c0_5] : memref<48x2xbf16, #tpu.memory_space<vmem>>, vector<48x2xbf16>
    %cst_6 = arith.constant dense<0.000000e+00> : vector<16x2xf32>
    %16 = tpu.matmul %14, %15, %cst_6 {dimension_numbers = #tpu.dot_dimension_numbers<[1], [0], [0], [1], [0, 0, 1, 1], [], []>} : vector<16x48xbf16>, vector<48x2xbf16>, vector<16x2xf32> -> vector<16x2xf32>
    %c0_7 = arith.constant 0 : index
    %c0_8 = arith.constant 0 : index
    %17 = vector.load %arg3[%c0_7, %c0_8] : memref<1x2xf32, #tpu.memory_space<vmem>>, vector<1x2xf32>
    %18 = vector.broadcast %17 : vector<1x2xf32> to vector<16x2xf32>
    %19 = arith.mulf %16, %18 : vector<16x2xf32>
    %c0_9 = arith.constant 0 : index
    %c0_10 = arith.constant 0 : index
    %20 = vector.load %arg4[%c0_9, %c0_10] : memref<1x2xf32, #tpu.memory_space<vmem>>, vector<1x2xf32>
    %21 = vector.broadcast %20 : vector<1x2xf32> to vector<16x2xf32>
    %22 = arith.addf %19, %21 : vector<16x2xf32>
    %23 = arith.negf %22 : vector<16x2xf32>
    %24 = math.exp %23 : vector<16x2xf32>
    %cst_11 = arith.constant 1.000000e+00 : f32
    %25 = vector.broadcast %cst_11 : f32 to vector<16x2xf32>
    %26 = arith.addf %25, %24 : vector<16x2xf32>
    %27 = arith.divf %25, %26 : vector<16x2xf32>
    %28 = arith.mulf %22, %27 : vector<16x2xf32>
    %29 = arith.truncf %28 : vector<16x2xf32> to vector<16x2xbf16>
    %c0_12 = arith.constant 0 : index
    %c0_13 = arith.constant 0 : index
    %30 = vector.load %arg5[%c0_12, %c0_13] : memref<2x32xbf16, #tpu.memory_space<vmem>>, vector<2x32xbf16>
    %cst_14 = arith.constant dense<0.000000e+00> : vector<16x32xf32>
    %31 = tpu.matmul %29, %30, %cst_14 {dimension_numbers = #tpu.dot_dimension_numbers<[1], [0], [0], [1], [0, 0, 1, 1], [], []>} : vector<16x2xbf16>, vector<2x32xbf16>, vector<16x32xf32> -> vector<16x32xf32>
    %c0_15 = arith.constant 0 : index
    %c0_16 = arith.constant 0 : index
    %32 = vector.load %arg6[%c0_15, %c0_16] : memref<1x32xf32, #tpu.memory_space<vmem>>, vector<1x32xf32>
    %33 = vector.broadcast %32 : vector<1x32xf32> to vector<16x32xf32>
    %34 = arith.mulf %31, %33 : vector<16x32xf32>
    %c0_17 = arith.constant 0 : index
    %c0_18 = arith.constant 0 : index
    %35 = vector.load %arg7[%c0_17, %c0_18] : memref<1x32xf32, #tpu.memory_space<vmem>>, vector<1x32xf32>
    %36 = vector.broadcast %35 : vector<1x32xf32> to vector<16x32xf32>
    %37 = arith.addf %34, %36 : vector<16x32xf32>
    %38 = arith.negf %37 : vector<16x32xf32>
    %39 = math.exp %38 : vector<16x32xf32>
    %cst_19 = arith.constant 1.000000e+00 : f32
    %40 = vector.broadcast %cst_19 : f32 to vector<16x32xf32>
    %41 = arith.addf %40, %39 : vector<16x32xf32>
    %42 = arith.divf %40, %41 : vector<16x32xf32>
    %43 = arith.mulf %37, %42 : vector<16x32xf32>
    %44 = arith.truncf %43 : vector<16x32xf32> to vector<16x32xbf16>
    %c0_20 = arith.constant 0 : index
    %c0_21 = arith.constant 0 : index
    %c0_22 = arith.constant 0 : index
    %45 = vector.load %arg8[%c0_20, %c0_21, %c0_22] : memref<1x16x32xbf16, #tpu.memory_space<vmem>>, vector<1x16x32xbf16>
    %46 = vector.shape_cast %45 : vector<1x16x32xbf16> to vector<16x32xbf16>
    %47 = vector.shape_cast %44 : vector<16x32xbf16> to vector<1x16x32xbf16>
    tpu.vector_store %arg8[%c0_20, %c0_21, %c0_22], %47 {strides = array<i32>} : memref<1x16x32xbf16, #tpu.memory_space<vmem>>, vector<1x16x32xbf16>,
    return
  }
  func.func @transform_0(%arg0: i32) -> (i32, i32, i32) {
    %c0_i32 = arith.constant 0 : i32
    %c0_i32_0 = arith.constant 0 : i32
    %c0_i32_1 = arith.constant 0 : i32
    return %arg0, %c0_i32, %c0_i32_0 : i32, i32, i32
  }
  func.func @transform_1(%arg0: i32) -> (i32, i32) {
    %c0_i32 = arith.constant 0 : i32
    %c0_i32_0 = arith.constant 0 : i32
    %c0_i32_1 = arith.constant 0 : i32
    return %c0_i32, %c0_i32_0 : i32, i32
  }
  func.func @transform_2(%arg0: i32) -> (i32, i32) {
    %c0_i32 = arith.constant 0 : i32
    %c0_i32_0 = arith.constant 0 : i32
    %c0_i32_1 = arith.constant 0 : i32
    return %c0_i32, %c0_i32_0 : i32, i32
  }
  func.func @transform_3(%arg0: i32) -> (i32, i32) {
    %c0_i32 = arith.constant 0 : i32
    %c0_i32_0 = arith.constant 0 : i32
    %c0_i32_1 = arith.constant 0 : i32
    return %c0_i32, %c0_i32_0 : i32, i32
  }
  func.func @transform_4(%arg0: i32) -> (i32, i32) {
    %c0_i32 = arith.constant 0 : i32
    %c0_i32_0 = arith.constant 0 : i32
    %c0_i32_1 = arith.constant 0 : i32
    return %c0_i32, %c0_i32_0 : i32, i32
  }
  func.func @transform_5(%arg0: i32) -> (i32, i32) {
    %c0_i32 = arith.constant 0 : i32
    %c0_i32_0 = arith.constant 0 : i32
    %c0_i32_1 = arith.constant 0 : i32
    return %c0_i32, %c0_i32_0 : i32, i32
  }
  func.func @transform_6(%arg0: i32) -> (i32, i32) {
    %c0_i32 = arith.constant 0 : i32
    %c0_i32_0 = arith.constant 0 : i32
    %c0_i32_1 = arith.constant 0 : i32
    return %c0_i32, %c0_i32_0 : i32, i32
  }
  func.func @transform_7(%arg0: i32) -> (i32, i32, i32) {
    %c0_i32 = arith.constant 0 : i32
    %c0_i32_0 = arith.constant 0 : i32
    %c0_i32_1 = arith.constant 0 : i32
    return %arg0, %c0_i32, %c0_i32_0 : i32, i32, i32
  }
}

module attributes {stable_mosaic.version = 11 : i64} {
  func.func @blocks_kernel(%arg0: i32, %arg1: i32, %arg2: memref<1x16x32xbf16, #tpu.memory_space<vmem>>, %arg3: memref<1x1x32xf32, #tpu.memory_space<vmem>>, %arg4: memref<1x1x32xf32, #tpu.memory_space<vmem>>, %arg5: memref<1x32x96xbf16, #tpu.memory_space<vmem>>, %arg6: memref<1x1x96xf32, #tpu.memory_space<vmem>>, %arg7: memref<1x32x32xbf16, #tpu.memory_space<vmem>>, %arg8: memref<1x1x32xf32, #tpu.memory_space<vmem>>, %arg9: memref<1x1x32xf32, #tpu.memory_space<vmem>>, %arg10: memref<1x1x32xf32, #tpu.memory_space<vmem>>, %arg11: memref<1x32x64xbf16, #tpu.memory_space<vmem>>, %arg12: memref<1x1x64xf32, #tpu.memory_space<vmem>>, %arg13: memref<1x64x32xbf16, #tpu.memory_space<vmem>>, %arg14: memref<1x1x32xf32, #tpu.memory_space<vmem>>, %arg15: memref<1x32xf32, #tpu.memory_space<vmem>>, %arg16: memref<1x32xf32, #tpu.memory_space<vmem>>, %arg17: memref<1x16x32xbf16, #tpu.memory_space<vmem>>, %arg18: memref<16x32xf32, #tpu.memory_space<vmem>>) attributes {dimension_semantics = [#tpu.dimension_semantics<parallel>, #tpu.dimension_semantics<arbitrary>], iteration_bounds = array<i64: 2, 2>, scalar_prefetch = 0 : i64, scratch_operands = 1 : i64, tpu.core_type = #tpu.core_type<tc>, window_params = [{transform_indices = @transform_0, window_bounds = array<i64: 1, 16, 32>}, {transform_indices = @transform_1, window_bounds = array<i64: 1, 1, 32>}, {transform_indices = @transform_2, window_bounds = array<i64: 1, 1, 32>}, {transform_indices = @transform_3, window_bounds = array<i64: 1, 32, 96>}, {transform_indices = @transform_4, window_bounds = array<i64: 1, 1, 96>}, {transform_indices = @transform_5, window_bounds = array<i64: 1, 32, 32>}, {transform_indices = @transform_6, window_bounds = array<i64: 1, 1, 32>}, {transform_indices = @transform_7, window_bounds = array<i64: 1, 1, 32>}, {transform_indices = @transform_8, window_bounds = array<i64: 1, 1, 32>}, {transform_indices = @transform_9, window_bounds = array<i64: 1, 32, 64>}, {transform_indices = @transform_10, window_bounds = array<i64: 1, 1, 64>}, {transform_indices = @transform_11, window_bounds = array<i64: 1, 64, 32>}, {transform_indices = @transform_12, window_bounds = array<i64: 1, 1, 32>}, {pipeline_mode = #tpu.pipeline_mode<synchronous>, transform_indices = @transform_13, window_bounds = array<i64: 1, 32>}, {pipeline_mode = #tpu.pipeline_mode<synchronous>, transform_indices = @transform_14, window_bounds = array<i64: 1, 32>}, {transform_indices = @transform_15, window_bounds = array<i64: 1, 16, 32>}]} {
    %c0_i32 = arith.constant 0 : i32
    %0 = arith.cmpi eq, %arg1, %c0_i32 : i32
    %1 = arith.extui %0 : i1 to i32
    %c0_i32_0 = arith.constant 0 : i32
    %2 = arith.cmpi ne, %1, %c0_i32_0 : i32
    scf.if %2 {
      %c0_59 = arith.constant 0 : index
      %c0_60 = arith.constant 0 : index
      %c0_61 = arith.constant 0 : index
      %119 = vector.load %arg2[%c0_59, %c0_60, %c0_61] : memref<1x16x32xbf16, #tpu.memory_space<vmem>>, vector<1x16x32xbf16>
      %120 = vector.shape_cast %119 : vector<1x16x32xbf16> to vector<16x32xbf16>
      %121 = arith.extf %120 : vector<16x32xbf16> to vector<16x32xf32>
      %c0_62 = arith.constant 0 : index
      %c0_63 = arith.constant 0 : index
      %122 = vector.load %arg18[%c0_62, %c0_63] : memref<16x32xf32, #tpu.memory_space<vmem>>, vector<16x32xf32>
      tpu.vector_store %arg18[%c0_62, %c0_63], %121 {strides = array<i32>} : memref<16x32xf32, #tpu.memory_space<vmem>>, vector<16x32xf32>,
    } else {
    }
    %c0 = arith.constant 0 : index
    %c0_1 = arith.constant 0 : index
    %3 = vector.load %arg18[%c0, %c0_1] : memref<16x32xf32, #tpu.memory_space<vmem>>, vector<16x32xf32>
    %c0_2 = arith.constant 0 : index
    %c0_3 = arith.constant 0 : index
    %c0_4 = arith.constant 0 : index
    %4 = vector.load %arg3[%c0_2, %c0_3, %c0_4] : memref<1x1x32xf32, #tpu.memory_space<vmem>>, vector<1x1x32xf32>
    %5 = vector.shape_cast %4 : vector<1x1x32xf32> to vector<1x32xf32>
    %c0_5 = arith.constant 0 : index
    %c0_6 = arith.constant 0 : index
    %c0_7 = arith.constant 0 : index
    %6 = vector.load %arg4[%c0_5, %c0_6, %c0_7] : memref<1x1x32xf32, #tpu.memory_space<vmem>>, vector<1x1x32xf32>
    %7 = vector.shape_cast %6 : vector<1x1x32xf32> to vector<1x32xf32>
    %cst = arith.constant dense<0.000000e+00> : vector<16xf32>
    %8 = vector.multi_reduction <add>, %3, %cst [1] : vector<16x32xf32> to vector<16xf32>
    %9 = vector.shape_cast %8 : vector<16xf32> to vector<16x1xf32>
    %cst_8 = arith.constant 3.200000e+01 : f32
    %10 = vector.broadcast %cst_8 : f32 to vector<16x1xf32>
    %11 = arith.divf %9, %10 : vector<16x1xf32>
    %12 = vector.broadcast %11 : vector<16x1xf32> to vector<16x32xf32>
    %13 = arith.subf %3, %12 : vector<16x32xf32>
    %14 = arith.mulf %13, %13 : vector<16x32xf32>
    %cst_9 = arith.constant dense<0.000000e+00> : vector<16xf32>
    %15 = vector.multi_reduction <add>, %14, %cst_9 [1] : vector<16x32xf32> to vector<16xf32>
    %16 = vector.shape_cast %15 : vector<16xf32> to vector<16x1xf32>
    %cst_10 = arith.constant 3.200000e+01 : f32
    %17 = vector.broadcast %cst_10 : f32 to vector<16x1xf32>
    %18 = arith.divf %16, %17 : vector<16x1xf32>
    %cst_11 = arith.constant 9.99999974E-6 : f32
    %19 = vector.broadcast %cst_11 : f32 to vector<16x1xf32>
    %20 = arith.addf %18, %19 : vector<16x1xf32>
    %21 = math.rsqrt %20 : vector<16x1xf32>
    %22 = vector.broadcast %21 : vector<16x1xf32> to vector<16x32xf32>
    %23 = arith.mulf %13, %22 : vector<16x32xf32>
    %24 = vector.broadcast %5 : vector<1x32xf32> to vector<16x32xf32>
    %25 = arith.mulf %23, %24 : vector<16x32xf32>
    %26 = vector.broadcast %7 : vector<1x32xf32> to vector<16x32xf32>
    %27 = arith.addf %25, %26 : vector<16x32xf32>
    %28 = arith.truncf %27 : vector<16x32xf32> to vector<16x32xbf16>
    %c0_12 = arith.constant 0 : index
    %c0_13 = arith.constant 0 : index
    %c0_14 = arith.constant 0 : index
    %29 = vector.load %arg5[%c0_12, %c0_13, %c0_14] : memref<1x32x96xbf16, #tpu.memory_space<vmem>>, vector<1x32x96xbf16>
    %30 = vector.shape_cast %29 : vector<1x32x96xbf16> to vector<32x96xbf16>
    %cst_15 = arith.constant dense<0.000000e+00> : vector<16x96xf32>
    %31 = tpu.matmul %28, %30, %cst_15 {dimension_numbers = #tpu.dot_dimension_numbers<[1], [0], [0], [1], [0, 0, 1, 1], [], []>} : vector<16x32xbf16>, vector<32x96xbf16>, vector<16x96xf32> -> vector<16x96xf32>
    %c0_16 = arith.constant 0 : index
    %c0_17 = arith.constant 0 : index
    %c0_18 = arith.constant 0 : index
    %32 = vector.load %arg6[%c0_16, %c0_17, %c0_18] : memref<1x1x96xf32, #tpu.memory_space<vmem>>, vector<1x1x96xf32>
    %33 = vector.shape_cast %32 : vector<1x1x96xf32> to vector<1x96xf32>
    %34 = vector.broadcast %33 : vector<1x96xf32> to vector<16x96xf32>
    %35 = arith.addf %31, %34 : vector<16x96xf32>
    %36 = vector.shape_cast %35 : vector<16x96xf32> to vector<16x24x4xf32>
    %37 = tpu.transpose %36, [1, 0, 2] : vector<16x24x4xf32> -> vector<24x16x4xf32>
    %38 = vector.extract_strided_slice %37 {offsets = [0, 0, 0], sizes = [8, 16, 4], strides = [1, 1, 1]} : vector<24x16x4xf32> to vector<8x16x4xf32>
    %39 = arith.truncf %38 : vector<8x16x4xf32> to vector<8x16x4xbf16>
    %40 = vector.extract_strided_slice %37 {offsets = [8, 0, 0], sizes = [8, 16, 4], strides = [1, 1, 1]} : vector<24x16x4xf32> to vector<8x16x4xf32>
    %41 = arith.truncf %40 : vector<8x16x4xf32> to vector<8x16x4xbf16>
    %42 = vector.extract_strided_slice %37 {offsets = [16, 0, 0], sizes = [8, 16, 4], strides = [1, 1, 1]} : vector<24x16x4xf32> to vector<8x16x4xf32>
    %43 = arith.truncf %42 : vector<8x16x4xf32> to vector<8x16x4xbf16>
    "tpu.trace_start"() <{level = 10 : i32, message = "hqd,hkd->hqk"}> : () -> ()
    %cst_19 = arith.constant dense<0.000000e+00> : vector<8x16x16xf32>
    %44 = tpu.matmul %39, %41, %cst_19 {dimension_numbers = #tpu.dot_dimension_numbers<[2], [2], [1], [1], [0, 0, 0, 1, 1, 1], [0], [0]>} : vector<8x16x4xbf16>, vector<8x16x4xbf16>, vector<8x16x16xf32> -> vector<8x16x16xf32>
    "tpu.trace_stop"() : () -> ()
    %cst_20 = arith.constant dense<0xFF800000> : vector<8x16xf32>
    %45 = vector.multi_reduction <maximumf>, %44, %cst_20 [2] : vector<8x16x16xf32> to vector<8x16xf32>
    %46 = vector.shape_cast %45 : vector<8x16xf32> to vector<8x16x1xf32>
    %47 = vector.broadcast %46 : vector<8x16x1xf32> to vector<8x16x16xf32>
    %48 = arith.subf %44, %47 : vector<8x16x16xf32>
    %49 = math.exp %48 : vector<8x16x16xf32>
    %cst_21 = arith.constant dense<0.000000e+00> : vector<8x16xf32>
    %50 = vector.multi_reduction <add>, %49, %cst_21 [2] : vector<8x16x16xf32> to vector<8x16xf32>
    %51 = vector.shape_cast %50 : vector<8x16xf32> to vector<8x16x1xf32>
    %52 = tpu.reciprocal %51 {approx = true} : vector<8x16x1xf32> -> vector<8x16x1xf32>
    %53 = vector.broadcast %52 : vector<8x16x1xf32> to vector<8x16x16xf32>
    %54 = arith.mulf %49, %53 : vector<8x16x16xf32>
    %55 = arith.truncf %54 : vector<8x16x16xf32> to vector<8x16x16xbf16>
    "tpu.trace_start"() <{level = 10 : i32, message = "hqk,hkd->hqd"}> : () -> ()
    %cst_22 = arith.constant dense<0.000000e+00> : vector<8x16x4xf32>
    %56 = tpu.matmul %55, %43, %cst_22 {dimension_numbers = #tpu.dot_dimension_numbers<[2], [1], [1], [2], [0, 0, 0, 1, 1, 2], [0], [0]>} : vector<8x16x16xbf16>, vector<8x16x4xbf16>, vector<8x16x4xf32> -> vector<8x16x4xf32>
    "tpu.trace_stop"() : () -> ()
    %57 = tpu.transpose %56, [1, 0, 2] : vector<8x16x4xf32> -> vector<16x8x4xf32>
    %58 = vector.shape_cast %57 : vector<16x8x4xf32> to vector<16x32xf32>
    %59 = arith.truncf %58 : vector<16x32xf32> to vector<16x32xbf16>
    %c0_23 = arith.constant 0 : index
    %c0_24 = arith.constant 0 : index
    %c0_25 = arith.constant 0 : index
    %60 = vector.load %arg7[%c0_23, %c0_24, %c0_25] : memref<1x32x32xbf16, #tpu.memory_space<vmem>>, vector<1x32x32xbf16>
    %61 = vector.shape_cast %60 : vector<1x32x32xbf16> to vector<32x32xbf16>
    %cst_26 = arith.constant dense<0.000000e+00> : vector<16x32xf32>
    %62 = tpu.matmul %59, %61, %cst_26 {dimension_numbers = #tpu.dot_dimension_numbers<[1], [0], [0], [1], [0, 0, 1, 1], [], []>} : vector<16x32xbf16>, vector<32x32xbf16>, vector<16x32xf32> -> vector<16x32xf32>
    %63 = arith.addf %3, %62 : vector<16x32xf32>
    %c0_27 = arith.constant 0 : index
    %c0_28 = arith.constant 0 : index
    %c0_29 = arith.constant 0 : index
    %64 = vector.load %arg8[%c0_27, %c0_28, %c0_29] : memref<1x1x32xf32, #tpu.memory_space<vmem>>, vector<1x1x32xf32>
    %65 = vector.shape_cast %64 : vector<1x1x32xf32> to vector<1x32xf32>
    %66 = vector.broadcast %65 : vector<1x32xf32> to vector<16x32xf32>
    %67 = arith.addf %63, %66 : vector<16x32xf32>
    %c0_30 = arith.constant 0 : index
    %c0_31 = arith.constant 0 : index
    %c0_32 = arith.constant 0 : index
    %68 = vector.load %arg9[%c0_30, %c0_31, %c0_32] : memref<1x1x32xf32, #tpu.memory_space<vmem>>, vector<1x1x32xf32>
    %69 = vector.shape_cast %68 : vector<1x1x32xf32> to vector<1x32xf32>
    %c0_33 = arith.constant 0 : index
    %c0_34 = arith.constant 0 : index
    %c0_35 = arith.constant 0 : index
    %70 = vector.load %arg10[%c0_33, %c0_34, %c0_35] : memref<1x1x32xf32, #tpu.memory_space<vmem>>, vector<1x1x32xf32>
    %71 = vector.shape_cast %70 : vector<1x1x32xf32> to vector<1x32xf32>
    %cst_36 = arith.constant dense<0.000000e+00> : vector<16xf32>
    %72 = vector.multi_reduction <add>, %67, %cst_36 [1] : vector<16x32xf32> to vector<16xf32>
    %73 = vector.shape_cast %72 : vector<16xf32> to vector<16x1xf32>
    %cst_37 = arith.constant 3.200000e+01 : f32
    %74 = vector.broadcast %cst_37 : f32 to vector<16x1xf32>
    %75 = arith.divf %73, %74 : vector<16x1xf32>
    %76 = vector.broadcast %75 : vector<16x1xf32> to vector<16x32xf32>
    %77 = arith.subf %67, %76 : vector<16x32xf32>
    %78 = arith.mulf %77, %77 : vector<16x32xf32>
    %cst_38 = arith.constant dense<0.000000e+00> : vector<16xf32>
    %79 = vector.multi_reduction <add>, %78, %cst_38 [1] : vector<16x32xf32> to vector<16xf32>
    %80 = vector.shape_cast %79 : vector<16xf32> to vector<16x1xf32>
    %cst_39 = arith.constant 3.200000e+01 : f32
    %81 = vector.broadcast %cst_39 : f32 to vector<16x1xf32>
    %82 = arith.divf %80, %81 : vector<16x1xf32>
    %cst_40 = arith.constant 9.99999974E-6 : f32
    %83 = vector.broadcast %cst_40 : f32 to vector<16x1xf32>
    %84 = arith.addf %82, %83 : vector<16x1xf32>
    %85 = math.rsqrt %84 : vector<16x1xf32>
    %86 = vector.broadcast %85 : vector<16x1xf32> to vector<16x32xf32>
    %87 = arith.mulf %77, %86 : vector<16x32xf32>
    %88 = vector.broadcast %69 : vector<1x32xf32> to vector<16x32xf32>
    %89 = arith.mulf %87, %88 : vector<16x32xf32>
    %90 = vector.broadcast %71 : vector<1x32xf32> to vector<16x32xf32>
    %91 = arith.addf %89, %90 : vector<16x32xf32>
    %92 = arith.truncf %91 : vector<16x32xf32> to vector<16x32xbf16>
    %c0_41 = arith.constant 0 : index
    %c0_42 = arith.constant 0 : index
    %c0_43 = arith.constant 0 : index
    %93 = vector.load %arg11[%c0_41, %c0_42, %c0_43] : memref<1x32x64xbf16, #tpu.memory_space<vmem>>, vector<1x32x64xbf16>
    %94 = vector.shape_cast %93 : vector<1x32x64xbf16> to vector<32x64xbf16>
    %cst_44 = arith.constant dense<0.000000e+00> : vector<16x64xf32>
    %95 = tpu.matmul %92, %94, %cst_44 {dimension_numbers = #tpu.dot_dimension_numbers<[1], [0], [0], [1], [0, 0, 1, 1], [], []>} : vector<16x32xbf16>, vector<32x64xbf16>, vector<16x64xf32> -> vector<16x64xf32>
    %c0_45 = arith.constant 0 : index
    %c0_46 = arith.constant 0 : index
    %c0_47 = arith.constant 0 : index
    %96 = vector.load %arg12[%c0_45, %c0_46, %c0_47] : memref<1x1x64xf32, #tpu.memory_space<vmem>>, vector<1x1x64xf32>
    %97 = vector.shape_cast %96 : vector<1x1x64xf32> to vector<1x64xf32>
    %98 = vector.broadcast %97 : vector<1x64xf32> to vector<16x64xf32>
    %99 = arith.addf %95, %98 : vector<16x64xf32>
    %100 = arith.negf %99 : vector<16x64xf32>
    %101 = math.exp %100 : vector<16x64xf32>
    %cst_48 = arith.constant 1.000000e+00 : f32
    %102 = vector.broadcast %cst_48 : f32 to vector<16x64xf32>
    %103 = arith.addf %102, %101 : vector<16x64xf32>
    %104 = arith.divf %102, %103 : vector<16x64xf32>
    %105 = arith.mulf %99, %104 : vector<16x64xf32>
    %106 = arith.truncf %105 : vector<16x64xf32> to vector<16x64xbf16>
    %c0_49 = arith.constant 0 : index
    %c0_50 = arith.constant 0 : index
    %c0_51 = arith.constant 0 : index
    %107 = vector.load %arg13[%c0_49, %c0_50, %c0_51] : memref<1x64x32xbf16, #tpu.memory_space<vmem>>, vector<1x64x32xbf16>
    %108 = vector.shape_cast %107 : vector<1x64x32xbf16> to vector<64x32xbf16>
    %cst_52 = arith.constant dense<0.000000e+00> : vector<16x32xf32>
    %109 = tpu.matmul %106, %108, %cst_52 {dimension_numbers = #tpu.dot_dimension_numbers<[1], [0], [0], [1], [0, 0, 1, 1], [], []>} : vector<16x64xbf16>, vector<64x32xbf16>, vector<16x32xf32> -> vector<16x32xf32>
    %c0_53 = arith.constant 0 : index
    %c0_54 = arith.constant 0 : index
    %c0_55 = arith.constant 0 : index
    %110 = vector.load %arg14[%c0_53, %c0_54, %c0_55] : memref<1x1x32xf32, #tpu.memory_space<vmem>>, vector<1x1x32xf32>
    %111 = vector.shape_cast %110 : vector<1x1x32xf32> to vector<1x32xf32>
    %112 = vector.broadcast %111 : vector<1x32xf32> to vector<16x32xf32>
    %113 = arith.addf %109, %112 : vector<16x32xf32>
    %114 = arith.addf %67, %113 : vector<16x32xf32>
    %c0_56 = arith.constant 0 : index
    %c0_57 = arith.constant 0 : index
    %115 = vector.load %arg18[%c0_56, %c0_57] : memref<16x32xf32, #tpu.memory_space<vmem>>, vector<16x32xf32>
    tpu.vector_store %arg18[%c0_56, %c0_57], %114 {strides = array<i32>} : memref<16x32xf32, #tpu.memory_space<vmem>>, vector<16x32xf32>,
    %c1_i32 = arith.constant 1 : i32
    %116 = arith.cmpi eq, %arg1, %c1_i32 : i32
    %117 = arith.extui %116 : i1 to i32
    %c0_i32_58 = arith.constant 0 : i32
    %118 = arith.cmpi ne, %117, %c0_i32_58 : i32
    scf.if %118 {
      %c0_59 = arith.constant 0 : index
      %c0_60 = arith.constant 0 : index
      %119 = vector.load %arg15[%c0_59, %c0_60] : memref<1x32xf32, #tpu.memory_space<vmem>>, vector<1x32xf32>
      %c0_61 = arith.constant 0 : index
      %c0_62 = arith.constant 0 : index
      %120 = vector.load %arg16[%c0_61, %c0_62] : memref<1x32xf32, #tpu.memory_space<vmem>>, vector<1x32xf32>
      %cst_63 = arith.constant dense<0.000000e+00> : vector<16xf32>
      %121 = vector.multi_reduction <add>, %114, %cst_63 [1] : vector<16x32xf32> to vector<16xf32>
      %122 = vector.shape_cast %121 : vector<16xf32> to vector<16x1xf32>
      %cst_64 = arith.constant 3.200000e+01 : f32
      %123 = vector.broadcast %cst_64 : f32 to vector<16x1xf32>
      %124 = arith.divf %122, %123 : vector<16x1xf32>
      %125 = vector.broadcast %124 : vector<16x1xf32> to vector<16x32xf32>
      %126 = arith.subf %114, %125 : vector<16x32xf32>
      %127 = arith.mulf %126, %126 : vector<16x32xf32>
      %cst_65 = arith.constant dense<0.000000e+00> : vector<16xf32>
      %128 = vector.multi_reduction <add>, %127, %cst_65 [1] : vector<16x32xf32> to vector<16xf32>
      %129 = vector.shape_cast %128 : vector<16xf32> to vector<16x1xf32>
      %cst_66 = arith.constant 3.200000e+01 : f32
      %130 = vector.broadcast %cst_66 : f32 to vector<16x1xf32>
      %131 = arith.divf %129, %130 : vector<16x1xf32>
      %cst_67 = arith.constant 9.99999997E-7 : f32
      %132 = vector.broadcast %cst_67 : f32 to vector<16x1xf32>
      %133 = arith.addf %131, %132 : vector<16x1xf32>
      %134 = math.rsqrt %133 : vector<16x1xf32>
      %135 = vector.broadcast %134 : vector<16x1xf32> to vector<16x32xf32>
      %136 = arith.mulf %126, %135 : vector<16x32xf32>
      %137 = vector.broadcast %119 : vector<1x32xf32> to vector<16x32xf32>
      %138 = arith.mulf %136, %137 : vector<16x32xf32>
      %139 = vector.broadcast %120 : vector<1x32xf32> to vector<16x32xf32>
      %140 = arith.addf %138, %139 : vector<16x32xf32>
      %141 = arith.truncf %140 : vector<16x32xf32> to vector<16x32xbf16>
      %c0_68 = arith.constant 0 : index
      %c0_69 = arith.constant 0 : index
      %c0_70 = arith.constant 0 : index
      %142 = vector.load %arg17[%c0_68, %c0_69, %c0_70] : memref<1x16x32xbf16, #tpu.memory_space<vmem>>, vector<1x16x32xbf16>
      %143 = vector.shape_cast %142 : vector<1x16x32xbf16> to vector<16x32xbf16>
      %144 = vector.shape_cast %141 : vector<16x32xbf16> to vector<1x16x32xbf16>
      tpu.vector_store %arg17[%c0_68, %c0_69, %c0_70], %144 {strides = array<i32>} : memref<1x16x32xbf16, #tpu.memory_space<vmem>>, vector<1x16x32xbf16>,
    } else {
    }
    return
  }
  func.func @transform_0(%arg0: i32, %arg1: i32) -> (i32, i32, i32) {
    %c0_i32 = arith.constant 0 : i32
    %c0_i32_0 = arith.constant 0 : i32
    %c0_i32_1 = arith.constant 0 : i32
    return %arg0, %c0_i32, %c0_i32_0 : i32, i32, i32
  }
  func.func @transform_1(%arg0: i32, %arg1: i32) -> (i32, i32, i32) {
    %c0_i32 = arith.constant 0 : i32
    %c0_i32_0 = arith.constant 0 : i32
    %c0_i32_1 = arith.constant 0 : i32
    return %arg1, %c0_i32, %c0_i32_0 : i32, i32, i32
  }
  func.func @transform_2(%arg0: i32, %arg1: i32) -> (i32, i32, i32) {
    %c0_i32 = arith.constant 0 : i32
    %c0_i32_0 = arith.constant 0 : i32
    %c0_i32_1 = arith.constant 0 : i32
    return %arg1, %c0_i32, %c0_i32_0 : i32, i32, i32
  }
  func.func @transform_3(%arg0: i32, %arg1: i32) -> (i32, i32, i32) {
    %c0_i32 = arith.constant 0 : i32
    %c0_i32_0 = arith.constant 0 : i32
    %c0_i32_1 = arith.constant 0 : i32
    return %arg1, %c0_i32, %c0_i32_0 : i32, i32, i32
  }
  func.func @transform_4(%arg0: i32, %arg1: i32) -> (i32, i32, i32) {
    %c0_i32 = arith.constant 0 : i32
    %c0_i32_0 = arith.constant 0 : i32
    %c0_i32_1 = arith.constant 0 : i32
    return %arg1, %c0_i32, %c0_i32_0 : i32, i32, i32
  }
  func.func @transform_5(%arg0: i32, %arg1: i32) -> (i32, i32, i32) {
    %c0_i32 = arith.constant 0 : i32
    %c0_i32_0 = arith.constant 0 : i32
    %c0_i32_1 = arith.constant 0 : i32
    return %arg1, %c0_i32, %c0_i32_0 : i32, i32, i32
  }
  func.func @transform_6(%arg0: i32, %arg1: i32) -> (i32, i32, i32) {
    %c0_i32 = arith.constant 0 : i32
    %c0_i32_0 = arith.constant 0 : i32
    %c0_i32_1 = arith.constant 0 : i32
    return %arg1, %c0_i32, %c0_i32_0 : i32, i32, i32
  }
  func.func @transform_7(%arg0: i32, %arg1: i32) -> (i32, i32, i32) {
    %c0_i32 = arith.constant 0 : i32
    %c0_i32_0 = arith.constant 0 : i32
    %c0_i32_1 = arith.constant 0 : i32
    return %arg1, %c0_i32, %c0_i32_0 : i32, i32, i32
  }
  func.func @transform_8(%arg0: i32, %arg1: i32) -> (i32, i32, i32) {
    %c0_i32 = arith.constant 0 : i32
    %c0_i32_0 = arith.constant 0 : i32
    %c0_i32_1 = arith.constant 0 : i32
    return %arg1, %c0_i32, %c0_i32_0 : i32, i32, i32
  }
  func.func @transform_9(%arg0: i32, %arg1: i32) -> (i32, i32, i32) {
    %c0_i32 = arith.constant 0 : i32
    %c0_i32_0 = arith.constant 0 : i32
    %c0_i32_1 = arith.constant 0 : i32
    return %arg1, %c0_i32, %c0_i32_0 : i32, i32, i32
  }
  func.func @transform_10(%arg0: i32, %arg1: i32) -> (i32, i32, i32) {
    %c0_i32 = arith.constant 0 : i32
    %c0_i32_0 = arith.constant 0 : i32
    %c0_i32_1 = arith.constant 0 : i32
    return %arg1, %c0_i32, %c0_i32_0 : i32, i32, i32
  }
  func.func @transform_11(%arg0: i32, %arg1: i32) -> (i32, i32, i32) {
    %c0_i32 = arith.constant 0 : i32
    %c0_i32_0 = arith.constant 0 : i32
    %c0_i32_1 = arith.constant 0 : i32
    return %arg1, %c0_i32, %c0_i32_0 : i32, i32, i32
  }
  func.func @transform_12(%arg0: i32, %arg1: i32) -> (i32, i32, i32) {
    %c0_i32 = arith.constant 0 : i32
    %c0_i32_0 = arith.constant 0 : i32
    %c0_i32_1 = arith.constant 0 : i32
    return %arg1, %c0_i32, %c0_i32_0 : i32, i32, i32
  }
  func.func @transform_13(%arg0: i32, %arg1: i32) -> (i32, i32) {
    %c0_i32 = arith.constant 0 : i32
    %c0_i32_0 = arith.constant 0 : i32
    %c0_i32_1 = arith.constant 0 : i32
    return %c0_i32, %c0_i32_0 : i32, i32
  }
  func.func @transform_14(%arg0: i32, %arg1: i32) -> (i32, i32) {
    %c0_i32 = arith.constant 0 : i32
    %c0_i32_0 = arith.constant 0 : i32
    %c0_i32_1 = arith.constant 0 : i32
    return %c0_i32, %c0_i32_0 : i32, i32
  }
  func.func @transform_15(%arg0: i32, %arg1: i32) -> (i32, i32, i32) {
    %c0_i32 = arith.constant 0 : i32
    %c0_i32_0 = arith.constant 0 : i32
    %c0_i32_1 = arith.constant 0 : i32
    return %arg0, %c0_i32, %c0_i32_0 : i32, i32, i32
  }
}

module attributes {stable_mosaic.version = 11 : i64} {
  func.func @tail_kernel(%arg0: i32, %arg1: memref<1x16x32xbf16, #tpu.memory_space<vmem>>, %arg2: memref<1x16x16xf32, #tpu.memory_space<vmem>>, %arg3: memref<32x16xbf16, #tpu.memory_space<vmem>>, %arg4: memref<1x16xf32, #tpu.memory_space<vmem>>, %arg5: memref<1x16xf32, #tpu.memory_space<vmem>>, %arg6: memref<96x2xbf16, #tpu.memory_space<vmem>>, %arg7: memref<1x2xf32, #tpu.memory_space<vmem>>, %arg8: memref<1x2xf32, #tpu.memory_space<vmem>>, %arg9: memref<2x32xbf16, #tpu.memory_space<vmem>>, %arg10: memref<1x32xf32, #tpu.memory_space<vmem>>, %arg11: memref<1x32xf32, #tpu.memory_space<vmem>>, %arg12: memref<1x16x32xf32, #tpu.memory_space<vmem>>) attributes {dimension_semantics = [#tpu.dimension_semantics<parallel>], iteration_bounds = array<i64: 2>, scalar_prefetch = 0 : i64, scratch_operands = 0 : i64, tpu.core_type = #tpu.core_type<tc>, window_params = [{transform_indices = @transform_0, window_bounds = array<i64: 1, 16, 32>}, {transform_indices = @transform_1, window_bounds = array<i64: 1, 16, 16>}, {pipeline_mode = #tpu.pipeline_mode<synchronous>, transform_indices = @transform_2, window_bounds = array<i64: 32, 16>}, {pipeline_mode = #tpu.pipeline_mode<synchronous>, transform_indices = @transform_3, window_bounds = array<i64: 1, 16>}, {pipeline_mode = #tpu.pipeline_mode<synchronous>, transform_indices = @transform_4, window_bounds = array<i64: 1, 16>}, {pipeline_mode = #tpu.pipeline_mode<synchronous>, transform_indices = @transform_5, window_bounds = array<i64: 96, 2>}, {pipeline_mode = #tpu.pipeline_mode<synchronous>, transform_indices = @transform_6, window_bounds = array<i64: 1, 2>}, {pipeline_mode = #tpu.pipeline_mode<synchronous>, transform_indices = @transform_7, window_bounds = array<i64: 1, 2>}, {pipeline_mode = #tpu.pipeline_mode<synchronous>, transform_indices = @transform_8, window_bounds = array<i64: 2, 32>}, {pipeline_mode = #tpu.pipeline_mode<synchronous>, transform_indices = @transform_9, window_bounds = array<i64: 1, 32>}, {pipeline_mode = #tpu.pipeline_mode<synchronous>, transform_indices = @transform_10, window_bounds = array<i64: 1, 32>}, {transform_indices = @transform_11, window_bounds = array<i64: 1, 16, 32>}]} {
    %c0 = arith.constant 0 : index
    %c0_0 = arith.constant 0 : index
    %c0_1 = arith.constant 0 : index
    %0 = vector.load %arg1[%c0, %c0_0, %c0_1] : memref<1x16x32xbf16, #tpu.memory_space<vmem>>, vector<1x16x32xbf16>
    %1 = vector.shape_cast %0 : vector<1x16x32xbf16> to vector<16x32xbf16>
    %c0_2 = arith.constant 0 : index
    %c0_3 = arith.constant 0 : index
    %2 = vector.load %arg3[%c0_2, %c0_3] : memref<32x16xbf16, #tpu.memory_space<vmem>>, vector<32x16xbf16>
    %cst = arith.constant dense<0.000000e+00> : vector<16x16xf32>
    %3 = tpu.matmul %1, %2, %cst {dimension_numbers = #tpu.dot_dimension_numbers<[1], [0], [0], [1], [0, 0, 1, 1], [], []>} : vector<16x32xbf16>, vector<32x16xbf16>, vector<16x16xf32> -> vector<16x16xf32>
    %c0_4 = arith.constant 0 : index
    %c0_5 = arith.constant 0 : index
    %4 = vector.load %arg4[%c0_4, %c0_5] : memref<1x16xf32, #tpu.memory_space<vmem>>, vector<1x16xf32>
    %5 = vector.broadcast %4 : vector<1x16xf32> to vector<16x16xf32>
    %6 = arith.mulf %3, %5 : vector<16x16xf32>
    %c0_6 = arith.constant 0 : index
    %c0_7 = arith.constant 0 : index
    %7 = vector.load %arg5[%c0_6, %c0_7] : memref<1x16xf32, #tpu.memory_space<vmem>>, vector<1x16xf32>
    %8 = vector.broadcast %7 : vector<1x16xf32> to vector<16x16xf32>
    %9 = arith.addf %6, %8 : vector<16x16xf32>
    %10 = arith.negf %9 : vector<16x16xf32>
    %11 = math.exp %10 : vector<16x16xf32>
    %cst_8 = arith.constant 1.000000e+00 : f32
    %12 = vector.broadcast %cst_8 : f32 to vector<16x16xf32>
    %13 = arith.addf %12, %11 : vector<16x16xf32>
    %14 = arith.divf %12, %13 : vector<16x16xf32>
    %15 = arith.mulf %9, %14 : vector<16x16xf32>
    %c0_9 = arith.constant 0 : index
    %c0_10 = arith.constant 0 : index
    %c0_11 = arith.constant 0 : index
    %16 = vector.load %arg2[%c0_9, %c0_10, %c0_11] : memref<1x16x16xf32, #tpu.memory_space<vmem>>, vector<1x16x16xf32>
    %17 = vector.shape_cast %16 : vector<1x16x16xf32> to vector<16x16xf32>
    %18 = tpu.iota {dimensions = array<i32: 0>} : vector<16x16xi32>
    %c0_i32 = arith.constant 0 : i32
    %19 = vector.broadcast %c0_i32 : i32 to vector<16x16xi32>
    %20 = arith.cmpi eq, %18, %19 : vector<16x16xi32>
    %c15_i32 = arith.constant 15 : i32
    %21 = vector.broadcast %c15_i32 : i32 to vector<16x16xi32>
    %22 = arith.cmpi eq, %18, %21 : vector<16x16xi32>
    %c1_i32 = arith.constant 1 : i32
    %23 = tpu.dynamic_rotate %17 by %c1_i32 dim 0 : vector<16x16xf32>, i32 -> vector<16x16xf32>
    %cst_12 = arith.constant 0.000000e+00 : f32
    %24 = vector.broadcast %cst_12 : f32 to vector<16x16xf32>
    %25 = arith.select %20, %24, %23 : vector<16x16xi1>, vector<16x16xf32>
    %c15_i32_13 = arith.constant 15 : i32
    %26 = tpu.dynamic_rotate %17 by %c15_i32_13 dim 0 : vector<16x16xf32>, i32 -> vector<16x16xf32>
    %cst_14 = arith.constant 0.000000e+00 : f32
    %27 = vector.broadcast %cst_14 : f32 to vector<16x16xf32>
    %28 = arith.select %22, %27, %26 : vector<16x16xi1>, vector<16x16xf32>
    %c1_i32_15 = arith.constant 1 : i32
    %29 = tpu.dynamic_rotate %15 by %c1_i32_15 dim 0 : vector<16x16xf32>, i32 -> vector<16x16xf32>
    %cst_16 = arith.constant 0.000000e+00 : f32
    %30 = vector.broadcast %cst_16 : f32 to vector<16x16xf32>
    %31 = arith.select %20, %30, %29 : vector<16x16xi1>, vector<16x16xf32>
    %c15_i32_17 = arith.constant 15 : i32
    %32 = tpu.dynamic_rotate %15 by %c15_i32_17 dim 0 : vector<16x16xf32>, i32 -> vector<16x16xf32>
    %cst_18 = arith.constant 0.000000e+00 : f32
    %33 = vector.broadcast %cst_18 : f32 to vector<16x16xf32>
    %34 = arith.select %22, %33, %32 : vector<16x16xi1>, vector<16x16xf32>
    %35 = tpu.concatenate %25, %17, %28, %31, %15, %34 in 1 : vector<16x16xf32>, vector<16x16xf32>, vector<16x16xf32>, vector<16x16xf32>, vector<16x16xf32>, vector<16x16xf32> -> vector<16x96xf32>
    %36 = arith.truncf %35 : vector<16x96xf32> to vector<16x96xbf16>
    %c0_19 = arith.constant 0 : index
    %c0_20 = arith.constant 0 : index
    %37 = vector.load %arg6[%c0_19, %c0_20] : memref<96x2xbf16, #tpu.memory_space<vmem>>, vector<96x2xbf16>
    %cst_21 = arith.constant dense<0.000000e+00> : vector<16x2xf32>
    %38 = tpu.matmul %36, %37, %cst_21 {dimension_numbers = #tpu.dot_dimension_numbers<[1], [0], [0], [1], [0, 0, 1, 1], [], []>} : vector<16x96xbf16>, vector<96x2xbf16>, vector<16x2xf32> -> vector<16x2xf32>
    %c0_22 = arith.constant 0 : index
    %c0_23 = arith.constant 0 : index
    %39 = vector.load %arg7[%c0_22, %c0_23] : memref<1x2xf32, #tpu.memory_space<vmem>>, vector<1x2xf32>
    %40 = vector.broadcast %39 : vector<1x2xf32> to vector<16x2xf32>
    %41 = arith.mulf %38, %40 : vector<16x2xf32>
    %c0_24 = arith.constant 0 : index
    %c0_25 = arith.constant 0 : index
    %42 = vector.load %arg8[%c0_24, %c0_25] : memref<1x2xf32, #tpu.memory_space<vmem>>, vector<1x2xf32>
    %43 = vector.broadcast %42 : vector<1x2xf32> to vector<16x2xf32>
    %44 = arith.addf %41, %43 : vector<16x2xf32>
    %45 = arith.negf %44 : vector<16x2xf32>
    %46 = math.exp %45 : vector<16x2xf32>
    %cst_26 = arith.constant 1.000000e+00 : f32
    %47 = vector.broadcast %cst_26 : f32 to vector<16x2xf32>
    %48 = arith.addf %47, %46 : vector<16x2xf32>
    %49 = arith.divf %47, %48 : vector<16x2xf32>
    %50 = arith.mulf %44, %49 : vector<16x2xf32>
    %51 = arith.truncf %50 : vector<16x2xf32> to vector<16x2xbf16>
    %c0_27 = arith.constant 0 : index
    %c0_28 = arith.constant 0 : index
    %52 = vector.load %arg9[%c0_27, %c0_28] : memref<2x32xbf16, #tpu.memory_space<vmem>>, vector<2x32xbf16>
    %cst_29 = arith.constant dense<0.000000e+00> : vector<16x32xf32>
    %53 = tpu.matmul %51, %52, %cst_29 {dimension_numbers = #tpu.dot_dimension_numbers<[1], [0], [0], [1], [0, 0, 1, 1], [], []>} : vector<16x2xbf16>, vector<2x32xbf16>, vector<16x32xf32> -> vector<16x32xf32>
    %c0_30 = arith.constant 0 : index
    %c0_31 = arith.constant 0 : index
    %54 = vector.load %arg10[%c0_30, %c0_31] : memref<1x32xf32, #tpu.memory_space<vmem>>, vector<1x32xf32>
    %55 = vector.broadcast %54 : vector<1x32xf32> to vector<16x32xf32>
    %56 = arith.mulf %53, %55 : vector<16x32xf32>
    %c0_32 = arith.constant 0 : index
    %c0_33 = arith.constant 0 : index
    %57 = vector.load %arg11[%c0_32, %c0_33] : memref<1x32xf32, #tpu.memory_space<vmem>>, vector<1x32xf32>
    %58 = vector.broadcast %57 : vector<1x32xf32> to vector<16x32xf32>
    %59 = arith.addf %56, %58 : vector<16x32xf32>
    %60 = arith.negf %59 : vector<16x32xf32>
    %61 = math.exp %60 : vector<16x32xf32>
    %cst_34 = arith.constant 1.000000e+00 : f32
    %62 = vector.broadcast %cst_34 : f32 to vector<16x32xf32>
    %63 = arith.addf %62, %61 : vector<16x32xf32>
    %64 = arith.divf %62, %63 : vector<16x32xf32>
    %65 = arith.mulf %59, %64 : vector<16x32xf32>
    %c0_35 = arith.constant 0 : index
    %c0_36 = arith.constant 0 : index
    %c0_37 = arith.constant 0 : index
    %66 = vector.load %arg12[%c0_35, %c0_36, %c0_37] : memref<1x16x32xf32, #tpu.memory_space<vmem>>, vector<1x16x32xf32>
    %67 = vector.shape_cast %66 : vector<1x16x32xf32> to vector<16x32xf32>
    %68 = vector.shape_cast %65 : vector<16x32xf32> to vector<1x16x32xf32>
    tpu.vector_store %arg12[%c0_35, %c0_36, %c0_37], %68 {strides = array<i32>} : memref<1x16x32xf32, #tpu.memory_space<vmem>>, vector<1x16x32xf32>,
    return
  }
  func.func @transform_0(%arg0: i32) -> (i32, i32, i32) {
    %c0_i32 = arith.constant 0 : i32
    %c0_i32_0 = arith.constant 0 : i32
    %c0_i32_1 = arith.constant 0 : i32
    return %arg0, %c0_i32, %c0_i32_0 : i32, i32, i32
  }
  func.func @transform_1(%arg0: i32) -> (i32, i32, i32) {
    %c0_i32 = arith.constant 0 : i32
    %c0_i32_0 = arith.constant 0 : i32
    %c0_i32_1 = arith.constant 0 : i32
    return %arg0, %c0_i32, %c0_i32_0 : i32, i32, i32
  }
  func.func @transform_2(%arg0: i32) -> (i32, i32) {
    %c0_i32 = arith.constant 0 : i32
    %c0_i32_0 = arith.constant 0 : i32
    %c0_i32_1 = arith.constant 0 : i32
    return %c0_i32, %c0_i32_0 : i32, i32
  }
  func.func @transform_3(%arg0: i32) -> (i32, i32) {
    %c0_i32 = arith.constant 0 : i32
    %c0_i32_0 = arith.constant 0 : i32
    %c0_i32_1 = arith.constant 0 : i32
    return %c0_i32, %c0_i32_0 : i32, i32
  }
  func.func @transform_4(%arg0: i32) -> (i32, i32) {
    %c0_i32 = arith.constant 0 : i32
    %c0_i32_0 = arith.constant 0 : i32
    %c0_i32_1 = arith.constant 0 : i32
    return %c0_i32, %c0_i32_0 : i32, i32
  }
  func.func @transform_5(%arg0: i32) -> (i32, i32) {
    %c0_i32 = arith.constant 0 : i32
    %c0_i32_0 = arith.constant 0 : i32
    %c0_i32_1 = arith.constant 0 : i32
    return %c0_i32, %c0_i32_0 : i32, i32
  }
  func.func @transform_6(%arg0: i32) -> (i32, i32) {
    %c0_i32 = arith.constant 0 : i32
    %c0_i32_0 = arith.constant 0 : i32
    %c0_i32_1 = arith.constant 0 : i32
    return %c0_i32, %c0_i32_0 : i32, i32
  }
  func.func @transform_7(%arg0: i32) -> (i32, i32) {
    %c0_i32 = arith.constant 0 : i32
    %c0_i32_0 = arith.constant 0 : i32
    %c0_i32_1 = arith.constant 0 : i32
    return %c0_i32, %c0_i32_0 : i32, i32
  }
  func.func @transform_8(%arg0: i32) -> (i32, i32) {
    %c0_i32 = arith.constant 0 : i32
    %c0_i32_0 = arith.constant 0 : i32
    %c0_i32_1 = arith.constant 0 : i32
    return %c0_i32, %c0_i32_0 : i32, i32
  }
  func.func @transform_9(%arg0: i32) -> (i32, i32) {
    %c0_i32 = arith.constant 0 : i32
    %c0_i32_0 = arith.constant 0 : i32
    %c0_i32_1 = arith.constant 0 : i32
    return %c0_i32, %c0_i32_0 : i32, i32
  }
  func.func @transform_10(%arg0: i32) -> (i32, i32) {
    %c0_i32 = arith.constant 0 : i32
    %c0_i32_0 = arith.constant 0 : i32
    %c0_i32_1 = arith.constant 0 : i32
    return %c0_i32, %c0_i32_0 : i32, i32
  }
  func.func @transform_11(%arg0: i32) -> (i32, i32, i32) {
    %c0_i32 = arith.constant 0 : i32
    %c0_i32_0 = arith.constant 0 : i32
    %c0_i32_1 = arith.constant 0 : i32
    return %arg0, %c0_i32, %c0_i32_0 : i32, i32, i32
  }
}

</mosaic_0001>

<llo_original>
// kernel: svtr_encoder_forward.3
$region0: #{svtr_encoder_forward.3}
  #allocation0 [shape = 'u32[]', space=smem, size = 0x4, offset = 0x4, fixed_abs, tag = 'smem constant byte address 0x4 - core index']
  #allocation1 [shape = 'u32[144,128]{1,0:T(1,128)}', space=vmem, size = 0x12000, scoped, tag = 'internal scratch']
  %s0 = inlined_call_operand.vmem [shape: f32[2,16,16], index: 0, kind: input, shape index: {}]
  %s1 = inlined_call_operand.vmem [shape: bf16[48,2], index: 1, kind: input, shape index: {}]
  %s2 = inlined_call_operand.vmem [shape: f32[1,2], index: 2, kind: input, shape index: {}]
  %s3 = inlined_call_operand.vmem [shape: f32[1,2], index: 3, kind: input, shape index: {}]
  %s4 = inlined_call_operand.vmem [shape: bf16[2,32], index: 4, kind: input, shape index: {}]
  %s5 = inlined_call_operand.vmem [shape: f32[1,32], index: 5, kind: input, shape index: {}]
  %s6 = inlined_call_operand.vmem [shape: f32[1,32], index: 6, kind: input, shape index: {}]
  %s7 = inlined_call_operand.vmem [shape: bf16[2,16,32], index: 7, kind: output, shape index: {}]
  %s8 = sld [smem:[#allocation0]]
  $region61: #{svtr_encoder_forward.3} parent=0
    _
  %s10 = ssub.s32 1, %s8
  %s11 = scalar_select 0, %s10, %s8
  loop: start=0, step=1, limit=4
  $region2: #{svtr_encoder_forward.3} parent=0 // loop_pre_header
    _
  $region3: #{svtr_encoder_forward.3} parent=0 // loop_header
    %s13 = sphi 0, %s17
    %p14 = scmp.ge.s32.totalorder %s13, 4
    %s23 = sphi 0, %s25
    %s26 = sphi 0, %s23
    %s27 = sphi 0, %s26
    %s43 = sphi 0, %s27
    %s47 = sphi 0, %s47
    %s49 = sphi 0, %s47
    %s50 = sphi 0, %s49
    %s64 = sphi 0, %s50
    %s68 = sphi 0, %s68
    %s70 = sphi 0, %s68
    %s71 = sphi 0, %s70
    %s85 = sphi 0, %s71
    %s89 = sphi 0, %s89
    %s91 = sphi 0, %s89
    %s92 = sphi 0, %s91
    %s106 = sphi 0, %s92
    %s110 = sphi 0, %s110
    %s112 = sphi 0, %s110
    %s113 = sphi 0, %s112
    %s127 = sphi 0, %s113
    %s131 = sphi 0, %s131
    %s133 = sphi 0, %s131
    %s134 = sphi 0, %s133
    %s148 = sphi 0, %s134
    %s152 = sphi 0, %s152
    %s154 = sphi 0, %s152
    %s155 = sphi 0, %s154
    %s169 = sphi 0, %s155
    %s175 = sphi 0, %s177
    %s178 = sphi 0, %s175
    %s179 = sphi 0, %s178
    %s195 = sphi 0, %s179
  $region4: #{svtr_encoder_forward.3} parent=0 // loop_header_branch
    %16 = sbr.rel (%p14) target = $region8
  $region5: #{svtr_encoder_forward.3} parent=0 // loop_body
    %s18 = ssub.s32 %s13, 1
    %s19 = ssub.s32 %s13, 2
    %s20 = sadd.s32 %s13, 1
    %s21 = ssub.s32 %s13, %s20
    %p22 = scmp.eq.s32.totalorder %s21, 0
    %s24 = sadd.s32 %s23, 1
    %s25 = scalar_select %p22, %s23, %s24
    %p28 = pneg %p22
    %p29 = scmp.eq.s32.totalorder %s13, 1
    %p30 = por %p28, %p29
    %p31 = scmp.ne.s32.totalorder %s23, %s26
    %p32 = scmp.eq.s32.totalorder %s13, 0
    %p33 = por %p31, %p32
    %p34 = scmp.ne.s32.totalorder %s23, %s26
    %p35 = scmp.eq.s32.totalorder %s18, 1
    %p36 = por %p34, %p35
    %p37 = scmp.ne.s32.totalorder %s26, %s27
    %p38 = scmp.eq.s32.totalorder %s18, 0
    %p39 = por %p37, %p38
    %p40 = scmp.ne.s32.totalorder %s26, %s27
    %p41 = scmp.eq.s32.totalorder %s19, 1
    %p42 = por %p40, %p41
    %p44 = scmp.ne.s32.totalorder %s27, %s43
    %p45 = scmp.eq.s32.totalorder %s19, 0
    %p46 = por %p44, %p45
    %s48 = sadd.s32 %s47, 1
    %p51 = scmp.eq.s32.totalorder %s13, 1
    %p52 = scmp.ne.s32.totalorder %s47, %s49
    %p53 = scmp.eq.s32.totalorder %s13, 0
    %p54 = por %p52, %p53
    %p55 = scmp.ne.s32.totalorder %s47, %s49
    %p56 = scmp.eq.s32.totalorder %s18, 1
    %p57 = por %p55, %p56
    %p58 = scmp.ne.s32.totalorder %s49, %s50
    %p59 = scmp.eq.s32.totalorder %s18, 0
    %p60 = por %p58, %p59
    %p61 = scmp.ne.s32.totalorder %s49, %s50
    %p62 = scmp.eq.s32.totalorder %s19, 1
    %p63 = por %p61, %p62
    %p65 = scmp.ne.s32.totalorder %s50, %s64
    %p66 = scmp.eq.s32.totalorder %s19, 0
    %p67 = por %p65, %p66
    %s69 = sadd.s32 %s68, 1
    %p72 = scmp.eq.s32.totalorder %s13, 1
    %p73 = scmp.ne.s32.totalorder %s68, %s70
    %p74 = scmp.eq.s32.totalorder %s13, 0
    %p75 = por %p73, %p74
    %p76 = scmp.ne.s32.totalorder %s68, %s70
    %p77 = scmp.eq.s32.totalorder %s18, 1
    %p78 = por %p76, %p77
    %p79 = scmp.ne.s32.totalorder %s70, %s71
    %p80 = scmp.eq.s32.totalorder %s18, 0
    %p81 = por %p79, %p80
    %p82 = scmp.ne.s32.totalorder %s70, %s71
    %p83 = scmp.eq.s32.totalorder %s19, 1
    %p84 = por %p82, %p83
    %p86 = scmp.ne.s32.totalorder %s71, %s85
    %p87 = scmp.eq.s32.totalorder %s19, 0
    %p88 = por %p86, %p87
    %s90 = sadd.s32 %s89, 1
    %p93 = scmp.eq.s32.totalorder %s13, 1
    %p94 = scmp.ne.s32.totalorder %s89, %s91
    %p95 = scmp.eq.s32.totalorder %s13, 0
    %p96 = por %p94, %p95
    %p97 = scmp.ne.s32.totalorder %s89, %s91
    %p98 = scmp.eq.s32.totalorder %s18, 1
    %p99 = por %p97, %p98
    %p100 = scmp.ne.s32.totalorder %s91, %s92
    %p101 = scmp.eq.s32.totalorder %s18, 0
    %p102 = por %p100, %p101
    %p103 = scmp.ne.s32.totalorder %s91, %s92
    %p104 = scmp.eq.s32.totalorder %s19, 1
    %p105 = por %p103, %p104
    %p107 = scmp.ne.s32.totalorder %s92, %s106
    %p108 = scmp.eq.s32.totalorder %s19, 0
    %p109 = por %p107, %p108
    %s111 = sadd.s32 %s110, 1
    %p114 = scmp.eq.s32.totalorder %s13, 1
    %p115 = scmp.ne.s32.totalorder %s110, %s112
    %p116 = scmp.eq.s32.totalorder %s13, 0
    %p117 = por %p115, %p116
    %p118 = scmp.ne.s32.totalorder %s110, %s112
    %p119 = scmp.eq.s32.totalorder %s18, 1
    %p120 = por %p118, %p119
    %p121 = scmp.ne.s32.totalorder %s112, %s113
    %p122 = scmp.eq.s32.totalorder %s18, 0
    %p123 = por %p121, %p122
    %p124 = scmp.ne.s32.totalorder %s112, %s113
    %p125 = scmp.eq.s32.totalorder %s19, 1
    %p126 = por %p124, %p125
    %p128 = scmp.ne.s32.totalorder %s113, %s127
    %p129 = scmp.eq.s32.totalorder %s19, 0
    %p130 = por %p128, %p129
    %s132 = sadd.s32 %s131, 1
    %p135 = scmp.eq.s32.totalorder %s13, 1
    %p136 = scmp.ne.s32.totalorder %s131, %s133
    %p137 = scmp.eq.s32.totalorder %s13, 0
    %p138 = por %p136, %p137
    %p139 = scmp.ne.s32.totalorder %s131, %s133
    %p140 = scmp.eq.s32.totalorder %s18, 1
    %p141 = por %p139, %p140
    %p142 = scmp.ne.s32.totalorder %s133, %s134
    %p143 = scmp.eq.s32.totalorder %s18, 0
    %p144 = por %p142, %p143
    %p145 = scmp.ne.s32.totalorder %s133, %s134
    %p146 = scmp.eq.s32.totalorder %s19, 1
    %p147 = por %p145, %p146
    %p149 = scmp.ne.s32.totalorder %s134, %s148
    %p150 = scmp.eq.s32.totalorder %s19, 0
    %p151 = por %p149, %p150
    %s153 = sadd.s32 %s152, 1
    %p156 = scmp.eq.s32.totalorder %s13, 1
    %p157 = scmp.ne.s32.totalorder %s152, %s154
    %p158 = scmp.eq.s32.totalorder %s13, 0
    %p159 = por %p157, %p158
    %p160 = scmp.ne.s32.totalorder %s152, %s154
    %p161 = scmp.eq.s32.totalorder %s18, 1
    %p162 = por %p160, %p161
    %p163 = scmp.ne.s32.totalorder %s154, %s155
    %p164 = scmp.eq.s32.totalorder %s18, 0
    %p165 = por %p163, %p164
    %p166 = scmp.ne.s32.totalorder %s154, %s155
    %p167 = scmp.eq.s32.totalorder %s19, 1
    %p168 = por %p166, %p167
    %p170 = scmp.ne.s32.totalorder %s155, %s169
    %p171 = scmp.eq.s32.totalorder %s19, 0
    %p172 = por %p170, %p171
    %s173 = ssub.s32 %s13, %s20
    %p174 = scmp.eq.s32.totalorder %s173, 0
    %s176 = sadd.s32 %s175, 1
    %s177 = scalar_select %p174, %s175, %s176
    %p180 = pneg %p174
    %p181 = scmp.eq.s32.totalorder %s13, 1
    %p182 = por %p180, %p181
    %p183 = scmp.ne.s32.totalorder %s175, %s178
    %p184 = scmp.eq.s32.totalorder %s13, 0
    %p185 = por %p183, %p184
    %p186 = scmp.ne.s32.totalorder %s175, %s178
    %p187 = scmp.eq.s32.totalorder %s18, 1
    %p188 = por %p186, %p187
    %p189 = scmp.ne.s32.totalorder %s178, %s179
    %p190 = scmp.eq.s32.totalorder %s18, 0
    %p191 = por %p189, %p190
    %p192 = scmp.ne.s32.totalorder %s178, %s179
    %p193 = scmp.eq.s32.totalorder %s19, 1
    %p194 = por %p192, %p193
    %p196 = scmp.ne.s32.totalorder %s179, %s195
    %p197 = scmp.eq.s32.totalorder %s19, 0
    %p198 = por %p196, %p197
    %p199 = scmp.le.s32.totalorder 1, %s13
    %p200 = scmp.lt.s32.totalorder %s13, 3
    %p201 = pnand %p199, %p200
    %p202 = pneg %p201
    // Predicated region
    $region9: #{svtr_encoder_forward.3} parent=5 // pred_check
      _
    $region10: #{svtr_encoder_forward.3} parent=5 // pred_check_branch
      %204 = sbr.rel (%p201) target = $region12
    $region11: #{svtr_encoder_forward.3} parent=5 // pred_region
      %s205 = ssub.s32 %s13, 1
      // Predicated region
      $region13: #{svtr_encoder_forward.3} parent=11 // pred_check
        %p206 = pneg %p60
      $region14: #{svtr_encoder_forward.3} parent=11 // pred_check_branch
        %208 = sbr.rel (%p206) target = $region16
      $region15: #{svtr_encoder_forward.3} parent=11 // pred_region
        _
      $region16: #{svtr_encoder_forward.3} parent=11 // pred_fallthru
        _
      // Predicated region
      $region17: #{svtr_encoder_forward.3} parent=11 // pred_check
        %p209 = pneg %p81
      $region18: #{svtr_encoder_forward.3} parent=11 // pred_check_branch
        %211 = sbr.rel (%p209) target = $region20
      $region19: #{svtr_encoder_forward.3} parent=11 // pred_region
        _
      $region20: #{svtr_encoder_forward.3} parent=11 // pred_fallthru
        _
      // Predicated region
      $region21: #{svtr_encoder_forward.3} parent=11 // pred_check
        %p212 = pneg %p102
      $region22: #{svtr_encoder_forward.3} parent=11 // pred_check_branch
        %214 = sbr.rel (%p212) target = $region24
      $region23: #{svtr_encoder_forward.3} parent=11 // pred_region
        _
      $region24: #{svtr_encoder_forward.3} parent=11 // pred_fallthru
        _
      // Predicated region
      $region25: #{svtr_encoder_forward.3} parent=11 // pred_check
        %p215 = pneg %p123
      $region26: #{svtr_encoder_forward.3} parent=11 // pred_check_branch
        %217 = sbr.rel (%p215) target = $region28
      $region27: #{svtr_encoder_forward.3} parent=11 // pred_region
        _
      $region28: #{svtr_encoder_forward.3} parent=11 // pred_fallthru
        _
      // Predicated region
      $region29: #{svtr_encoder_forward.3} parent=11 // pred_check
        %p218 = pneg %p144
      $region30: #{svtr_encoder_forward.3} parent=11 // pred_check_branch
        %220 = sbr.rel (%p218) target = $region32
      $region31: #{svtr_encoder_forward.3} parent=11 // pred_region
        _
      $region32: #{svtr_encoder_forward.3} parent=11 // pred_fallthru
        _
      // Predicated region
      $region33: #{svtr_encoder_forward.3} parent=11 // pred_check
        %p221 = pneg %p165
      $region34: #{svtr_encoder_forward.3} parent=11 // pred_check_branch
        %223 = sbr.rel (%p221) target = $region36
      $region35: #{svtr_encoder_forward.3} parent=11 // pred_region
        _
      $region36: #{svtr_encoder_forward.3} parent=11 // pred_fallthru
        _
    $region12: #{svtr_encoder_forward.3} parent=5 // pred_fallthru
      _
    %p224 = scmp.lt.s32.totalorder %s13, 2
    // Predicated region
    $region37: #{svtr_encoder_forward.3} parent=5 // pred_check
      %p225 = pneg %p224
    $region38: #{svtr_encoder_forward.3} parent=5 // pred_check_branch
      %227 = sbr.rel (%p225) target = $region40
    $region39: #{svtr_encoder_forward.3} parent=5 // pred_region
      // Predicated region
      $region41: #{svtr_encoder_forward.3} parent=39 // pred_check
        %p228 = pneg %p33
      $region42: #{svtr_encoder_forward.3} parent=39 // pred_check_branch
        %230 = sbr.rel (%p228) target = $region44
      $region43: #{svtr_encoder_forward.3} parent=39 // pred_region
        %p231 = scmp.lt.s32.totalorder %s13, 1
        %s232 = scalar_select %p231, %s13, 1
        %s233 = smul.addr %s232, 2
        %s234 = smul.addr %s233, 8
        %s235 = scalar_lea.vmem %s0, %s234
      $region44: #{svtr_encoder_forward.3} parent=39 // pred_fallthru
        _
    $region40: #{svtr_encoder_forward.3} parent=5 // pred_fallthru
      _
    %p236 = scmp.le.s32.totalorder 1, %s13
    %p237 = scmp.lt.s32.totalorder %s13, 3
    %p238 = pnand %p236, %p237
    %p239 = pneg %p238
    // Predicated region
    $region45: #{svtr_encoder_forward.3} parent=5 // pred_check
      _
    $region46: #{svtr_encoder_forward.3} parent=5 // pred_check_branch
      %241 = sbr.rel (%p238) target = $region48
    $region47: #{svtr_encoder_forward.3} parent=5 // pred_region
      %s242 = ssub.s32 %s13, 1
      %p243 = scmp.lt.s32.totalorder %s18, 1
      %s244 = scalar_select %p243, %s18, 1
      %s245 = smul.addr %s244, 2
      %s246 = smul.addr %s245, 8
      %s247 = scalar_lea.vmem %s0, %s246
      %p248 = pneg %p39
      %p249 = pneg %p36
      %p250 = pneg %p60
      %p251 = pneg %p57
      %p252 = pneg %p81
      %p253 = pneg %p78
      %p254 = pneg %p102
      %p255 = pneg %p99
      %p256 = pneg %p123
      %p257 = pneg %p120
      %p258 = pneg %p144
      %p259 = pneg %p141
      %p260 = pneg %p165
      %p261 = pneg %p162
      %p262 = pneg %p191
      %p263 = pneg %p188
      %p264 = scmp.lt.s32.totalorder %s18, 1
      %s265 = scalar_select %p264, %s18, 1
      %s266 = smul.addr %s265, 2
      %s267 = smul.addr %s266, 4
      %s268 = scalar_lea.vmem %s7, %s267
      %p269 = scmp.lt.s32.totalorder %s18, 1
      %s270 = scalar_select %p269, %s18, 1
      %s271 = smul.addr %s270, 2
      %s272 = smul.addr %s271, 8
      %s273 = scalar_lea.vmem %s0, %s272
      %p274 = scmp.lt.s32.totalorder %s18, 1
      %s275 = scalar_select %p274, %s18, 1
      %s276 = smul.addr %s275, 2
      %s277 = smul.addr %s276, 4
      %s278 = scalar_lea.vmem %s7, %s277
      %v280 = vld [vmem:[%s273] sm:$0xff]
      %v281 = vld [vmem:[%s273 + $0x8] sm:$0xff]
      %v282 = vlaneseq
      %v283 = vshrl.u32 %v282, 7
      %v284 = vadd.s32 %v283, 8
      %vm285 = vcmp.eq.s32.totalorder %v283, 0
      %vm286 = vcmp.eq.s32.totalorder %v284, 0
      %vm287 = vcmp.eq.s32.totalorder %v283, 15
      %vm288 = vcmp.eq.s32.totalorder %v284, 15
      %v289 = vrot.slane %v280, 7
      %v290 = vrot.slane %v281, 7
      %vm291 = vcmp.lt.s32.totalorder %v283, 1
      %v292 = vsel %vm291, %v289, %v290
      %v293 = vsel %vm291, %v290, %v289
      %v294 = vsel %vm285, 0.0, %v293
      %v295 = vsel %vm286, 0.0, %v292
      %v296 = vrot.slane %v280, 1
      %v297 = vrot.slane %v281, 1
      %vm298 = vcmp.lt.s32.totalorder %v283, 7
      %v299 = vsel %vm298, %v296, %v297
      %v300 = vsel %vm298, %v297, %v296
      %v301 = vsel %vm287, 0.0, %v299
      %v302 = vsel %vm288, 0.0, %v300
      %305 = vrot.lane.b32.xlu0 %v280, 16
      %v306 = vpop.permute.xlu0 %305
      %307 = vrot.lane.b32.xlu0 %v281, 16
      %v308 = vpop.permute.xlu0 %307
      %313 = vrot.lane.b32.xlu0 %v301, 32
      %v314 = vpop.permute.xlu0 %313
      %315 = vrot.lane.b32.xlu0 %v302, 32
      %v316 = vpop.permute.xlu0 %315
      %vm319 = vcmask 130048
      %v320 = vsel %vm319, %v294, %v306
      %v321 = vsel %vm319, %v295, %v308
      %vm322 = vcmask 261120
      %v323 = vsel %vm322, %v320, %v314
      %v324 = vsel %vm322, %v321, %v316
      %v325 = vpack.c.bf16 %v324, %v323
      %v326 = vld [vmem:[%s1] sm:$0xf]
      %v327 = vld [vmem:[%s1 + $0x4] sm:$0xf]
      %v328 = vld [vmem:[%s1 + $0x8] sm:$0xf]
      %v329 = vld [vmem:[%s1 + $0xc] sm:$0xf]
      %v330 = vld [vmem:[%s1 + $0x10] sm:$0xf]
      %v331 = vld [vmem:[%s1 + $0x14] sm:$0xf]
      %v338 = vunpack.c.l.b16 %v326
      %v339 = vunpack.c.l.b16 %v327
      %v340 = vunpack.c.l.b16 %v328
      %v341 = vunpack.c.l.b16 %v329
      %v342 = vunpack.c.l.b16 %v330
      %v343 = vunpack.c.l.b16 %v331
      %v344 = vpack.c.b16 %v339, %v338
      %v345 = vpack.c.b16 %v341, %v340
      %v346 = vpack.c.b16 %v343, %v342
      %vm350 = vcmask 392192
      %v352 = vsel %vm350, %v325, 0
      %354 = vmatprep.subr.bf16.mxu0 0
      %355 = vmatpush1.bf16.msra.mxu0 %v344
      %356 = vmatprep.subr.bf16.mxu0 0
      %357 = vmatpush1.bf16.msra.mxu0 %v345
      %358 = vmatprep.subr.bf16.mxu0 0
      %359 = vmatpush1.bf16.msra.mxu0 %v346
      %360 = vmatprep.subr.bf16.mxu0 0
      %361 = vmatpush1.bf16.msra.mxu0 0
      %362 = vmatprep.subr.bf16.mxu0 0
      %363 = vmatpush1.bf16.msra.mxu0 0
      %364 = vmatprep.subr.bf16.mxu0 0
      %365 = vmatpush1.bf16.msra.mxu0 0
      %366 = vmatprep.subr.bf16.mxu0 0
      %367 = vmatpush1.bf16.msra.mxu0 0
      %368 = vmatprep.subr.bf16.mxu0 0
      %369 = vmatpush1.bf16.msra.mxu0 0
      %370 = vmatprep.subr.bf16.mxu0 0
      %371 = vmatpush1.bf16.msra.mxu0 0
      %372 = vmatprep.subr.bf16.mxu0 0
      %373 = vmatpush1.bf16.msra.mxu0 0
      %374 = vmatprep.subr.bf16.mxu0 0
      %375 = vmatpush1.bf16.msra.mxu0 0
      %376 = vmatprep.subr.bf16.mxu0 0
      %377 = vmatpush1.bf16.msra.mxu0 0
      %378 = vmatprep.subr.bf16.mxu0 0
      %379 = vmatpush1.bf16.msra.mxu0 0
      %380 = vmatprep.subr.bf16.mxu0 0
      %381 = vmatpush1.bf16.msra.mxu0 0
      %382 = vmatprep.subr.bf16.mxu0 0
      %383 = vmatpush1.bf16.msra.mxu0 0
      %384 = vmatprep.subr.bf16.mxu0 0
      %385 = vmatpush1.bf16.msra.mxu0 0
      %386 = vmatprep.mubr.bf16.mxu0 0
      %387 = vmatmul.mubr.bf16.gmra.mrb[0].mxu0 %v352
      %v388 = vpop.f32.mrb[0].mxu0
      %v389 = vadd.f32 0.0, %v388
      %v390 = vpop.f32.mrb[0].mxu0
      %v391 = vpop.f32.mrb[0].mxu0
      %v392 = vadd.f32 0.0, %v391
      %v393 = vpop.f32.mrb[0].mxu0
      %394 = vdwg.mxu0
      %v395 = vld [vmem:[%s2] sm:$0x1]
      %v397 = vlaneseq
      %v398 = vshrl.u32 %v397, 7
      %v399 = vsub.s32 0, %v398
      %v400 = vrot.slane %v395, %v399
      %v402 = vmul.f32 %v389, %v400
      %v403 = vmul.f32 %v392, %v400
      %v404 = vld [vmem:[%s3] sm:$0x1]
      %v406 = vlaneseq
      %v407 = vshrl.u32 %v406, 7
      %v408 = vsub.s32 0, %v407
      %v409 = vrot.slane %v404, %v408
      %v411 = vadd.f32 %v402, %v409
      %v412 = vadd.f32 %v403, %v409
      %v413 = vxor.u32 %v411, 2147483648
      %v414 = vxor.u32 %v412, 2147483648
      %v415 = vmul.f32 %v413, 1.442695
      %v416 = vpow.pop %v415
      %v417 = vmul.f32 %v414, 1.442695
      %v418 = vpow.pop %v417
      %v419 = vadd.f32 %v416, 1.0
      %v420 = vadd.f32 %v418, 1.0
      %v421 = vrcp.pop %v419
      %v422 = vmul.f32 1.0, %v421
      %v423 = vrcp.pop %v420
      %v424 = vmul.f32 1.0, %v423
      %v425 = vmul.f32 %v411, %v422
      %v426 = vmul.f32 %v412, %v424
      %v427 = vpack.c.bf16 %v426, %v425
      %v428 = vld [vmem:[%s4] sm:$0x1]
      %vm429 = vcmask 15360
      %v431 = vsel %vm429, %v427, 0
      %vm433 = vcmask 1040384
      %v435 = vsel %vm433, %v428, 0
      %437 = vmatprep.subr.bf16.mxu0 0
      %438 = vmatpush1.bf16.msra.mxu0 %v435
      %439 = vmatprep.subr.bf16.mxu0 0
      %440 = vmatpush1.bf16.msra.mxu0 0
      %441 = vmatprep.subr.bf16.mxu0 0
      %442 = vmatpush1.bf16.msra.mxu0 0
      %443 = vmatprep.subr.bf16.mxu0 0
      %444 = vmatpush1.bf16.msra.mxu0 0
      %445 = vmatprep.subr.bf16.mxu0 0
      %446 = vmatpush1.bf16.msra.mxu0 0
      %447 = vmatprep.subr.bf16.mxu0 0
      %448 = vmatpush1.bf16.msra.mxu0 0
      %449 = vmatprep.subr.bf16.mxu0 0
      %450 = vmatpush1.bf16.msra.mxu0 0
      %451 = vmatprep.subr.bf16.mxu0 0
      %452 = vmatpush1.bf16.msra.mxu0 0
      %453 = vmatprep.subr.bf16.mxu0 0
      %454 = vmatpush1.bf16.msra.mxu0 0
      %455 = vmatprep.subr.bf16.mxu0 0
      %456 = vmatpush1.bf16.msra.mxu0 0
      %457 = vmatprep.subr.bf16.mxu0 0
      %458 = vmatpush1.bf16.msra.mxu0 0
      %459 = vmatprep.subr.bf16.mxu0 0
      %460 = vmatpush1.bf16.msra.mxu0 0
      %461 = vmatprep.subr.bf16.mxu0 0
      %462 = vmatpush1.bf16.msra.mxu0 0
      %463 = vmatprep.subr.bf16.mxu0 0
      %464 = vmatpush1.bf16.msra.mxu0 0
      %465 = vmatprep.subr.bf16.mxu0 0
      %466 = vmatpush1.bf16.msra.mxu0 0
      %467 = vmatprep.subr.bf16.mxu0 0
      %468 = vmatpush1.bf16.msra.mxu0 0
      %469 = vmatprep.mubr.bf16.mxu0 0
      %470 = vmatmul.mubr.bf16.gmra.mrb[0].mxu0 %v431
      %v471 = vpop.f32.mrb[0].mxu0
      %v472 = vadd.f32 0.0, %v471
      %v473 = vpop.f32.mrb[0].mxu0
      %v474 = vpop.f32.mrb[0].mxu0
      %v475 = vadd.f32 0.0, %v474
      %v476 = vpop.f32.mrb[0].mxu0
      %477 = vdwg.mxu0
      %v478 = vld [vmem:[%s5] sm:$0x1]
      %v480 = vlaneseq
      %v481 = vshrl.u32 %v480, 7
      %v482 = vsub.s32 0, %v481
      %v483 = vrot.slane %v478, %v482
      %v485 = vmul.f32 %v472, %v483
      %v486 = vmul.f32 %v475, %v483
      %v487 = vld [vmem:[%s6] sm:$0x1]
      %v489 = vlaneseq
      %v490 = vshrl.u32 %v489, 7
      %v491 = vsub.s32 0, %v490
      %v492 = vrot.slane %v487, %v491
      %v494 = vadd.f32 %v485, %v492
      %v495 = vadd.f32 %v486, %v492
      %v496 = vxor.u32 %v494, 2147483648
      %v497 = vxor.u32 %v495, 2147483648
      %v498 = vmul.f32 %v496, 1.442695
      %v499 = vpow.pop %v498
      %v500 = vmul.f32 %v497, 1.442695
      %v501 = vpow.pop %v500
      %v502 = vadd.f32 %v499, 1.0
      %v503 = vadd.f32 %v501, 1.0
      %v504 = vrcp.pop %v502
      %v505 = vmul.f32 1.0, %v504
      %v506 = vrcp.pop %v503
      %v507 = vmul.f32 1.0, %v506
      %v508 = vmul.f32 %v494, %v505
      %v509 = vmul.f32 %v495, %v507
      %v510 = vpack.c.bf16 %v509, %v508
      %v512 = vunpack.c.l.b16 %v510
      %v513 = vunpack.c.h.b16 %v510
      %v514 = vpack.c.b16 %v512, %v512
      %v515 = vpack.c.b16 %v513, %v513
      %vm518 = vcmask 257024
      %519 = vst.msk [vmem:[%s278] sm:$0xf] %vm518, %v514
      %520 = vst.msk [vmem:[%s278 + $0x4] sm:$0xf] %vm518, %v515
      %p521 = scmp.lt.s32.totalorder %s18, 1
      %s522 = scalar_select %p521, %s18, 1
      %s523 = smul.addr %s522, 2
      %s524 = smul.addr %s523, 4
      %s525 = scalar_lea.vmem %s7, %s524
      // Predicated region
      $region49: #{svtr_encoder_forward.3} parent=47 // pred_check
        %p526 = pneg %p188
      $region50: #{svtr_encoder_forward.3} parent=47 // pred_check_branch
        %528 = sbr.rel (%p526) target = $region52
      $region51: #{svtr_encoder_forward.3} parent=47 // pred_region
        _
      $region52: #{svtr_encoder_forward.3} parent=47 // pred_fallthru
        _
    $region48: #{svtr_encoder_forward.3} parent=5 // pred_fallthru
      _
    %p529 = scmp.le.s32.totalorder 2, %s13
    // Predicated region
    $region53: #{svtr_encoder_forward.3} parent=5 // pred_check
      %p530 = pneg %p529
    $region54: #{svtr_encoder_forward.3} parent=5 // pred_check_branch
      %532 = sbr.rel (%p530) target = $region56
    $region55: #{svtr_encoder_forward.3} parent=5 // pred_region
      %s533 = ssub.s32 %s13, 2
      // Predicated region
      $region57: #{svtr_encoder_forward.3} parent=55 // pred_check
        %p534 = pneg %p194
      $region58: #{svtr_encoder_forward.3} parent=55 // pred_check_branch
        %536 = sbr.rel (%p534) target = $region60
      $region59: #{svtr_encoder_forward.3} parent=55 // pred_region
        %p537 = scmp.lt.s32.totalorder %s19, 1
        %s538 = scalar_select %p537, %s19, 1
        %s539 = smul.addr %s538, 2
        %s540 = smul.addr %s539, 4
        %s541 = scalar_lea.vmem %s7, %s540
      $region60: #{svtr_encoder_forward.3} parent=55 // pred_fallthru
        _
    $region56: #{svtr_encoder_forward.3} parent=5 // pred_fallthru
      _
  $region6: #{svtr_encoder_forward.3} parent=0 // loop_footer
    %s17 = sadd.s32 1, %s13
  $region7: #{svtr_encoder_forward.3} parent=0 // loop_footer_branch
    %12 = sbr.rel target = $region3
  $region8: #{svtr_encoder_forward.3} parent=0 // loop_exit
    _

// kernel: svtr_encoder_forward.5
$region0: #{svtr_encoder_forward.5}
  #allocation0 [shape = 'u32[]', space=smem, size = 0x4, offset = 0x4, fixed_abs, tag = 'smem constant byte address 0x4 - core index']
  #allocation1 [shape = 'u32[144,128]{1,0:T(1,128)}', space=vmem, size = 0x12000, scoped, tag = 'internal scratch']
  %s0 = inlined_call_operand.vmem [shape: bf16[2,16,32], index: 0, kind: input, shape index: {}]
  %s1 = inlined_call_operand.vmem [shape: f32[2,16,16], index: 1, kind: input, shape index: {}]
  %s2 = inlined_call_operand.vmem [shape: bf16[32,16], index: 2, kind: input, shape index: {}]
  %s3 = inlined_call_operand.vmem [shape: f32[1,16], index: 3, kind: input, shape index: {}]
  %s4 = inlined_call_operand.vmem [shape: f32[1,16], index: 4, kind: input, shape index: {}]
  %s5 = inlined_call_operand.vmem [shape: bf16[96,2], index: 5, kind: input, shape index: {}]
  %s6 = inlined_call_operand.vmem [shape: f32[1,2], index: 6, kind: input, shape index: {}]
  %s7 = inlined_call_operand.vmem [shape: f32[1,2], index: 7, kind: input, shape index: {}]
  %s8 = inlined_call_operand.vmem [shape: bf16[2,32], index: 8, kind: input, shape index: {}]
  %s9 = inlined_call_operand.vmem [shape: f32[1,32], index: 9, kind: input, shape index: {}]
  %s10 = inlined_call_operand.vmem [shape: f32[1,32], index: 10, kind: input, shape index: {}]
  %s11 = inlined_call_operand.hbm [shape: f32[2,16,32], index: 11, kind: output, shape index: {}]
  %s12 = sld [smem:[#allocation0]]
  $region77: #{svtr_encoder_forward.5} parent=0
    _
  %s14 = ssub.s32 1, %s12
  %s15 = scalar_select 0, %s14, %s12
  $region1: #{svtr_encoder_forward.5} parent=0
    #allocation2 [shape = 'u8[16384]{0}', space=vmem, size = 0x4000, scoped, tag = 'output window, operand 0']
    #allocation3 [shape = 's32[2]{0}', space=sflag, size = 0x8, scoped, tag = 'scoped memory for svtr_encoder_forward.5']
    %16 = vsyncpa [#allocation3], 0
    %s17 = scalar_lea.sflag [#allocation3], 1
    %18 = vsyncpa %s17, 0
    loop: start=0, step=1, limit=4
    $region2: #{svtr_encoder_forward.5} parent=1 // loop_pre_header
      _
    $region3: #{svtr_encoder_forward.5} parent=1 // loop_header
      %s20 = sphi 0, %s24
      %p21 = scmp.ge.s32.totalorder %s20, 4
      %s30 = sphi 0, %s32
      %s33 = sphi 0, %s30
      %s34 = sphi 0, %s33
      %s50 = sphi 0, %s34
      %s56 = sphi 0, %s58
      %s59 = sphi 0, %s56
      %s60 = sphi 0, %s59
      %s76 = sphi 0, %s60
      %s80 = sphi 0, %s80
      %s82 = sphi 0, %s80
      %s83 = sphi 0, %s82
      %s97 = sphi 0, %s83
      %s101 = sphi 0, %s101
      %s103 = sphi 0, %s101
      %s104 = sphi 0, %s103
      %s118 = sphi 0, %s104
      %s122 = sphi 0, %s122
      %s124 = sphi 0, %s122
      %s125 = sphi 0, %s124
      %s139 = sphi 0, %s125
      %s143 = sphi 0, %s143
      %s145 = sphi 0, %s143
      %s146 = sphi 0, %s145
      %s160 = sphi 0, %s146
      %s164 = sphi 0, %s164
      %s166 = sphi 0, %s164
      %s167 = sphi 0, %s166
      %s181 = sphi 0, %s167
      %s185 = sphi 0, %s185
      %s187 = sphi 0, %s185
      %s188 = sphi 0, %s187
      %s202 = sphi 0, %s188
      %s206 = sphi 0, %s206
      %s208 = sphi 0, %s206
      %s209 = sphi 0, %s208
      %s223 = sphi 0, %s209
      %s227 = sphi 0, %s227
      %s229 = sphi 0, %s227
      %s230 = sphi 0, %s229
      %s244 = sphi 0, %s230
      %s248 = sphi 0, %s248
      %s250 = sphi 0, %s248
      %s251 = sphi 0, %s250
      %s265 = sphi 0, %s251
      %s271 = sphi 0, %s273
      %s274 = sphi 0, %s271
      %s275 = sphi 0, %s274
      %s291 = sphi 0, %s275
    $region4: #{svtr_encoder_forward.5} parent=1 // loop_header_branch
      %23 = sbr.rel (%p21) target = $region8
    $region5: #{svtr_encoder_forward.5} parent=1 // loop_body
      %s25 = ssub.s32 %s20, 1
      %s26 = ssub.s32 %s20, 2
      %s27 = sadd.s32 %s20, 1
      %s28 = ssub.s32 %s20, %s27
      %p29 = scmp.eq.s32.totalorder %s28, 0
      %s31 = sadd.s32 %s30, 1
      %s32 = scalar_select %p29, %s30, %s31
      %p35 = pneg %p29
      %p36 = scmp.eq.s32.totalorder %s20, 1
      %p37 = por %p35, %p36
      %p38 = scmp.ne.s32.totalorder %s30, %s33
      %p39 = scmp.eq.s32.totalorder %s20, 0
      %p40 = por %p38, %p39
      %p41 = scmp.ne.s32.totalorder %s30, %s33
      %p42 = scmp.eq.s32.totalorder %s25, 1
      %p43 = por %p41, %p42
      %p44 = scmp.ne.s32.totalorder %s33, %s34
      %p45 = scmp.eq.s32.totalorder %s25, 0
      %p46 = por %p44, %p45
      %p47 = scmp.ne.s32.totalorder %s33, %s34
      %p48 = scmp.eq.s32.totalorder %s26, 1
      %p49 = por %p47, %p48
      %p51 = scmp.ne.s32.totalorder %s34, %s50
      %p52 = scmp.eq.s32.totalorder %s26, 0
      %p53 = por %p51, %p52
      %s54 = ssub.s32 %s20, %s27
      %p55 = scmp.eq.s32.totalorder %s54, 0
      %s57 = sadd.s32 %s56, 1
      %s58 = scalar_select %p55, %s56, %s57
      %p61 = pneg %p55
      %p62 = scmp.eq.s32.totalorder %s20, 1
      %p63 = por %p61, %p62
      %p64 = scmp.ne.s32.totalorder %s56, %s59
      %p65 = scmp.eq.s32.totalorder %s20, 0
      %p66 = por %p64, %p65
      %p67 = scmp.ne.s32.totalorder %s56, %s59
      %p68 = scmp.eq.s32.totalorder %s25, 1
      %p69 = por %p67, %p68
      %p70 = scmp.ne.s32.totalorder %s59, %s60
      %p71 = scmp.eq.s32.totalorder %s25, 0
      %p72 = por %p70, %p71
      %p73 = scmp.ne.s32.totalorder %s59, %s60
      %p74 = scmp.eq.s32.totalorder %s26, 1
      %p75 = por %p73, %p74
      %p77 = scmp.ne.s32.totalorder %s60, %s76
      %p78 = scmp.eq.s32.totalorder %s26, 0
      %p79 = por %p77, %p78
      %s81 = sadd.s32 %s80, 1
      %p84 = scmp.eq.s32.totalorder %s20, 1
      %p85 = scmp.ne.s32.totalorder %s80, %s82
      %p86 = scmp.eq.s32.totalorder %s20, 0
      %p87 = por %p85, %p86
      %p88 = scmp.ne.s32.totalorder %s80, %s82
      %p89 = scmp.eq.s32.totalorder %s25, 1
      %p90 = por %p88, %p89
      %p91 = scmp.ne.s32.totalorder %s82, %s83
      %p92 = scmp.eq.s32.totalorder %s25, 0
      %p93 = por %p91, %p92
      %p94 = scmp.ne.s32.totalorder %s82, %s83
      %p95 = scmp.eq.s32.totalorder %s26, 1
      %p96 = por %p94, %p95
      %p98 = scmp.ne.s32.totalorder %s83, %s97
      %p99 = scmp.eq.s32.totalorder %s26, 0
      %p100 = por %p98, %p99
      %s102 = sadd.s32 %s101, 1
      %p105 = scmp.eq.s32.totalorder %s20, 1
      %p106 = scmp.ne.s32.totalorder %s101, %s103
      %p107 = scmp.eq.s32.totalorder %s20, 0
      %p108 = por %p106, %p107
      %p109 = scmp.ne.s32.totalorder %s101, %s103
      %p110 = scmp.eq.s32.totalorder %s25, 1
      %p111 = por %p109, %p110
      %p112 = scmp.ne.s32.totalorder %s103, %s104
      %p113 = scmp.eq.s32.totalorder %s25, 0
      %p114 = por %p112, %p113
      %p115 = scmp.ne.s32.totalorder %s103, %s104
      %p116 = scmp.eq.s32.totalorder %s26, 1
      %p117 = por %p115, %p116
      %p119 = scmp.ne.s32.totalorder %s104, %s118
      %p120 = scmp.eq.s32.totalorder %s26, 0
      %p121 = por %p119, %p120
      %s123 = sadd.s32 %s122, 1
      %p126 = scmp.eq.s32.totalorder %s20, 1
      %p127 = scmp.ne.s32.totalorder %s122, %s124
      %p128 = scmp.eq.s32.totalorder %s20, 0
      %p129 = por %p127, %p128
      %p130 = scmp.ne.s32.totalorder %s122, %s124
      %p131 = scmp.eq.s32.totalorder %s25, 1
      %p132 = por %p130, %p131
      %p133 = scmp.ne.s32.totalorder %s124, %s125
      %p134 = scmp.eq.s32.totalorder %s25, 0
      %p135 = por %p133, %p134
      %p136 = scmp.ne.s32.totalorder %s124, %s125
      %p137 = scmp.eq.s32.totalorder %s26, 1
      %p138 = por %p136, %p137
      %p140 = scmp.ne.s32.totalorder %s125, %s139
      %p141 = scmp.eq.s32.totalorder %s26, 0
      %p142 = por %p140, %p141
      %s144 = sadd.s32 %s143, 1
      %p147 = scmp.eq.s32.totalorder %s20, 1
      %p148 = scmp.ne.s32.totalorder %s143, %s145
      %p149 = scmp.eq.s32.totalorder %s20, 0
      %p150 = por %p148, %p149
      %p151 = scmp.ne.s32.totalorder %s143, %s145
      %p152 = scmp.eq.s32.totalorder %s25, 1
      %p153 = por %p151, %p152
      %p154 = scmp.ne.s32.totalorder %s145, %s146
      %p155 = scmp.eq.s32.totalorder %s25, 0
      %p156 = por %p154, %p155
      %p157 = scmp.ne.s32.totalorder %s145, %s146
      %p158 = scmp.eq.s32.totalorder %s26, 1
      %p159 = por %p157, %p158
      %p161 = scmp.ne.s32.totalorder %s146, %s160
      %p162 = scmp.eq.s32.totalorder %s26, 0
      %p163 = por %p161, %p162
      %s165 = sadd.s32 %s164, 1
      %p168 = scmp.eq.s32.totalorder %s20, 1
      %p169 = scmp.ne.s32.totalorder %s164, %s166
      %p170 = scmp.eq.s32.totalorder %s20, 0
      %p171 = por %p169, %p170
      %p172 = scmp.ne.s32.totalorder %s164, %s166
      %p173 = scmp.eq.s32.totalorder %s25, 1
      %p174 = por %p172, %p173
      %p175 = scmp.ne.s32.totalorder %s166, %s167
      %p176 = scmp.eq.s32.totalorder %s25, 0
      %p177 = por %p175, %p176
      %p178 = scmp.ne.s32.totalorder %s166, %s167
      %p179 = scmp.eq.s32.totalorder %s26, 1
      %p180 = por %p178, %p179
      %p182 = scmp.ne.s32.totalorder %s167, %s181
      %p183 = scmp.eq.s32.totalorder %s26, 0
      %p184 = por %p182, %p183
      %s186 = sadd.s32 %s185, 1
      %p189 = scmp.eq.s32.totalorder %s20, 1
      %p190 = scmp.ne.s32.totalorder %s185, %s187
      %p191 = scmp.eq.s32.totalorder %s20, 0
      %p192 = por %p190, %p191
      %p193 = scmp.ne.s32.totalorder %s185, %s187
      %p194 = scmp.eq.s32.totalorder %s25, 1
      %p195 = por %p193, %p194
      %p196 = scmp.ne.s32.totalorder %s187, %s188
      %p197 = scmp.eq.s32.totalorder %s25, 0
      %p198 = por %p196, %p197
      %p199 = scmp.ne.s32.totalorder %s187, %s188
      %p200 = scmp.eq.s32.totalorder %s26, 1
      %p201 = por %p199, %p200
      %p203 = scmp.ne.s32.totalorder %s188, %s202
      %p204 = scmp.eq.s32.totalorder %s26, 0
      %p205 = por %p203, %p204
      %s207 = sadd.s32 %s206, 1
      %p210 = scmp.eq.s32.totalorder %s20, 1
      %p211 = scmp.ne.s32.totalorder %s206, %s208
      %p212 = scmp.eq.s32.totalorder %s20, 0
      %p213 = por %p211, %p212
      %p214 = scmp.ne.s32.totalorder %s206, %s208
      %p215 = scmp.eq.s32.totalorder %s25, 1
      %p216 = por %p214, %p215
      %p217 = scmp.ne.s32.totalorder %s208, %s209
      %p218 = scmp.eq.s32.totalorder %s25, 0
      %p219 = por %p217, %p218
      %p220 = scmp.ne.s32.totalorder %s208, %s209
      %p221 = scmp.eq.s32.totalorder %s26, 1
      %p222 = por %p220, %p221
      %p224 = scmp.ne.s32.totalorder %s209, %s223
      %p225 = scmp.eq.s32.totalorder %s26, 0
      %p226 = por %p224, %p225
      %s228 = sadd.s32 %s227, 1
      %p231 = scmp.eq.s32.totalorder %s20, 1
      %p232 = scmp.ne.s32.totalorder %s227, %s229
      %p233 = scmp.eq.s32.totalorder %s20, 0
      %p234 = por %p232, %p233
      %p235 = scmp.ne.s32.totalorder %s227, %s229
      %p236 = scmp.eq.s32.totalorder %s25, 1
      %p237 = por %p235, %p236
      %p238 = scmp.ne.s32.totalorder %s229, %s230
      %p239 = scmp.eq.s32.totalorder %s25, 0
      %p240 = por %p238, %p239
      %p241 = scmp.ne.s32.totalorder %s229, %s230
      %p242 = scmp.eq.s32.totalorder %s26, 1
      %p243 = por %p241, %p242
      %p245 = scmp.ne.s32.totalorder %s230, %s244
      %p246 = scmp.eq.s32.totalorder %s26, 0
      %p247 = por %p245, %p246
      %s249 = sadd.s32 %s248, 1
      %p252 = scmp.eq.s32.totalorder %s20, 1
      %p253 = scmp.ne.s32.totalorder %s248, %s250
      %p254 = scmp.eq.s32.totalorder %s20, 0
      %p255 = por %p253, %p254
      %p256 = scmp.ne.s32.totalorder %s248, %s250
      %p257 = scmp.eq.s32.totalorder %s25, 1
      %p258 = por %p256, %p257
      %p259 = scmp.ne.s32.totalorder %s250, %s251
      %p260 = scmp.eq.s32.totalorder %s25, 0
      %p261 = por %p259, %p260
      %p262 = scmp.ne.s32.totalorder %s250, %s251
      %p263 = scmp.eq.s32.totalorder %s26, 1
      %p264 = por %p262, %p263
      %p266 = scmp.ne.s32.totalorder %s251, %s265
      %p267 = scmp.eq.s32.totalorder %s26, 0
      %p268 = por %p266, %p267
      %s269 = ssub.s32 %s20, %s27
      %p270 = scmp.eq.s32.totalorder %s269, 0
      %s272 = sadd.s32 %s271, 1
      %s273 = scalar_select %p270, %s271, %s272
      %p276 = pneg %p270
      %p277 = scmp.eq.s32.totalorder %s20, 1
      %p278 = por %p276, %p277
      %p279 = scmp.ne.s32.totalorder %s271, %s274
      %p280 = scmp.eq.s32.totalorder %s20, 0
      %p281 = por %p279, %p280
      %p282 = scmp.ne.s32.totalorder %s271, %s274
      %p283 = scmp.eq.s32.totalorder %s25, 1
      %p284 = por %p282, %p283
      %p285 = scmp.ne.s32.totalorder %s274, %s275
      %p286 = scmp.eq.s32.totalorder %s25, 0
      %p287 = por %p285, %p286
      %p288 = scmp.ne.s32.totalorder %s274, %s275
      %p289 = scmp.eq.s32.totalorder %s26, 1
      %p290 = por %p288, %p289
      %p292 = scmp.ne.s32.totalorder %s275, %s291
      %p293 = scmp.eq.s32.totalorder %s26, 0
      %p294 = por %p292, %p293
      %p295 = scmp.le.s32.totalorder 1, %s20
      %p296 = scmp.lt.s32.totalorder %s20, 3
      %p297 = pnand %p295, %p296
      %p298 = pneg %p297
      // Predicated region
      $region9: #{svtr_encoder_forward.5} parent=5 // pred_check
        _
      $region10: #{svtr_encoder_forward.5} parent=5 // pred_check_branch
        %300 = sbr.rel (%p297) target = $region12
      $region11: #{svtr_encoder_forward.5} parent=5 // pred_region
        %s301 = ssub.s32 %s20, 1
        // Predicated region
        $region13: #{svtr_encoder_forward.5} parent=11 // pred_check
          %p302 = pneg %p93
        $region14: #{svtr_encoder_forward.5} parent=11 // pred_check_branch
          %304 = sbr.rel (%p302) target = $region16
        $region15: #{svtr_encoder_forward.5} parent=11 // pred_region
          _
        $region16: #{svtr_encoder_forward.5} parent=11 // pred_fallthru
          _
        // Predicated region
        $region17: #{svtr_encoder_forward.5} parent=11 // pred_check
          %p305 = pneg %p114
        $region18: #{svtr_encoder_forward.5} parent=11 // pred_check_branch
          %307 = sbr.rel (%p305) target = $region20
        $region19: #{svtr_encoder_forward.5} parent=11 // pred_region
          _
        $region20: #{svtr_encoder_forward.5} parent=11 // pred_fallthru
          _
        // Predicated region
        $region21: #{svtr_encoder_forward.5} parent=11 // pred_check
          %p308 = pneg %p135
        $region22: #{svtr_encoder_forward.5} parent=11 // pred_check_branch
          %310 = sbr.rel (%p308) target = $region24
        $region23: #{svtr_encoder_forward.5} parent=11 // pred_region
          _
        $region24: #{svtr_encoder_forward.5} parent=11 // pred_fallthru
          _
        // Predicated region
        $region25: #{svtr_encoder_forward.5} parent=11 // pred_check
          %p311 = pneg %p156
        $region26: #{svtr_encoder_forward.5} parent=11 // pred_check_branch
          %313 = sbr.rel (%p311) target = $region28
        $region27: #{svtr_encoder_forward.5} parent=11 // pred_region
          _
        $region28: #{svtr_encoder_forward.5} parent=11 // pred_fallthru
          _
        // Predicated region
        $region29: #{svtr_encoder_forward.5} parent=11 // pred_check
          %p314 = pneg %p177
        $region30: #{svtr_encoder_forward.5} parent=11 // pred_check_branch
          %316 = sbr.rel (%p314) target = $region32
        $region31: #{svtr_encoder_forward.5} parent=11 // pred_region
          _
        $region32: #{svtr_encoder_forward.5} parent=11 // pred_fallthru
          _
        // Predicated region
        $region33: #{svtr_encoder_forward.5} parent=11 // pred_check
          %p317 = pneg %p198
        $region34: #{svtr_encoder_forward.5} parent=11 // pred_check_branch
          %319 = sbr.rel (%p317) target = $region36
        $region35: #{svtr_encoder_forward.5} parent=11 // pred_region
          _
        $region36: #{svtr_encoder_forward.5} parent=11 // pred_fallthru
          _
        // Predicated region
        $region37: #{svtr_encoder_forward.5} parent=11 // pred_check
          %p320 = pneg %p219
        $region38: #{svtr_encoder_forward.5} parent=11 // pred_check_branch
          %322 = sbr.rel (%p320) target = $region40
        $region39: #{svtr_encoder_forward.5} parent=11 // pred_region
          _
        $region40: #{svtr_encoder_forward.5} parent=11 // pred_fallthru
          _
        // Predicated region
        $region41: #{svtr_encoder_forward.5} parent=11 // pred_check
          %p323 = pneg %p240
        $region42: #{svtr_encoder_forward.5} parent=11 // pred_check_branch
          %325 = sbr.rel (%p323) target = $region44
        $region43: #{svtr_encoder_forward.5} parent=11 // pred_region
          _
        $region44: #{svtr_encoder_forward.5} parent=11 // pred_fallthru
          _
        // Predicated region
        $region45: #{svtr_encoder_forward.5} parent=11 // pred_check
          %p326 = pneg %p261
        $region46: #{svtr_encoder_forward.5} parent=11 // pred_check_branch
          %328 = sbr.rel (%p326) target = $region48
        $region47: #{svtr_encoder_forward.5} parent=11 // pred_region
          _
        $region48: #{svtr_encoder_forward.5} parent=11 // pred_fallthru
          _
      $region12: #{svtr_encoder_forward.5} parent=5 // pred_fallthru
        _
      %p329 = scmp.lt.s32.totalorder %s20, 2
      // Predicated region
      $region49: #{svtr_encoder_forward.5} parent=5 // pred_check
        %p330 = pneg %p329
      $region50: #{svtr_encoder_forward.5} parent=5 // pred_check_branch
        %332 = sbr.rel (%p330) target = $region52
      $region51: #{svtr_encoder_forward.5} parent=5 // pred_region
        // Predicated region
        $region53: #{svtr_encoder_forward.5} parent=51 // pred_check
          %p333 = pneg %p40
        $region54: #{svtr_encoder_forward.5} parent=51 // pred_check_branch
          %335 = sbr.rel (%p333) target = $region56
        $region55: #{svtr_encoder_forward.5} parent=51 // pred_region
          %p336 = scmp.lt.s32.totalorder %s20, 1
          %s337 = scalar_select %p336, %s20, 1
          %s338 = smul.addr %s337, 2
          %s339 = smul.addr %s338, 4
          %s340 = scalar_lea.vmem %s0, %s339
        $region56: #{svtr_encoder_forward.5} parent=51 // pred_fallthru
          _
        // Predicated region
        $region57: #{svtr_encoder_forward.5} parent=51 // pred_check
          %p341 = pneg %p66
        $region58: #{svtr_encoder_forward.5} parent=51 // pred_check_branch
          %343 = sbr.rel (%p341) target = $region60
        $region59: #{svtr_encoder_forward.5} parent=51 // pred_region
          %p344 = scmp.lt.s32.totalorder %s20, 1
          %s345 = scalar_select %p344, %s20, 1
          %s346 = smul.addr %s345, 2
          %s347 = smul.addr %s346, 8
          %s348 = scalar_lea.vmem %s1, %s347
        $region60: #{svtr_encoder_forward.5} parent=51 // pred_fallthru
          _
      $region52: #{svtr_encoder_forward.5} parent=5 // pred_fallthru
        _
      %p349 = scmp.le.s32.totalorder 1, %s20
      %p350 = scmp.lt.s32.totalorder %s20, 3
      %p351 = pnand %p349, %p350
      %p352 = pneg %p351
      // Predicated region
      $region61: #{svtr_encoder_forward.5} parent=5 // pred_check
        _
      $region62: #{svtr_encoder_forward.5} parent=5 // pred_check_branch
        %354 = sbr.rel (%p351) target = $region64
      $region63: #{svtr_encoder_forward.5} parent=5 // pred_region
        %s355 = ssub.s32 %s20, 1
        %p356 = scmp.lt.s32.totalorder %s25, 1
        %s357 = scalar_select %p356, %s25, 1
        %s358 = smul.addr %s357, 2
        %s359 = smul.addr %s358, 4
        %s360 = scalar_lea.vmem %s0, %s359
        %p361 = pneg %p46
        %p362 = pneg %p43
        %p363 = scmp.lt.s32.totalorder %s25, 1
        %s364 = scalar_select %p363, %s25, 1
        %s365 = smul.addr %s364, 2
        %s366 = smul.addr %s365, 8
        %s367 = scalar_lea.vmem %s1, %s366
        %p368 = pneg %p72
        %p369 = pneg %p69
        %p370 = pneg %p93
        %p371 = pneg %p90
        %p372 = pneg %p114
        %p373 = pneg %p111
        %p374 = pneg %p135
        %p375 = pneg %p132
        %p376 = pneg %p156
        %p377 = pneg %p153
        %p378 = pneg %p177
        %p379 = pneg %p174
        %p380 = pneg %p198
        %p381 = pneg %p195
        %p382 = pneg %p219
        %p383 = pneg %p216
        %p384 = pneg %p240
        %p385 = pneg %p237
        %p386 = pneg %p261
        %p387 = pneg %p258
        %p388 = pneg %p287
        %p389 = pneg %p284
        %s390 = sand.u32 %s274, 1
        %s391 = scalar_lea.sflag [#allocation3], %s390
        %s392 = sand.u32 %s274, 1
        %s393 = smul.addr %s392, 16
        %s394 = scalar_lea.vmem [#allocation2], %s393
        %p395 = scmp.lt.s32.totalorder %s25, 1
        %s396 = scalar_select %p395, %s25, 1
        %s397 = smul.addr %s396, 2
        %s398 = smul.addr %s397, 4
        %s399 = scalar_lea.vmem %s0, %s398
        %p400 = scmp.lt.s32.totalorder %s25, 1
        %s401 = scalar_select %p400, %s25, 1
        %s402 = smul.addr %s401, 2
        %s403 = smul.addr %s402, 8
        %s404 = scalar_lea.vmem %s1, %s403
        %v406 = vld [vmem:[%s399] sm:$0xf]
        %v407 = vld [vmem:[%s399 + $0x4] sm:$0xf]
        %v408 = vld [vmem:[%s2] sm:$0xf]
        %v409 = vld [vmem:[%s2 + $0x4] sm:$0xf]
        %v410 = vld [vmem:[%s2 + $0x8] sm:$0xf]
        %v411 = vld [vmem:[%s2 + $0xc] sm:$0xf]
        %v414 = vunpack.c.l.b16 %v406
        %v415 = vunpack.c.l.b16 %v407
        %v416 = vpack.c.b16 %v415, %v414
        %v421 = vunpack.c.l.b16 %v408
        %v422 = vunpack.c.l.b16 %v409
        %v423 = vunpack.c.l.b16 %v410
        %v424 = vunpack.c.l.b16 %v411
        %v425 = vpack.c.b16 %v422, %v421
        %v426 = vpack.c.b16 %v424, %v423
        %vm429 = vcmask 261120
        %v431 = vsel %vm429, %v416, 0
        %433 = vmatprep.subr.bf16.mxu0 0
        %434 = vmatpush1.bf16.msra.mxu0 %v425
        %435 = vmatprep.subr.bf16.mxu0 0
        %436 = vmatpush1.bf16.msra.mxu0 %v426
        %437 = vmatprep.subr.bf16.mxu0 0
        %438 = vmatpush1.bf16.msra.mxu0 0
        %439 = vmatprep.subr.bf16.mxu0 0
        %440 = vmatpush1.bf16.msra.mxu0 0
        %441 = vmatprep.subr.bf16.mxu0 0
        %442 = vmatpush1.bf16.msra.mxu0 0
        %443 = vmatprep.subr.bf16.mxu0 0
        %444 = vmatpush1.bf16.msra.mxu0 0
        %445 = vmatprep.subr.bf16.mxu0 0
        %446 = vmatpush1.bf16.msra.mxu0 0
        %447 = vmatprep.subr.bf16.mxu0 0
        %448 = vmatpush1.bf16.msra.mxu0 0
        %449 = vmatprep.subr.bf16.mxu0 0
        %450 = vmatpush1.bf16.msra.mxu0 0
        %451 = vmatprep.subr.bf16.mxu0 0
        %452 = vmatpush1.bf16.msra.mxu0 0
        %453 = vmatprep.subr.bf16.mxu0 0
        %454 = vmatpush1.bf16.msra.mxu0 0
        %455 = vmatprep.subr.bf16.mxu0 0
        %456 = vmatpush1.bf16.msra.mxu0 0
        %457 = vmatprep.subr.bf16.mxu0 0
        %458 = vmatpush1.bf16.msra.mxu0 0
        %459 = vmatprep.subr.bf16.mxu0 0
        %460 = vmatpush1.bf16.msra.mxu0 0
        %461 = vmatprep.subr.bf16.mxu0 0
        %462 = vmatpush1.bf16.msra.mxu0 0
        %463 = vmatprep.subr.bf16.mxu0 0
        %464 = vmatpush1.bf16.msra.mxu0 0
        %465 = vmatprep.mubr.bf16.mxu0 0
        %466 = vmatmul.mubr.bf16.gmra.mrb[0].mxu0 %v431
        %v467 = vpop.f32.mrb[0].mxu0
        %v468 = vadd.f32 0.0, %v467
        %v469 = vpop.f32.mrb[0].mxu0
        %v470 = vpop.f32.mrb[0].mxu0
        %v471 = vadd.f32 0.0, %v470
        %v472 = vpop.f32.mrb[0].mxu0
        %473 = vdwg.mxu0
        %v474 = vld [vmem:[%s3] sm:$0x1]
        %v476 = vlaneseq
        %v477 = vshrl.u32 %v476, 7
        %v478 = vsub.s32 0, %v477
        %v479 = vrot.slane %v474, %v478
        %v481 = vmul.f32 %v468, %v479
        %v482 = vmul.f32 %v471, %v479
        %v483 = vld [vmem:[%s4] sm:$0x1]
        %v485 = vlaneseq
        %v486 = vshrl.u32 %v485, 7
        %v487 = vsub.s32 0, %v486
        %v488 = vrot.slane %v483, %v487
        %v490 = vadd.f32 %v481, %v488
        %v491 = vadd.f32 %v482, %v488
        %v492 = vxor.u32 %v490, 2147483648
        %v493 = vxor.u32 %v491, 2147483648
        %v494 = vmul.f32 %v492, 1.442695
        %v495 = vpow.pop %v494
        %v496 = vmul.f32 %v493, 1.442695
        %v497 = vpow.pop %v496
        %v498 = vadd.f32 %v495, 1.0
        %v499 = vadd.f32 %v497, 1.0
        %v500 = vrcp.pop %v498
        %v501 = vmul.f32 1.0, %v500
        %v502 = vrcp.pop %v499
        %v503 = vmul.f32 1.0, %v502
        %v504 = vmul.f32 %v490, %v501
        %v505 = vmul.f32 %v491, %v503
        %v506 = vld [vmem:[%s404] sm:$0xff]
        %v507 = vld [vmem:[%s404 + $0x8] sm:$0xff]
        %v508 = vlaneseq
        %v509 = vshrl.u32 %v508, 7
        %v510 = vadd.s32 %v509, 8
        %vm511 = vcmp.eq.s32.totalorder %v509, 0
        %vm512 = vcmp.eq.s32.totalorder %v510, 0
        %vm513 = vcmp.eq.s32.totalorder %v509, 15
        %vm514 = vcmp.eq.s32.totalorder %v510, 15
        %v515 = vrot.slane %v506, 7
        %v516 = vrot.slane %v507, 7
        %vm517 = vcmp.lt.s32.totalorder %v509, 1
        %v518 = vsel %vm517, %v515, %v516
        %v519 = vsel %vm517, %v516, %v515
        %v520 = vsel %vm511, 0.0, %v519
        %v521 = vsel %vm512, 0.0, %v518
        %v522 = vrot.slane %v506, 1
        %v523 = vrot.slane %v507, 1
        %vm524 = vcmp.lt.s32.totalorder %v509, 7
        %v525 = vsel %vm524, %v522, %v523
        %v526 = vsel %vm524, %v523, %v522
        %v527 = vsel %vm513, 0.0, %v525
        %v528 = vsel %vm514, 0.0, %v526
        %v529 = vrot.slane %v504, 7
        %v530 = vrot.slane %v505, 7
        %v531 = vsel %vm517, %v529, %v530
        %v532 = vsel %vm517, %v530, %v529
        %v533 = vsel %vm511, 0.0, %v532
        %v534 = vsel %vm512, 0.0, %v531
        %v535 = vrot.slane %v504, 1
        %v536 = vrot.slane %v505, 1
        %v537 = vsel %vm524, %v535, %v536
        %v538 = vsel %vm524, %v536, %v535
        %v539 = vsel %vm513, 0.0, %v537
        %v540 = vsel %vm514, 0.0, %v538
        %543 = vrot.lane.b32.xlu0 %v506, 16
        %v544 = vpop.permute.xlu0 %543
        %545 = vrot.lane.b32.xlu0 %v507, 16
        %v546 = vpop.permute.xlu0 %545
        %551 = vrot.lane.b32.xlu0 %v527, 32
        %v552 = vpop.permute.xlu0 %551
        %553 = vrot.lane.b32.xlu0 %v528, 32
        %v554 = vpop.permute.xlu0 %553
        %559 = vrot.lane.b32.xlu0 %v533, 48
        %v560 = vpop.permute.xlu0 %559
        %561 = vrot.lane.b32.xlu0 %v534, 48
        %v562 = vpop.permute.xlu0 %561
        %567 = vrot.lane.b32.xlu0 %v504, 64
        %v568 = vpop.permute.xlu0 %567
        %569 = vrot.lane.b32.xlu0 %v505, 64
        %v570 = vpop.permute.xlu0 %569
        %575 = vrot.lane.b32.xlu0 %v539, 80
        %v576 = vpop.permute.xlu0 %575
        %577 = vrot.lane.b32.xlu0 %v540, 80
        %v578 = vpop.permute.xlu0 %577
        %vm581 = vcmask 130048
        %v582 = vsel %vm581, %v520, %v544
        %v583 = vsel %vm581, %v521, %v546
        %v584 = vsel %vm429, %v582, %v552
        %v585 = vsel %vm429, %v583, %v554
        %vm586 = vcmask 392192
        %v587 = vsel %vm586, %v584, %v560
        %v588 = vsel %vm586, %v585, %v562
        %vm589 = vcmask 523264
        %v590 = vsel %vm589, %v587, %v568
        %v591 = vsel %vm589, %v588, %v570
        %vm592 = vcmask 654336
        %v593 = vsel %vm592, %v590, %v576
        %v594 = vsel %vm592, %v591, %v578
        %v595 = vpack.c.bf16 %v594, %v593
        %v596 = vld [vmem:[%s5] sm:$0xf]
        %v597 = vld [vmem:[%s5 + $0x4] sm:$0xf]
        %v598 = vld [vmem:[%s5 + $0x8] sm:$0xf]
        %v599 = vld [vmem:[%s5 + $0xc] sm:$0xf]
        %v600 = vld [vmem:[%s5 + $0x10] sm:$0xf]
        %v601 = vld [vmem:[%s5 + $0x14] sm:$0xf]
        %v602 = vld [vmem:[%s5 + $0x18] sm:$0xf]
        %v603 = vld [vmem:[%s5 + $0x1c] sm:$0xf]
        %v604 = vld [vmem:[%s5 + $0x20] sm:$0xf]
        %v605 = vld [vmem:[%s5 + $0x24] sm:$0xf]
        %v606 = vld [vmem:[%s5 + $0x28] sm:$0xf]
        %v607 = vld [vmem:[%s5 + $0x2c] sm:$0xf]
        %v620 = vunpack.c.l.b16 %v596
        %v621 = vunpack.c.l.b16 %v597
        %v622 = vunpack.c.l.b16 %v598
        %v623 = vunpack.c.l.b16 %v599
        %v624 = vunpack.c.l.b16 %v600
        %v625 = vunpack.c.l.b16 %v601
        %v626 = vunpack.c.l.b16 %v602
        %v627 = vunpack.c.l.b16 %v603
        %v628 = vunpack.c.l.b16 %v604
        %v629 = vunpack.c.l.b16 %v605
        %v630 = vunpack.c.l.b16 %v606
        %v631 = vunpack.c.l.b16 %v607
        %v632 = vpack.c.b16 %v621, %v620
        %v633 = vpack.c.b16 %v623, %v622
        %v634 = vpack.c.b16 %v625, %v624
        %v635 = vpack.c.b16 %v627, %v626
        %v636 = vpack.c.b16 %v629, %v628
        %v637 = vpack.c.b16 %v631, %v630
        %vm644 = vcmask 785408
        %v646 = vsel %vm644, %v595, 0
        %648 = vmatprep.subr.bf16.mxu0 0
        %649 = vmatpush1.bf16.msra.mxu0 %v632
        %650 = vmatprep.subr.bf16.mxu0 0
        %651 = vmatpush1.bf16.msra.mxu0 %v633
        %652 = vmatprep.subr.bf16.mxu0 0
        %653 = vmatpush1.bf16.msra.mxu0 %v634
        %654 = vmatprep.subr.bf16.mxu0 0
        %655 = vmatpush1.bf16.msra.mxu0 %v635
        %656 = vmatprep.subr.bf16.mxu0 0
        %657 = vmatpush1.bf16.msra.mxu0 %v636
        %658 = vmatprep.subr.bf16.mxu0 0
        %659 = vmatpush1.bf16.msra.mxu0 %v637
        %660 = vmatprep.subr.bf16.mxu0 0
        %661 = vmatpush1.bf16.msra.mxu0 0
        %662 = vmatprep.subr.bf16.mxu0 0
        %663 = vmatpush1.bf16.msra.mxu0 0
        %664 = vmatprep.subr.bf16.mxu0 0
        %665 = vmatpush1.bf16.msra.mxu0 0
        %666 = vmatprep.subr.bf16.mxu0 0
        %667 = vmatpush1.bf16.msra.mxu0 0
        %668 = vmatprep.subr.bf16.mxu0 0
        %669 = vmatpush1.bf16.msra.mxu0 0
        %670 = vmatprep.subr.bf16.mxu0 0
        %671 = vmatpush1.bf16.msra.mxu0 0
        %672 = vmatprep.subr.bf16.mxu0 0
        %673 = vmatpush1.bf16.msra.mxu0 0
        %674 = vmatprep.subr.bf16.mxu0 0
        %675 = vmatpush1.bf16.msra.mxu0 0
        %676 = vmatprep.subr.bf16.mxu0 0
        %677 = vmatpush1.bf16.msra.mxu0 0
        %678 = vmatprep.subr.bf16.mxu0 0
        %679 = vmatpush1.bf16.msra.mxu0 0
        %680 = vmatprep.mubr.bf16.mxu0 0
        %681 = vmatmul.mubr.bf16.gmra.mrb[0].mxu0 %v646
        %v682 = vpop.f32.mrb[0].mxu0
        %v683 = vadd.f32 0.0, %v682
        %v684 = vpop.f32.mrb[0].mxu0
        %v685 = vpop.f32.mrb[0].mxu0
        %v686 = vadd.f32 0.0, %v685
        %v687 = vpop.f32.mrb[0].mxu0
        %688 = vdwg.mxu0
        %v689 = vld [vmem:[%s6] sm:$0x1]
        %v691 = vlaneseq
        %v692 = vshrl.u32 %v691, 7
        %v693 = vsub.s32 0, %v692
        %v694 = vrot.slane %v689, %v693
        %v696 = vmul.f32 %v683, %v694
        %v697 = vmul.f32 %v686, %v694
        %v698 = vld [vmem:[%s7] sm:$0x1]
        %v700 = vlaneseq
        %v701 = vshrl.u32 %v700, 7
        %v702 = vsub.s32 0, %v701
        %v703 = vrot.slane %v698, %v702
        %v705 = vadd.f32 %v696, %v703
        %v706 = vadd.f32 %v697, %v703
        %v707 = vxor.u32 %v705, 2147483648
        %v708 = vxor.u32 %v706, 2147483648
        %v709 = vmul.f32 %v707, 1.442695
        %v710 = vpow.pop %v709
        %v711 = vmul.f32 %v708, 1.442695
        %v712 = vpow.pop %v711
        %v713 = vadd.f32 %v710, 1.0
        %v714 = vadd.f32 %v712, 1.0
        %v715 = vrcp.pop %v713
        %v716 = vmul.f32 1.0, %v715
        %v717 = vrcp.pop %v714
        %v718 = vmul.f32 1.0, %v717
        %v719 = vmul.f32 %v705, %v716
        %v720 = vmul.f32 %v706, %v718
        %v721 = vpack.c.bf16 %v720, %v719
        %v722 = vld [vmem:[%s8] sm:$0x1]
        %vm723 = vcmask 15360
        %v725 = vsel %vm723, %v721, 0
        %vm727 = vcmask 1040384
        %v729 = vsel %vm727, %v722, 0
        %731 = vmatprep.subr.bf16.mxu0 0
        %732 = vmatpush1.bf16.msra.mxu0 %v729
        %733 = vmatprep.subr.bf16.mxu0 0
        %734 = vmatpush1.bf16.msra.mxu0 0
        %735 = vmatprep.subr.bf16.mxu0 0
        %736 = vmatpush1.bf16.msra.mxu0 0
        %737 = vmatprep.subr.bf16.mxu0 0
        %738 = vmatpush1.bf16.msra.mxu0 0
        %739 = vmatprep.subr.bf16.mxu0 0
        %740 = vmatpush1.bf16.msra.mxu0 0
        %741 = vmatprep.subr.bf16.mxu0 0
        %742 = vmatpush1.bf16.msra.mxu0 0
        %743 = vmatprep.subr.bf16.mxu0 0
        %744 = vmatpush1.bf16.msra.mxu0 0
        %745 = vmatprep.subr.bf16.mxu0 0
        %746 = vmatpush1.bf16.msra.mxu0 0
        %747 = vmatprep.subr.bf16.mxu0 0
        %748 = vmatpush1.bf16.msra.mxu0 0
        %749 = vmatprep.subr.bf16.mxu0 0
        %750 = vmatpush1.bf16.msra.mxu0 0
        %751 = vmatprep.subr.bf16.mxu0 0
        %752 = vmatpush1.bf16.msra.mxu0 0
        %753 = vmatprep.subr.bf16.mxu0 0
        %754 = vmatpush1.bf16.msra.mxu0 0
        %755 = vmatprep.subr.bf16.mxu0 0
        %756 = vmatpush1.bf16.msra.mxu0 0
        %757 = vmatprep.subr.bf16.mxu0 0
        %758 = vmatpush1.bf16.msra.mxu0 0
        %759 = vmatprep.subr.bf16.mxu0 0
        %760 = vmatpush1.bf16.msra.mxu0 0
        %761 = vmatprep.subr.bf16.mxu0 0
        %762 = vmatpush1.bf16.msra.mxu0 0
        %763 = vmatprep.mubr.bf16.mxu0 0
        %764 = vmatmul.mubr.bf16.gmra.mrb[0].mxu0 %v725
        %v765 = vpop.f32.mrb[0].mxu0
        %v766 = vadd.f32 0.0, %v765
        %v767 = vpop.f32.mrb[0].mxu0
        %v768 = vpop.f32.mrb[0].mxu0
        %v769 = vadd.f32 0.0, %v768
        %v770 = vpop.f32.mrb[0].mxu0
        %771 = vdwg.mxu0
        %v772 = vld [vmem:[%s9] sm:$0x1]
        %v774 = vlaneseq
        %v775 = vshrl.u32 %v774, 7
        %v776 = vsub.s32 0, %v775
        %v777 = vrot.slane %v772, %v776
        %v779 = vmul.f32 %v766, %v777
        %v780 = vmul.f32 %v769, %v777
        %v781 = vld [vmem:[%s10] sm:$0x1]
        %v783 = vlaneseq
        %v784 = vshrl.u32 %v783, 7
        %v785 = vsub.s32 0, %v784
        %v786 = vrot.slane %v781, %v785
        %v788 = vadd.f32 %v779, %v786
        %v789 = vadd.f32 %v780, %v786
        %v790 = vxor.u32 %v788, 2147483648
        %v791 = vxor.u32 %v789, 2147483648
        %v792 = vmul.f32 %v790, 1.442695
        %v793 = vpow.pop %v792
        %v794 = vmul.f32 %v791, 1.442695
        %v795 = vpow.pop %v794
        %v796 = vadd.f32 %v793, 1.0
        %v797 = vadd.f32 %v795, 1.0
        %v798 = vrcp.pop %v796
        %v799 = vmul.f32 1.0, %v798
        %v800 = vrcp.pop %v797
        %v801 = vmul.f32 1.0, %v800
        %v802 = vmul.f32 %v788, %v799
        %v803 = vmul.f32 %v789, %v801
        %804 = vst.msk [vmem:[%s394] sm:$0xff] %vm429, %v802
        %805 = vst.msk [vmem:[%s394 + $0x8] sm:$0xff] %vm429, %v803
        %s806 = sand.u32 %s274, 1
        %s807 = scalar_lea.sflag [#allocation3], %s806
        %s808 = sand.u32 %s274, 1
        %s809 = smul.addr %s808, 16
        %s810 = scalar_lea.vmem [#allocation2], %s809
        // Predicated region
        $region65: #{svtr_encoder_forward.5} parent=63 // pred_check
          %p811 = pneg %p284
        $region66: #{svtr_encoder_forward.5} parent=63 // pred_check_branch
          %813 = sbr.rel (%p811) target = $region68
        $region67: #{svtr_encoder_forward.5} parent=63 // pred_region
          %s815 = ssub.s32 256, 256
          %816 = vsyncadd %s807, %s815
          %s817 = smul.addr %s25, 2
          %s818 = smul.addr %s817, 128
          %s819 = scalar_lea.hbm %s11, %s818
          %s820 = sshll.u32 %s810, 4
          %s821 = int_to_ptr.vmem [resolvable:$true] %s820
          %826 = dma.vmem_to_hbm [thread:$0]  %s821, 256, %s819, %s807, 128, 128, 8
        $region68: #{svtr_encoder_forward.5} parent=63 // pred_fallthru
          _
      $region64: #{svtr_encoder_forward.5} parent=5 // pred_fallthru
        _
      %p827 = scmp.le.s32.totalorder 2, %s20
      // Predicated region
      $region69: #{svtr_encoder_forward.5} parent=5 // pred_check
        %p828 = pneg %p827
      $region70: #{svtr_encoder_forward.5} parent=5 // pred_check_branch
        %830 = sbr.rel (%p828) target = $region72
      $region71: #{svtr_encoder_forward.5} parent=5 // pred_region
        %s831 = ssub.s32 %s20, 2
        // Predicated region
        $region73: #{svtr_encoder_forward.5} parent=71 // pred_check
          %p832 = pneg %p290
        $region74: #{svtr_encoder_forward.5} parent=71 // pred_check_branch
          %834 = sbr.rel (%p832) target = $region76
        $region75: #{svtr_encoder_forward.5} parent=71 // pred_region
          %s835 = sand.u32 %s275, 1
          %s836 = scalar_lea.sflag [#allocation3], %s835
          %s837 = sand.u32 %s275, 1
          %s838 = smul.addr %s837, 16
          %s839 = scalar_lea.vmem [#allocation2], %s838
          %840 = dma.done %s836, 256
        $region76: #{svtr_encoder_forward.5} parent=71 // pred_fallthru
          _
      $region72: #{svtr_encoder_forward.5} parent=5 // pred_fallthru
        _
    $region6: #{svtr_encoder_forward.5} parent=1 // loop_footer
      %s24 = sadd.s32 1, %s20
    $region7: #{svtr_encoder_forward.5} parent=1 // loop_footer_branch
      %19 = sbr.rel target = $region3
    $region8: #{svtr_encoder_forward.5} parent=1 // loop_exit
      _
    %841 = vsyncpa [#allocation3], 1
    %s842 = scalar_lea.sflag [#allocation3], 1
    %843 = vsyncpa %s842, 1

// kernel: svtr_encoder_forward.4
$region0: #{svtr_encoder_forward.4}
  #allocation0 [shape = 'u32[]', space=smem, size = 0x4, offset = 0x4, fixed_abs, tag = 'smem constant byte address 0x4 - core index']
  #allocation1 [shape = 'u32[144,128]{1,0:T(1,128)}', space=vmem, size = 0x12000, scoped, tag = 'internal scratch']
  #allocation2 [shape = 'f32[16,32]{1,0:T(8,128)}', space=vmem, size = 0x2000, scoped, tag = 'scratch operand']
  %s0 = inlined_call_operand.vmem [shape: bf16[2,16,32], index: 0, kind: input, shape index: {}]
  %s1 = inlined_call_operand.vmem [shape: f32[2,1,32], index: 1, kind: input, shape index: {}]
  %s2 = inlined_call_operand.vmem [shape: f32[2,1,32], index: 2, kind: input, shape index: {}]
  %s3 = inlined_call_operand.vmem [shape: bf16[2,32,96], index: 3, kind: input, shape index: {}]
  %s4 = inlined_call_operand.vmem [shape: f32[2,1,96], index: 4, kind: input, shape index: {}]
  %s5 = inlined_call_operand.vmem [shape: bf16[2,32,32], index: 5, kind: input, shape index: {}]
  %s6 = inlined_call_operand.vmem [shape: f32[2,1,32], index: 6, kind: input, shape index: {}]
  %s7 = inlined_call_operand.vmem [shape: f32[2,1,32], index: 7, kind: input, shape index: {}]
  %s8 = inlined_call_operand.vmem [shape: f32[2,1,32], index: 8, kind: input, shape index: {}]
  %s9 = inlined_call_operand.vmem [shape: bf16[2,32,64], index: 9, kind: input, shape index: {}]
  %s10 = inlined_call_operand.vmem [shape: f32[2,1,64], index: 10, kind: input, shape index: {}]
  %s11 = inlined_call_operand.vmem [shape: bf16[2,64,32], index: 11, kind: input, shape index: {}]
  %s12 = inlined_call_operand.vmem [shape: f32[2,1,32], index: 12, kind: input, shape index: {}]
  %s13 = inlined_call_operand.vmem [shape: f32[1,32], index: 13, kind: input, shape index: {}]
  %s14 = inlined_call_operand.vmem [shape: f32[1,32], index: 14, kind: input, shape index: {}]
  %s15 = inlined_call_operand.vmem [shape: bf16[2,16,32], index: 15, kind: output, shape index: {}]
  %s16 = sld [smem:[#allocation0]]
  $region101: #{svtr_encoder_forward.4} parent=0
    _
  %s18 = ssub.s32 1, %s16
  %s19 = scalar_select 0, %s18, %s16
  loop: start=0, step=1, limit=6
  $region2: #{svtr_encoder_forward.4} parent=0 // loop_pre_header
    _
  $region3: #{svtr_encoder_forward.4} parent=0 // loop_header
    %s21 = sphi 0, %s25
    %p22 = scmp.ge.s32.totalorder %s21, 6
    %s28 = sphi 0, %s40
    %s29 = sphi 0, %s36
    %s30 = sphi 0, %s28
    %s31 = sphi 0, %s29
    %s32 = sphi 0, %s30
    %s33 = sphi 0, %s31
    %s43 = sphi 0, %s45
    %s46 = sphi 0, %s43
    %s47 = sphi 0, %s46
    %s63 = sphi 0, %s47
    %s69 = sphi 0, %s71
    %s72 = sphi 0, %s69
    %s73 = sphi 0, %s72
    %s89 = sphi 0, %s73
    %s95 = sphi 0, %s97
    %s98 = sphi 0, %s95
    %s99 = sphi 0, %s98
    %s115 = sphi 0, %s99
    %s121 = sphi 0, %s123
    %s124 = sphi 0, %s121
    %s125 = sphi 0, %s124
    %s141 = sphi 0, %s125
    %s147 = sphi 0, %s149
    %s150 = sphi 0, %s147
    %s151 = sphi 0, %s150
    %s167 = sphi 0, %s151
    %s173 = sphi 0, %s175
    %s176 = sphi 0, %s173
    %s177 = sphi 0, %s176
    %s193 = sphi 0, %s177
    %s199 = sphi 0, %s201
    %s202 = sphi 0, %s199
    %s203 = sphi 0, %s202
    %s219 = sphi 0, %s203
    %s225 = sphi 0, %s227
    %s228 = sphi 0, %s225
    %s229 = sphi 0, %s228
    %s245 = sphi 0, %s229
    %s251 = sphi 0, %s253
    %s254 = sphi 0, %s251
    %s255 = sphi 0, %s254
    %s271 = sphi 0, %s255
    %s277 = sphi 0, %s279
    %s280 = sphi 0, %s277
    %s281 = sphi 0, %s280
    %s297 = sphi 0, %s281
    %s303 = sphi 0, %s305
    %s306 = sphi 0, %s303
    %s307 = sphi 0, %s306
    %s323 = sphi 0, %s307
    %s329 = sphi 0, %s331
    %s332 = sphi 0, %s329
    %s333 = sphi 0, %s332
    %s349 = sphi 0, %s333
    %s355 = sphi 0, %s357
    %s358 = sphi 0, %s355
    %s359 = sphi 0, %s358
    %s375 = sphi 0, %s359
    %s379 = sphi 0, %s379
    %s381 = sphi 0, %s379
    %s382 = sphi 0, %s381
    %s396 = sphi 0, %s382
    %s400 = sphi 0, %s400
    %s402 = sphi 0, %s400
    %s403 = sphi 0, %s402
    %s417 = sphi 0, %s403
    %s423 = sphi 0, %s425
    %s426 = sphi 0, %s423
    %s427 = sphi 0, %s426
    %s443 = sphi 0, %s427
  $region4: #{svtr_encoder_forward.4} parent=0 // loop_header_branch
    %24 = sbr.rel (%p22) target = $region8
  $region5: #{svtr_encoder_forward.4} parent=0 // loop_body
    %s26 = ssub.s32 %s21, 1
    %s27 = ssub.s32 %s21, 2
    %s34 = sadd.s32 1, %s29
    %p35 = scmp.ge.s32.totalorder %s34, 2
    %s36 = scalar_select %p35, 0, %s34
    %s37 = sadd.s32 1, %s28
    %s38 = scalar_select %p35, %s37, %s28
    %p39 = scmp.ge.s32.totalorder %s38, 2
    %s40 = scalar_select %p39, 0, %s38
    %s41 = ssub.s32 %s28, %s40
    %p42 = scmp.eq.s32.totalorder %s41, 0
    %s44 = sadd.s32 %s43, 1
    %s45 = scalar_select %p42, %s43, %s44
    %p48 = pneg %p42
    %p49 = scmp.eq.s32.totalorder %s21, 3
    %p50 = por %p48, %p49
    %p51 = scmp.ne.s32.totalorder %s43, %s46
    %p52 = scmp.eq.s32.totalorder %s21, 0
    %p53 = por %p51, %p52
    %p54 = scmp.ne.s32.totalorder %s43, %s46
    %p55 = scmp.eq.s32.totalorder %s26, 3
    %p56 = por %p54, %p55
    %p57 = scmp.ne.s32.totalorder %s46, %s47
    %p58 = scmp.eq.s32.totalorder %s26, 0
    %p59 = por %p57, %p58
    %p60 = scmp.ne.s32.totalorder %s46, %s47
    %p61 = scmp.eq.s32.totalorder %s27, 3
    %p62 = por %p60, %p61
    %p64 = scmp.ne.s32.totalorder %s47, %s63
    %p65 = scmp.eq.s32.totalorder %s27, 0
    %p66 = por %p64, %p65
    %s67 = ssub.s32 %s29, %s36
    %p68 = scmp.eq.s32.totalorder %s67, 0
    %s70 = sadd.s32 %s69, 1
    %s71 = scalar_select %p68, %s69, %s70
    %p74 = pneg %p68
    %p75 = scmp.eq.s32.totalorder %s21, 3
    %p76 = por %p74, %p75
    %p77 = scmp.ne.s32.totalorder %s69, %s72
    %p78 = scmp.eq.s32.totalorder %s21, 0
    %p79 = por %p77, %p78
    %p80 = scmp.ne.s32.totalorder %s69, %s72
    %p81 = scmp.eq.s32.totalorder %s26, 3
    %p82 = por %p80, %p81
    %p83 = scmp.ne.s32.totalorder %s72, %s73
    %p84 = scmp.eq.s32.totalorder %s26, 0
    %p85 = por %p83, %p84
    %p86 = scmp.ne.s32.totalorder %s72, %s73
    %p87 = scmp.eq.s32.totalorder %s27, 3
    %p88 = por %p86, %p87
    %p90 = scmp.ne.s32.totalorder %s73, %s89
    %p91 = scmp.eq.s32.totalorder %s27, 0
    %p92 = por %p90, %p91
    %s93 = ssub.s32 %s29, %s36
    %p94 = scmp.eq.s32.totalorder %s93, 0
    %s96 = sadd.s32 %s95, 1
    %s97 = scalar_select %p94, %s95, %s96
    %p100 = pneg %p94
    %p101 = scmp.eq.s32.totalorder %s21, 3
    %p102 = por %p100, %p101
    %p103 = scmp.ne.s32.totalorder %s95, %s98
    %p104 = scmp.eq.s32.totalorder %s21, 0
    %p105 = por %p103, %p104
    %p106 = scmp.ne.s32.totalorder %s95, %s98
    %p107 = scmp.eq.s32.totalorder %s26, 3
    %p108 = por %p106, %p107
    %p109 = scmp.ne.s32.totalorder %s98, %s99
    %p110 = scmp.eq.s32.totalorder %s26, 0
    %p111 = por %p109, %p110
    %p112 = scmp.ne.s32.totalorder %s98, %s99
    %p113 = scmp.eq.s32.totalorder %s27, 3
    %p114 = por %p112, %p113
    %p116 = scmp.ne.s32.totalorder %s99, %s115
    %p117 = scmp.eq.s32.totalorder %s27, 0
    %p118 = por %p116, %p117
    %s119 = ssub.s32 %s29, %s36
    %p120 = scmp.eq.s32.totalorder %s119, 0
    %s122 = sadd.s32 %s121, 1
    %s123 = scalar_select %p120, %s121, %s122
    %p126 = pneg %p120
    %p127 = scmp.eq.s32.totalorder %s21, 3
    %p128 = por %p126, %p127
    %p129 = scmp.ne.s32.totalorder %s121, %s124
    %p130 = scmp.eq.s32.totalorder %s21, 0
    %p131 = por %p129, %p130
    %p132 = scmp.ne.s32.totalorder %s121, %s124
    %p133 = scmp.eq.s32.totalorder %s26, 3
    %p134 = por %p132, %p133
    %p135 = scmp.ne.s32.totalorder %s124, %s125
    %p136 = scmp.eq.s32.totalorder %s26, 0
    %p137 = por %p135, %p136
    %p138 = scmp.ne.s32.totalorder %s124, %s125
    %p139 = scmp.eq.s32.totalorder %s27, 3
    %p140 = por %p138, %p139
    %p142 = scmp.ne.s32.totalorder %s125, %s141
    %p143 = scmp.eq.s32.totalorder %s27, 0
    %p144 = por %p142, %p143
    %s145 = ssub.s32 %s29, %s36
    %p146 = scmp.eq.s32.totalorder %s145, 0
    %s148 = sadd.s32 %s147, 1
    %s149 = scalar_select %p146, %s147, %s148
    %p152 = pneg %p146
    %p153 = scmp.eq.s32.totalorder %s21, 3
    %p154 = por %p152, %p153
    %p155 = scmp.ne.s32.totalorder %s147, %s150
    %p156 = scmp.eq.s32.totalorder %s21, 0
    %p157 = por %p155, %p156
    %p158 = scmp.ne.s32.totalorder %s147, %s150
    %p159 = scmp.eq.s32.totalorder %s26, 3
    %p160 = por %p158, %p159
    %p161 = scmp.ne.s32.totalorder %s150, %s151
    %p162 = scmp.eq.s32.totalorder %s26, 0
    %p163 = por %p161, %p162
    %p164 = scmp.ne.s32.totalorder %s150, %s151
    %p165 = scmp.eq.s32.totalorder %s27, 3
    %p166 = por %p164, %p165
    %p168 = scmp.ne.s32.totalorder %s151, %s167
    %p169 = scmp.eq.s32.totalorder %s27, 0
    %p170 = por %p168, %p169
    %s171 = ssub.s32 %s29, %s36
    %p172 = scmp.eq.s32.totalorder %s171, 0
    %s174 = sadd.s32 %s173, 1
    %s175 = scalar_select %p172, %s173, %s174
    %p178 = pneg %p172
    %p179 = scmp.eq.s32.totalorder %s21, 3
    %p180 = por %p178, %p179
    %p181 = scmp.ne.s32.totalorder %s173, %s176
    %p182 = scmp.eq.s32.totalorder %s21, 0
    %p183 = por %p181, %p182
    %p184 = scmp.ne.s32.totalorder %s173, %s176
    %p185 = scmp.eq.s32.totalorder %s26, 3
    %p186 = por %p184, %p185
    %p187 = scmp.ne.s32.totalorder %s176, %s177
    %p188 = scmp.eq.s32.totalorder %s26, 0
    %p189 = por %p187, %p188
    %p190 = scmp.ne.s32.totalorder %s176, %s177
    %p191 = scmp.eq.s32.totalorder %s27, 3
    %p192 = por %p190, %p191
    %p194 = scmp.ne.s32.totalorder %s177, %s193
    %p195 = scmp.eq.s32.totalorder %s27, 0
    %p196 = por %p194, %p195
    %s197 = ssub.s32 %s29, %s36
    %p198 = scmp.eq.s32.totalorder %s197, 0
    %s200 = sadd.s32 %s199, 1
    %s201 = scalar_select %p198, %s199, %s200
    %p204 = pneg %p198
    %p205 = scmp.eq.s32.totalorder %s21, 3
    %p206 = por %p204, %p205
    %p207 = scmp.ne.s32.totalorder %s199, %s202
    %p208 = scmp.eq.s32.totalorder %s21, 0
    %p209 = por %p207, %p208
    %p210 = scmp.ne.s32.totalorder %s199, %s202
    %p211 = scmp.eq.s32.totalorder %s26, 3
    %p212 = por %p210, %p211
    %p213 = scmp.ne.s32.totalorder %s202, %s203
    %p214 = scmp.eq.s32.totalorder %s26, 0
    %p215 = por %p213, %p214
    %p216 = scmp.ne.s32.totalorder %s202, %s203
    %p217 = scmp.eq.s32.totalorder %s27, 3
    %p218 = por %p216, %p217
    %p220 = scmp.ne.s32.totalorder %s203, %s219
    %p221 = scmp.eq.s32.totalorder %s27, 0
    %p222 = por %p220, %p221
    %s223 = ssub.s32 %s29, %s36
    %p224 = scmp.eq.s32.totalorder %s223, 0
    %s226 = sadd.s32 %s225, 1
    %s227 = scalar_select %p224, %s225, %s226
    %p230 = pneg %p224
    %p231 = scmp.eq.s32.totalorder %s21, 3
    %p232 = por %p230, %p231
    %p233 = scmp.ne.s32.totalorder %s225, %s228
    %p234 = scmp.eq.s32.totalorder %s21, 0
    %p235 = por %p233, %p234
    %p236 = scmp.ne.s32.totalorder %s225, %s228
    %p237 = scmp.eq.s32.totalorder %s26, 3
    %p238 = por %p236, %p237
    %p239 = scmp.ne.s32.totalorder %s228, %s229
    %p240 = scmp.eq.s32.totalorder %s26, 0
    %p241 = por %p239, %p240
    %p242 = scmp.ne.s32.totalorder %s228, %s229
    %p243 = scmp.eq.s32.totalorder %s27, 3
    %p244 = por %p242, %p243
    %p246 = scmp.ne.s32.totalorder %s229, %s245
    %p247 = scmp.eq.s32.totalorder %s27, 0
    %p248 = por %p246, %p247
    %s249 = ssub.s32 %s29, %s36
    %p250 = scmp.eq.s32.totalorder %s249, 0
    %s252 = sadd.s32 %s251, 1
    %s253 = scalar_select %p250, %s251, %s252
    %p256 = pneg %p250
    %p257 = scmp.eq.s32.totalorder %s21, 3
    %p258 = por %p256, %p257
    %p259 = scmp.ne.s32.totalorder %s251, %s254
    %p260 = scmp.eq.s32.totalorder %s21, 0
    %p261 = por %p259, %p260
    %p262 = scmp.ne.s32.totalorder %s251, %s254
    %p263 = scmp.eq.s32.totalorder %s26, 3
    %p264 = por %p262, %p263
    %p265 = scmp.ne.s32.totalorder %s254, %s255
    %p266 = scmp.eq.s32.totalorder %s26, 0
    %p267 = por %p265, %p266
    %p268 = scmp.ne.s32.totalorder %s254, %s255
    %p269 = scmp.eq.s32.totalorder %s27, 3
    %p270 = por %p268, %p269
    %p272 = scmp.ne.s32.totalorder %s255, %s271
    %p273 = scmp.eq.s32.totalorder %s27, 0
    %p274 = por %p272, %p273
    %s275 = ssub.s32 %s29, %s36
    %p276 = scmp.eq.s32.totalorder %s275, 0
    %s278 = sadd.s32 %s277, 1
    %s279 = scalar_select %p276, %s277, %s278
    %p282 = pneg %p276
    %p283 = scmp.eq.s32.totalorder %s21, 3
    %p284 = por %p282, %p283
    %p285 = scmp.ne.s32.totalorder %s277, %s280
    %p286 = scmp.eq.s32.totalorder %s21, 0
    %p287 = por %p285, %p286
    %p288 = scmp.ne.s32.totalorder %s277, %s280
    %p289 = scmp.eq.s32.totalorder %s26, 3
    %p290 = por %p288, %p289
    %p291 = scmp.ne.s32.totalorder %s280, %s281
    %p292 = scmp.eq.s32.totalorder %s26, 0
    %p293 = por %p291, %p292
    %p294 = scmp.ne.s32.totalorder %s280, %s281
    %p295 = scmp.eq.s32.totalorder %s27, 3
    %p296 = por %p294, %p295
    %p298 = scmp.ne.s32.totalorder %s281, %s297
    %p299 = scmp.eq.s32.totalorder %s27, 0
    %p300 = por %p298, %p299
    %s301 = ssub.s32 %s29, %s36
    %p302 = scmp.eq.s32.totalorder %s301, 0
    %s304 = sadd.s32 %s303, 1
    %s305 = scalar_select %p302, %s303, %s304
    %p308 = pneg %p302
    %p309 = scmp.eq.s32.totalorder %s21, 3
    %p310 = por %p308, %p309
    %p311 = scmp.ne.s32.totalorder %s303, %s306
    %p312 = scmp.eq.s32.totalorder %s21, 0
    %p313 = por %p311, %p312
    %p314 = scmp.ne.s32.totalorder %s303, %s306
    %p315 = scmp.eq.s32.totalorder %s26, 3
    %p316 = por %p314, %p315
    %p317 = scmp.ne.s32.totalorder %s306, %s307
    %p318 = scmp.eq.s32.totalorder %s26, 0
    %p319 = por %p317, %p318
    %p320 = scmp.ne.s32.totalorder %s306, %s307
    %p321 = scmp.eq.s32.totalorder %s27, 3
    %p322 = por %p320, %p321
    %p324 = scmp.ne.s32.totalorder %s307, %s323
    %p325 = scmp.eq.s32.totalorder %s27, 0
    %p326 = por %p324, %p325
    %s327 = ssub.s32 %s29, %s36
    %p328 = scmp.eq.s32.totalorder %s327, 0
    %s330 = sadd.s32 %s329, 1
    %s331 = scalar_select %p328, %s329, %s330
    %p334 = pneg %p328
    %p335 = scmp.eq.s32.totalorder %s21, 3
    %p336 = por %p334, %p335
    %p337 = scmp.ne.s32.totalorder %s329, %s332
    %p338 = scmp.eq.s32.totalorder %s21, 0
    %p339 = por %p337, %p338
    %p340 = scmp.ne.s32.totalorder %s329, %s332
    %p341 = scmp.eq.s32.totalorder %s26, 3
    %p342 = por %p340, %p341
    %p343 = scmp.ne.s32.totalorder %s332, %s333
    %p344 = scmp.eq.s32.totalorder %s26, 0
    %p345 = por %p343, %p344
    %p346 = scmp.ne.s32.totalorder %s332, %s333
    %p347 = scmp.eq.s32.totalorder %s27, 3
    %p348 = por %p346, %p347
    %p350 = scmp.ne.s32.totalorder %s333, %s349
    %p351 = scmp.eq.s32.totalorder %s27, 0
    %p352 = por %p350, %p351
    %s353 = ssub.s32 %s29, %s36
    %p354 = scmp.eq.s32.totalorder %s353, 0
    %s356 = sadd.s32 %s355, 1
    %s357 = scalar_select %p354, %s355, %s356
    %p360 = pneg %p354
    %p361 = scmp.eq.s32.totalorder %s21, 3
    %p362 = por %p360, %p361
    %p363 = scmp.ne.s32.totalorder %s355, %s358
    %p364 = scmp.eq.s32.totalorder %s21, 0
    %p365 = por %p363, %p364
    %p366 = scmp.ne.s32.totalorder %s355, %s358
    %p367 = scmp.eq.s32.totalorder %s26, 3
    %p368 = por %p366, %p367
    %p369 = scmp.ne.s32.totalorder %s358, %s359
    %p370 = scmp.eq.s32.totalorder %s26, 0
    %p371 = por %p369, %p370
    %p372 = scmp.ne.s32.totalorder %s358, %s359
    %p373 = scmp.eq.s32.totalorder %s27, 3
    %p374 = por %p372, %p373
    %p376 = scmp.ne.s32.totalorder %s359, %s375
    %p377 = scmp.eq.s32.totalorder %s27, 0
    %p378 = por %p376, %p377
    %s380 = sadd.s32 %s379, 1
    %p383 = scmp.eq.s32.totalorder %s21, 3
    %p384 = scmp.ne.s32.totalorder %s379, %s381
    %p385 = scmp.eq.s32.totalorder %s21, 0
    %p386 = por %p384, %p385
    %p387 = scmp.ne.s32.totalorder %s379, %s381
    %p388 = scmp.eq.s32.totalorder %s26, 3
    %p389 = por %p387, %p388
    %p390 = scmp.ne.s32.totalorder %s381, %s382
    %p391 = scmp.eq.s32.totalorder %s26, 0
    %p392 = por %p390, %p391
    %p393 = scmp.ne.s32.totalorder %s381, %s382
    %p394 = scmp.eq.s32.totalorder %s27, 3
    %p395 = por %p393, %p394
    %p397 = scmp.ne.s32.totalorder %s382, %s396
    %p398 = scmp.eq.s32.totalorder %s27, 0
    %p399 = por %p397, %p398
    %s401 = sadd.s32 %s400, 1
    %p404 = scmp.eq.s32.totalorder %s21, 3
    %p405 = scmp.ne.s32.totalorder %s400, %s402
    %p406 = scmp.eq.s32.totalorder %s21, 0
    %p407 = por %p405, %p406
    %p408 = scmp.ne.s32.totalorder %s400, %s402
    %p409 = scmp.eq.s32.totalorder %s26, 3
    %p410 = por %p408, %p409
    %p411 = scmp.ne.s32.totalorder %s402, %s403
    %p412 = scmp.eq.s32.totalorder %s26, 0
    %p413 = por %p411, %p412
    %p414 = scmp.ne.s32.totalorder %s402, %s403
    %p415 = scmp.eq.s32.totalorder %s27, 3
    %p416 = por %p414, %p415
    %p418 = scmp.ne.s32.totalorder %s403, %s417
    %p419 = scmp.eq.s32.totalorder %s27, 0
    %p420 = por %p418, %p419
    %s421 = ssub.s32 %s28, %s40
    %p422 = scmp.eq.s32.totalorder %s421, 0
    %s424 = sadd.s32 %s423, 1
    %s425 = scalar_select %p422, %s423, %s424
    %p428 = pneg %p422
    %p429 = scmp.eq.s32.totalorder %s21, 3
    %p430 = por %p428, %p429
    %p431 = scmp.ne.s32.totalorder %s423, %s426
    %p432 = scmp.eq.s32.totalorder %s21, 0
    %p433 = por %p431, %p432
    %p434 = scmp.ne.s32.totalorder %s423, %s426
    %p435 = scmp.eq.s32.totalorder %s26, 3
    %p436 = por %p434, %p435
    %p437 = scmp.ne.s32.totalorder %s426, %s427
    %p438 = scmp.eq.s32.totalorder %s26, 0
    %p439 = por %p437, %p438
    %p440 = scmp.ne.s32.totalorder %s426, %s427
    %p441 = scmp.eq.s32.totalorder %s27, 3
    %p442 = por %p440, %p441
    %p444 = scmp.ne.s32.totalorder %s427, %s443
    %p445 = scmp.eq.s32.totalorder %s27, 0
    %p446 = por %p444, %p445
    %p447 = scmp.le.s32.totalorder 1, %s21
    %p448 = scmp.lt.s32.totalorder %s21, 5
    %p449 = pnand %p447, %p448
    %p450 = pneg %p449
    // Predicated region
    $region9: #{svtr_encoder_forward.4} parent=5 // pred_check
      _
    $region10: #{svtr_encoder_forward.4} parent=5 // pred_check_branch
      %452 = sbr.rel (%p449) target = $region12
    $region11: #{svtr_encoder_forward.4} parent=5 // pred_region
      %s453 = ssub.s32 %s21, 1
      // Predicated region
      $region13: #{svtr_encoder_forward.4} parent=11 // pred_check
        %p454 = pneg %p392
      $region14: #{svtr_encoder_forward.4} parent=11 // pred_check_branch
        %456 = sbr.rel (%p454) target = $region16
      $region15: #{svtr_encoder_forward.4} parent=11 // pred_region
        _
      $region16: #{svtr_encoder_forward.4} parent=11 // pred_fallthru
        _
      // Predicated region
      $region17: #{svtr_encoder_forward.4} parent=11 // pred_check
        %p457 = pneg %p413
      $region18: #{svtr_encoder_forward.4} parent=11 // pred_check_branch
        %459 = sbr.rel (%p457) target = $region20
      $region19: #{svtr_encoder_forward.4} parent=11 // pred_region
        _
      $region20: #{svtr_encoder_forward.4} parent=11 // pred_fallthru
        _
    $region12: #{svtr_encoder_forward.4} parent=5 // pred_fallthru
      _
    %p460 = scmp.lt.s32.totalorder %s21, 4
    // Predicated region
    $region21: #{svtr_encoder_forward.4} parent=5 // pred_check
      %p461 = pneg %p460
    $region22: #{svtr_encoder_forward.4} parent=5 // pred_check_branch
      %463 = sbr.rel (%p461) target = $region24
    $region23: #{svtr_encoder_forward.4} parent=5 // pred_region
      // Predicated region
      $region25: #{svtr_encoder_forward.4} parent=23 // pred_check
        %p464 = pneg %p53
      $region26: #{svtr_encoder_forward.4} parent=23 // pred_check_branch
        %466 = sbr.rel (%p464) target = $region28
      $region27: #{svtr_encoder_forward.4} parent=23 // pred_region
        %p467 = scmp.lt.s32.totalorder %s28, 1
        %s468 = scalar_select %p467, %s28, 1
        %s469 = smul.addr %s468, 2
        %s470 = smul.addr %s469, 4
        %s471 = scalar_lea.vmem %s0, %s470
      $region28: #{svtr_encoder_forward.4} parent=23 // pred_fallthru
        _
      // Predicated region
      $region29: #{svtr_encoder_forward.4} parent=23 // pred_check
        %p472 = pneg %p79
      $region30: #{svtr_encoder_forward.4} parent=23 // pred_check_branch
        %474 = sbr.rel (%p472) target = $region32
      $region31: #{svtr_encoder_forward.4} parent=23 // pred_region
        %p475 = scmp.lt.s32.totalorder %s29, 1
        %s476 = scalar_select %p475, %s29, 1
        %s477 = scalar_lea.vmem %s1, %s476
      $region32: #{svtr_encoder_forward.4} parent=23 // pred_fallthru
        _
      // Predicated region
      $region33: #{svtr_encoder_forward.4} parent=23 // pred_check
        %p478 = pneg %p105
      $region34: #{svtr_encoder_forward.4} parent=23 // pred_check_branch
        %480 = sbr.rel (%p478) target = $region36
      $region35: #{svtr_encoder_forward.4} parent=23 // pred_region
        %p481 = scmp.lt.s32.totalorder %s29, 1
        %s482 = scalar_select %p481, %s29, 1
        %s483 = scalar_lea.vmem %s2, %s482
      $region36: #{svtr_encoder_forward.4} parent=23 // pred_fallthru
        _
      // Predicated region
      $region37: #{svtr_encoder_forward.4} parent=23 // pred_check
        %p484 = pneg %p131
      $region38: #{svtr_encoder_forward.4} parent=23 // pred_check_branch
        %486 = sbr.rel (%p484) target = $region40
      $region39: #{svtr_encoder_forward.4} parent=23 // pred_region
        %p487 = scmp.lt.s32.totalorder %s29, 1
        %s488 = scalar_select %p487, %s29, 1
        %s489 = smul.addr %s488, 4
        %s490 = smul.addr %s489, 4
        %s491 = scalar_lea.vmem %s3, %s490
      $region40: #{svtr_encoder_forward.4} parent=23 // pred_fallthru
        _
      // Predicated region
      $region41: #{svtr_encoder_forward.4} parent=23 // pred_check
        %p492 = pneg %p157
      $region42: #{svtr_encoder_forward.4} parent=23 // pred_check_branch
        %494 = sbr.rel (%p492) target = $region44
      $region43: #{svtr_encoder_forward.4} parent=23 // pred_region
        %p495 = scmp.lt.s32.totalorder %s29, 1
        %s496 = scalar_select %p495, %s29, 1
        %s497 = scalar_lea.vmem %s4, %s496
      $region44: #{svtr_encoder_forward.4} parent=23 // pred_fallthru
        _
      // Predicated region
      $region45: #{svtr_encoder_forward.4} parent=23 // pred_check
        %p498 = pneg %p183
      $region46: #{svtr_encoder_forward.4} parent=23 // pred_check_branch
        %500 = sbr.rel (%p498) target = $region48
      $region47: #{svtr_encoder_forward.4} parent=23 // pred_region
        %p501 = scmp.lt.s32.totalorder %s29, 1
        %s502 = scalar_select %p501, %s29, 1
        %s503 = smul.addr %s502, 4
        %s504 = smul.addr %s503, 4
        %s505 = scalar_lea.vmem %s5, %s504
      $region48: #{svtr_encoder_forward.4} parent=23 // pred_fallthru
        _
      // Predicated region
      $region49: #{svtr_encoder_forward.4} parent=23 // pred_check
        %p506 = pneg %p209
      $region50: #{svtr_encoder_forward.4} parent=23 // pred_check_branch
        %508 = sbr.rel (%p506) target = $region52
      $region51: #{svtr_encoder_forward.4} parent=23 // pred_region
        %p509 = scmp.lt.s32.totalorder %s29, 1
        %s510 = scalar_select %p509, %s29, 1
        %s511 = scalar_lea.vmem %s6, %s510
      $region52: #{svtr_encoder_forward.4} parent=23 // pred_fallthru
        _
      // Predicated region
      $region53: #{svtr_encoder_forward.4} parent=23 // pred_check
        %p512 = pneg %p235
      $region54: #{svtr_encoder_forward.4} parent=23 // pred_check_branch
        %514 = sbr.rel (%p512) target = $region56
      $region55: #{svtr_encoder_forward.4} parent=23 // pred_region
        %p515 = scmp.lt.s32.totalorder %s29, 1
        %s516 = scalar_select %p515, %s29, 1
        %s517 = scalar_lea.vmem %s7, %s516
      $region56: #{svtr_encoder_forward.4} parent=23 // pred_fallthru
        _
      // Predicated region
      $region57: #{svtr_encoder_forward.4} parent=23 // pred_check
        %p518 = pneg %p261
      $region58: #{svtr_encoder_forward.4} parent=23 // pred_check_branch
        %520 = sbr.rel (%p518) target = $region60
      $region59: #{svtr_encoder_forward.4} parent=23 // pred_region
        %p521 = scmp.lt.s32.totalorder %s29, 1
        %s522 = scalar_select %p521, %s29, 1
        %s523 = scalar_lea.vmem %s8, %s522
      $region60: #{svtr_encoder_forward.4} parent=23 // pred_fallthru
        _
      // Predicated region
      $region61: #{svtr_encoder_forward.4} parent=23 // pred_check
        %p524 = pneg %p287
      $region62: #{svtr_encoder_forward.4} parent=23 // pred_check_branch
        %526 = sbr.rel (%p524) target = $region64
      $region63: #{svtr_encoder_forward.4} parent=23 // pred_region
        %p527 = scmp.lt.s32.totalorder %s29, 1
        %s528 = scalar_select %p527, %s29, 1
        %s529 = smul.addr %s528, 4
        %s530 = smul.addr %s529, 4
        %s531 = scalar_lea.vmem %s9, %s530
      $region64: #{svtr_encoder_forward.4} parent=23 // pred_fallthru
        _
      // Predicated region
      $region65: #{svtr_encoder_forward.4} parent=23 // pred_check
        %p532 = pneg %p313
      $region66: #{svtr_encoder_forward.4} parent=23 // pred_check_branch
        %534 = sbr.rel (%p532) target = $region68
      $region67: #{svtr_encoder_forward.4} parent=23 // pred_region
        %p535 = scmp.lt.s32.totalorder %s29, 1
        %s536 = scalar_select %p535, %s29, 1
        %s537 = scalar_lea.vmem %s10, %s536
      $region68: #{svtr_encoder_forward.4} parent=23 // pred_fallthru
        _
      // Predicated region
      $region69: #{svtr_encoder_forward.4} parent=23 // pred_check
        %p538 = pneg %p339
      $region70: #{svtr_encoder_forward.4} parent=23 // pred_check_branch
        %540 = sbr.rel (%p538) target = $region72
      $region71: #{svtr_encoder_forward.4} parent=23 // pred_region
        %p541 = scmp.lt.s32.totalorder %s29, 1
        %s542 = scalar_select %p541, %s29, 1
        %s543 = smul.addr %s542, 8
        %s544 = smul.addr %s543, 4
        %s545 = scalar_lea.vmem %s11, %s544
      $region72: #{svtr_encoder_forward.4} parent=23 // pred_fallthru
        _
      // Predicated region
      $region73: #{svtr_encoder_forward.4} parent=23 // pred_check
        %p546 = pneg %p365
      $region74: #{svtr_encoder_forward.4} parent=23 // pred_check_branch
        %548 = sbr.rel (%p546) target = $region76
      $region75: #{svtr_encoder_forward.4} parent=23 // pred_region
        %p549 = scmp.lt.s32.totalorder %s29, 1
        %s550 = scalar_select %p549, %s29, 1
        %s551 = scalar_lea.vmem %s12, %s550
      $region76: #{svtr_encoder_forward.4} parent=23 // pred_fallthru
        _
    $region24: #{svtr_encoder_forward.4} parent=5 // pred_fallthru
      _
    %p552 = scmp.le.s32.totalorder 1, %s21
    %p553 = scmp.lt.s32.totalorder %s21, 5
    %p554 = pnand %p552, %p553
    %p555 = pneg %p554
    // Predicated region
    $region77: #{svtr_encoder_forward.4} parent=5 // pred_check
      _
    $region78: #{svtr_encoder_forward.4} parent=5 // pred_check_branch
      %557 = sbr.rel (%p554) target = $region80
    $region79: #{svtr_encoder_forward.4} parent=5 // pred_region
      %s558 = ssub.s32 %s21, 1
      %p559 = scmp.lt.s32.totalorder %s30, 1
      %s560 = scalar_select %p559, %s30, 1
      %s561 = smul.addr %s560, 2
      %s562 = smul.addr %s561, 4
      %s563 = scalar_lea.vmem %s0, %s562
      %p564 = pneg %p59
      %p565 = pneg %p56
      %p566 = scmp.lt.s32.totalorder %s31, 1
      %s567 = scalar_select %p566, %s31, 1
      %s568 = scalar_lea.vmem %s1, %s567
      %p569 = pneg %p85
      %p570 = pneg %p82
      %p571 = scmp.lt.s32.totalorder %s31, 1
      %s572 = scalar_select %p571, %s31, 1
      %s573 = scalar_lea.vmem %s2, %s572
      %p574 = pneg %p111
      %p575 = pneg %p108
      %p576 = scmp.lt.s32.totalorder %s31, 1
      %s577 = scalar_select %p576, %s31, 1
      %s578 = smul.addr %s577, 4
      %s579 = smul.addr %s578, 4
      %s580 = scalar_lea.vmem %s3, %s579
      %p581 = pneg %p137
      %p582 = pneg %p134
      %p583 = scmp.lt.s32.totalorder %s31, 1
      %s584 = scalar_select %p583, %s31, 1
      %s585 = scalar_lea.vmem %s4, %s584
      %p586 = pneg %p163
      %p587 = pneg %p160
      %p588 = scmp.lt.s32.totalorder %s31, 1
      %s589 = scalar_select %p588, %s31, 1
      %s590 = smul.addr %s589, 4
      %s591 = smul.addr %s590, 4
      %s592 = scalar_lea.vmem %s5, %s591
      %p593 = pneg %p189
      %p594 = pneg %p186
      %p595 = scmp.lt.s32.totalorder %s31, 1
      %s596 = scalar_select %p595, %s31, 1
      %s597 = scalar_lea.vmem %s6, %s596
      %p598 = pneg %p215
      %p599 = pneg %p212
      %p600 = scmp.lt.s32.totalorder %s31, 1
      %s601 = scalar_select %p600, %s31, 1
      %s602 = scalar_lea.vmem %s7, %s601
      %p603 = pneg %p241
      %p604 = pneg %p238
      %p605 = scmp.lt.s32.totalorder %s31, 1
      %s606 = scalar_select %p605, %s31, 1
      %s607 = scalar_lea.vmem %s8, %s606
      %p608 = pneg %p267
      %p609 = pneg %p264
      %p610 = scmp.lt.s32.totalorder %s31, 1
      %s611 = scalar_select %p610, %s31, 1
      %s612 = smul.addr %s611, 4
      %s613 = smul.addr %s612, 4
      %s614 = scalar_lea.vmem %s9, %s613
      %p615 = pneg %p293
      %p616 = pneg %p290
      %p617 = scmp.lt.s32.totalorder %s31, 1
      %s618 = scalar_select %p617, %s31, 1
      %s619 = scalar_lea.vmem %s10, %s618
      %p620 = pneg %p319
      %p621 = pneg %p316
      %p622 = scmp.lt.s32.totalorder %s31, 1
      %s623 = scalar_select %p622, %s31, 1
      %s624 = smul.addr %s623, 8
      %s625 = smul.addr %s624, 4
      %s626 = scalar_lea.vmem %s11, %s625
      %p627 = pneg %p345
      %p628 = pneg %p342
      %p629 = scmp.lt.s32.totalorder %s31, 1
      %s630 = scalar_select %p629, %s31, 1
      %s631 = scalar_lea.vmem %s12, %s630
      %p632 = pneg %p371
      %p633 = pneg %p368
      %p634 = pneg %p392
      %p635 = pneg %p389
      %p636 = pneg %p413
      %p637 = pneg %p410
      %p638 = pneg %p439
      %p639 = pneg %p436
      %p640 = scmp.lt.s32.totalorder %s30, 1
      %s641 = scalar_select %p640, %s30, 1
      %s642 = smul.addr %s641, 2
      %s643 = smul.addr %s642, 4
      %s644 = scalar_lea.vmem %s15, %s643
      %p645 = scmp.lt.s32.totalorder %s30, 1
      %s646 = scalar_select %p645, %s30, 1
      %s647 = smul.addr %s646, 2
      %s648 = smul.addr %s647, 4
      %s649 = scalar_lea.vmem %s0, %s648
      %p650 = scmp.lt.s32.totalorder %s31, 1
      %s651 = scalar_select %p650, %s31, 1
      %s652 = scalar_lea.vmem %s1, %s651
      %p653 = scmp.lt.s32.totalorder %s31, 1
      %s654 = scalar_select %p653, %s31, 1
      %s655 = scalar_lea.vmem %s2, %s654
      %p656 = scmp.lt.s32.totalorder %s31, 1
      %s657 = scalar_select %p656, %s31, 1
      %s658 = smul.addr %s657, 4
      %s659 = smul.addr %s658, 4
      %s660 = scalar_lea.vmem %s3, %s659
      %p661 = scmp.lt.s32.totalorder %s31, 1
      %s662 = scalar_select %p661, %s31, 1
      %s663 = scalar_lea.vmem %s4, %s662
      %p664 = scmp.lt.s32.totalorder %s31, 1
      %s665 = scalar_select %p664, %s31, 1
      %s666 = smul.addr %s665, 4
      %s667 = smul.addr %s666, 4
      %s668 = scalar_lea.vmem %s5, %s667
      %p669 = scmp.lt.s32.totalorder %s31, 1
      %s670 = scalar_select %p669, %s31, 1
      %s671 = scalar_lea.vmem %s6, %s670
      %p672 = scmp.lt.s32.totalorder %s31, 1
      %s673 = scalar_select %p672, %s31, 1
      %s674 = scalar_lea.vmem %s7, %s673
      %p675 = scmp.lt.s32.totalorder %s31, 1
      %s676 = scalar_select %p675, %s31, 1
      %s677 = scalar_lea.vmem %s8, %s676
      %p678 = scmp.lt.s32.totalorder %s31, 1
      %s679 = scalar_select %p678, %s31, 1
      %s680 = smul.addr %s679, 4
      %s681 = smul.addr %s680, 4
      %s682 = scalar_lea.vmem %s9, %s681
      %p683 = scmp.lt.s32.totalorder %s31, 1
      %s684 = scalar_select %p683, %s31, 1
      %s685 = scalar_lea.vmem %s10, %s684
      %p686 = scmp.lt.s32.totalorder %s31, 1
      %s687 = scalar_select %p686, %s31, 1
      %s688 = smul.addr %s687, 8
      %s689 = smul.addr %s688, 4
      %s690 = scalar_lea.vmem %s11, %s689
      %p691 = scmp.lt.s32.totalorder %s31, 1
      %s692 = scalar_select %p691, %s31, 1
      %s693 = scalar_lea.vmem %s12, %s692
      %p694 = scmp.lt.s32.totalorder %s30, 1
      %s695 = scalar_select %p694, %s30, 1
      %s696 = smul.addr %s695, 2
      %s697 = smul.addr %s696, 4
      %s698 = scalar_lea.vmem %s15, %s697
      %p700 = scmp.eq.s32.totalorder %s31, 0
      // Predicated region
      $region81: #{svtr_encoder_forward.4} parent=79 // pred_check
        %p701 = pneg %p700
      $region82: #{svtr_encoder_forward.4} parent=79 // pred_check_branch
        %703 = sbr.rel (%p701) target = $region84
      $region83: #{svtr_encoder_forward.4} parent=79 // pred_region
        %v704 = vld [vmem:[%s649] sm:$0xf]
        %v705 = vld [vmem:[%s649 + $0x4] sm:$0xf]
        %v706 = vunpack.c.l.bf16 %v704
        %v707 = vunpack.c.l.bf16 %v705
        %vm708 = vcmask 261120
        %709 = vst.msk [vmem:[#allocation2] sm:$0xff] %vm708, %v706
        %710 = vst.msk [vmem:[#allocation2 + $0x8] sm:$0xff] %vm708, %v707
      $region84: #{svtr_encoder_forward.4} parent=79 // pred_fallthru
        _
      %v711 = vld [vmem:[#allocation2] sm:$0xff]
      %v712 = vld [vmem:[#allocation2 + $0x8] sm:$0xff]
      %v713 = vld [vmem:[%s652] sm:$0x1]
      %v714 = vld [vmem:[%s655] sm:$0x1]
      %vm715 = vcmask 261120
      %v716 = vsel %vm715, %v711, 0.0
      %717 = vadd.xlane.f32.xlu0 %v716
      %v718 = vpop.xlane.xlu0 %717
      %v719 = vsel %vm715, %v712, 0.0
      %720 = vadd.xlane.f32.xlu0 %v719
      %v721 = vpop.xlane.xlu0 %720
      %v722 = vrcp.pop 32.0
      %v723 = vmul.f32 %v718, %v722
      %v724 = vmul.f32 %v721, %v722
      %v725 = vsub.f32 %v711, %v723
      %v726 = vsub.f32 %v712, %v724
      %v727 = vmul.f32 %v725, %v725
      %v728 = vmul.f32 %v726, %v726
      %v729 = vsel %vm715, %v727, 0.0
      %730 = vadd.xlane.f32.xlu0 %v729
      %v731 = vpop.xlane.xlu0 %730
      %v732 = vsel %vm715, %v728, 0.0
      %733 = vadd.xlane.f32.xlu0 %v732
      %v734 = vpop.xlane.xlu0 %733
      %v735 = vmul.f32 %v731, %v722
      %v736 = vmul.f32 %v734, %v722
      %v737 = vadd.f32 %v735, 1e-05
      %v738 = vadd.f32 %v736, 1e-05
      %v739 = vrsqrt.pop %v737
      %v740 = vrsqrt.pop %v738
      %v741 = vmul.f32 %v725, %v739
      %v742 = vmul.f32 %v726, %v740
      %v744 = vlaneseq
      %v745 = vshrl.u32 %v744, 7
      %v746 = vsub.s32 0, %v745
      %v747 = vrot.slane %v713, %v746
      %v749 = vmul.f32 %v741, %v747
      %v750 = vmul.f32 %v742, %v747
      %v752 = vlaneseq
      %v753 = vshrl.u32 %v752, 7
      %v754 = vsub.s32 0, %v753
      %v755 = vrot.slane %v714, %v754
      %v757 = vadd.f32 %v749, %v755
      %v758 = vadd.f32 %v750, %v755
      %v759 = vpack.c.bf16 %v758, %v757
      %v760 = vld [vmem:[%s660] sm:$0xf]
      %v761 = vld [vmem:[%s660 + $0x4] sm:$0xf]
      %v762 = vld [vmem:[%s660 + $0x8] sm:$0xf]
      %v763 = vld [vmem:[%s660 + $0xc] sm:$0xf]
      %v764 = vld [vmem:[%s663] sm:$0x1]
      %v766 = vlaneseq
      %v767 = vshrl.u32 %v766, 7
      %v768 = vsub.s32 0, %v767
      %v769 = vrot.slane %v764, %v768
      %v775 = vunpack.c.l.b16 %v760
      %v776 = vunpack.c.l.b16 %v761
      %v777 = vunpack.c.l.b16 %v762
      %v778 = vunpack.c.l.b16 %v763
      %v779 = vpack.c.b16 %v776, %v775
      %v780 = vpack.c.b16 %v778, %v777
      %v784 = vsel %vm715, %v759, 0
      %786 = vmatprep.subr.bf16.mxu0 0
      %787 = vmatpush1.bf16.msra.mxu0 %v779
      %788 = vmatprep.subr.bf16.mxu0 0
      %789 = vmatpush1.bf16.msra.mxu0 %v780
      %790 = vmatprep.subr.bf16.mxu0 0
      %791 = vmatpush1.bf16.msra.mxu0 0
      %792 = vmatprep.subr.bf16.mxu0 0
      %793 = vmatpush1.bf16.msra.mxu0 0
      %794 = vmatprep.subr.bf16.mxu0 0
      %795 = vmatpush1.bf16.msra.mxu0 0
      %796 = vmatprep.subr.bf16.mxu0 0
      %797 = vmatpush1.bf16.msra.mxu0 0
      %798 = vmatprep.subr.bf16.mxu0 0
      %799 = vmatpush1.bf16.msra.mxu0 0
      %800 = vmatprep.subr.bf16.mxu0 0
      %801 = vmatpush1.bf16.msra.mxu0 0
      %802 = vmatprep.subr.bf16.mxu0 0
      %803 = vmatpush1.bf16.msra.mxu0 0
      %804 = vmatprep.subr.bf16.mxu0 0
      %805 = vmatpush1.bf16.msra.mxu0 0
      %806 = vmatprep.subr.bf16.mxu0 0
      %807 = vmatpush1.bf16.msra.mxu0 0
      %808 = vmatprep.subr.bf16.mxu0 0
      %809 = vmatpush1.bf16.msra.mxu0 0
      %810 = vmatprep.subr.bf16.mxu0 0
      %811 = vmatpush1.bf16.msra.mxu0 0
      %812 = vmatprep.subr.bf16.mxu0 0
      %813 = vmatpush1.bf16.msra.mxu0 0
      %814 = vmatprep.subr.bf16.mxu0 0
      %815 = vmatpush1.bf16.msra.mxu0 0
      %816 = vmatprep.subr.bf16.mxu0 0
      %817 = vmatpush1.bf16.msra.mxu0 0
      %818 = vmatprep.mubr.bf16.mxu0 0
      %819 = vmatmul.mubr.bf16.gmra.mrb[0].mxu0 %v784
      %v820 = vpop.f32.mrb[0].mxu0
      %v821 = vadd.f32 %v769, %v820
      %v822 = vpop.f32.mrb[0].mxu0
      %v823 = vpop.f32.mrb[0].mxu0
      %v824 = vadd.f32 %v769, %v823
      %v825 = vpop.f32.mrb[0].mxu0
      %826 = vdwg.mxu0
      %829 = vrot.lane.b32.xlu0 %v821, 124
      %v830 = vpop.permute.xlu0 %829
      %831 = vrot.lane.b32.xlu0 %v824, 124
      %v832 = vpop.permute.xlu0 %831
      %835 = vrot.lane.b32.xlu0 %v821, 120
      %v836 = vpop.permute.xlu0 %835
      %837 = vrot.lane.b32.xlu0 %v824, 120
      %v838 = vpop.permute.xlu0 %837
      %841 = vrot.lane.b32.xlu0 %v821, 116
      %v842 = vpop.permute.xlu0 %841
      %843 = vrot.lane.b32.xlu0 %v824, 116
      %v844 = vpop.permute.xlu0 %843
      %847 = vrot.lane.b32.xlu0 %v821, 112
      %v848 = vpop.permute.xlu0 %847
      %849 = vrot.lane.b32.xlu0 %v824, 112
      %v850 = vpop.permute.xlu0 %849
      %853 = vrot.lane.b32.xlu0 %v821, 108
      %v854 = vpop.permute.xlu0 %853
      %855 = vrot.lane.b32.xlu0 %v824, 108
      %v856 = vpop.permute.xlu0 %855
      %859 = vrot.lane.b32.xlu0 %v821, 104
      %v860 = vpop.permute.xlu0 %859
      %861 = vrot.lane.b32.xlu0 %v824, 104
      %v862 = vpop.permute.xlu0 %861
      %865 = vrot.lane.b32.xlu0 %v821, 100
      %v866 = vpop.permute.xlu0 %865
      %867 = vrot.lane.b32.xlu0 %v824, 100
      %v868 = vpop.permute.xlu0 %867
      %871 = vrot.lane.b32.xlu0 %v821, 96
      %v872 = vpop.permute.xlu0 %871
      %873 = vrot.lane.b32.xlu0 %v824, 96
      %v874 = vpop.permute.xlu0 %873
      %877 = vrot.lane.b32.xlu0 %v821, 92
      %v878 = vpop.permute.xlu0 %877
      %879 = vrot.lane.b32.xlu0 %v824, 92
      %v880 = vpop.permute.xlu0 %879
      %883 = vrot.lane.b32.xlu0 %v821, 88
      %v884 = vpop.permute.xlu0 %883
      %885 = vrot.lane.b32.xlu0 %v824, 88
      %v886 = vpop.permute.xlu0 %885
      %889 = vrot.lane.b32.xlu0 %v821, 84
      %v890 = vpop.permute.xlu0 %889
      %891 = vrot.lane.b32.xlu0 %v824, 84
      %v892 = vpop.permute.xlu0 %891
      %895 = vrot.lane.b32.xlu0 %v821, 80
      %v896 = vpop.permute.xlu0 %895
      %897 = vrot.lane.b32.xlu0 %v824, 80
      %v898 = vpop.permute.xlu0 %897
      %901 = vrot.lane.b32.xlu0 %v821, 76
      %v902 = vpop.permute.xlu0 %901
      %903 = vrot.lane.b32.xlu0 %v824, 76
      %v904 = vpop.permute.xlu0 %903
      %907 = vrot.lane.b32.xlu0 %v821, 72
      %v908 = vpop.permute.xlu0 %907
      %909 = vrot.lane.b32.xlu0 %v824, 72
      %v910 = vpop.permute.xlu0 %909
      %913 = vrot.lane.b32.xlu0 %v821, 68
      %v914 = vpop.permute.xlu0 %913
      %915 = vrot.lane.b32.xlu0 %v824, 68
      %v916 = vpop.permute.xlu0 %915
      %919 = vrot.lane.b32.xlu0 %v821, 64
      %v920 = vpop.permute.xlu0 %919
      %921 = vrot.lane.b32.xlu0 %v824, 64
      %v922 = vpop.permute.xlu0 %921
      %925 = vrot.lane.b32.xlu0 %v821, 60
      %v926 = vpop.permute.xlu0 %925
      %927 = vrot.lane.b32.xlu0 %v824, 60
      %v928 = vpop.permute.xlu0 %927
      %931 = vrot.lane.b32.xlu0 %v821, 56
      %v932 = vpop.permute.xlu0 %931
      %933 = vrot.lane.b32.xlu0 %v824, 56
      %v934 = vpop.permute.xlu0 %933
      %937 = vrot.lane.b32.xlu0 %v821, 52
      %v938 = vpop.permute.xlu0 %937
      %939 = vrot.lane.b32.xlu0 %v824, 52
      %v940 = vpop.permute.xlu0 %939
      %943 = vrot.lane.b32.xlu0 %v821, 48
      %v944 = vpop.permute.xlu0 %943
      %945 = vrot.lane.b32.xlu0 %v824, 48
      %v946 = vpop.permute.xlu0 %945
      %949 = vrot.lane.b32.xlu0 %v821, 44
      %v950 = vpop.permute.xlu0 %949
      %951 = vrot.lane.b32.xlu0 %v824, 44
      %v952 = vpop.permute.xlu0 %951
      %955 = vrot.lane.b32.xlu0 %v821, 40
      %v956 = vpop.permute.xlu0 %955
      %957 = vrot.lane.b32.xlu0 %v824, 40
      %v958 = vpop.permute.xlu0 %957
      %961 = vrot.lane.b32.xlu0 %v821, 36
      %v962 = vpop.permute.xlu0 %961
      %963 = vrot.lane.b32.xlu0 %v824, 36
      %v964 = vpop.permute.xlu0 %963
      %v967 = vcombine.low %v821, %v836
      %v968 = vcombine.high %v821, %v836
      %v970 = vunpack.c.l.s4 1983009808
      %v971 = vunpack.c.0.s8 %v970
      %v972 = vlaneseq
      %v973 = vshrl.u32 %v972, 7
      %v974 = vsub.s32 %v971, %v973
      %v975 = vrot.slane %v967, %v974
      %v977 = vunpack.c.l.s4 1983009808
      %v978 = vunpack.c.0.s8 %v977
      %v979 = vlaneseq
      %v980 = vshrl.u32 %v979, 7
      %v981 = vsub.s32 %v978, %v980
      %v982 = vrot.slane %v968, %v981
      %v983 = vcombine.low %v830, %v842
      %v984 = vcombine.high %v830, %v842
      %v986 = vunpack.c.l.s4 1983009808
      %v987 = vunpack.c.0.s8 %v986
      %v988 = vlaneseq
      %v989 = vshrl.u32 %v988, 7
      %v990 = vsub.s32 %v987, %v989
      %v991 = vrot.slane %v983, %v990
      %v993 = vunpack.c.l.s4 1983009808
      %v994 = vunpack.c.0.s8 %v993
      %v995 = vlaneseq
      %v996 = vshrl.u32 %v995, 7
      %v997 = vsub.s32 %v994, %v996
      %v998 = vrot.slane %v984, %v997
      %v999 = vcombine.low %v848, %v860
      %v1000 = vcombine.high %v848, %v860
      %v1002 = vunpack.c.l.s4 1983009808
      %v1003 = vunpack.c.0.s8 %v1002
      %v1004 = vlaneseq
      %v1005 = vshrl.u32 %v1004, 7
      %v1006 = vsub.s32 %v1003, %v1005
      %v1007 = vrot.slane %v999, %v1006
      %v1009 = vunpack.c.l.s4 1983009808
      %v1010 = vunpack.c.0.s8 %v1009
      %v1011 = vlaneseq
      %v1012 = vshrl.u32 %v1011, 7
      %v1013 = vsub.s32 %v1010, %v1012
      %v1014 = vrot.slane %v1000, %v1013
      %v1015 = vcombine.low %v854, %v866
      %v1016 = vcombine.high %v854, %v866
      %v1018 = vunpack.c.l.s4 1983009808
      %v1019 = vunpack.c.0.s8 %v1018
      %v1020 = vlaneseq
      %v1021 = vshrl.u32 %v1020, 7
      %v1022 = vsub.s32 %v1019, %v1021
      %v1023 = vrot.slane %v1015, %v1022
      %v1025 = vunpack.c.l.s4 1983009808
      %v1026 = vunpack.c.0.s8 %v1025
      %v1027 = vlaneseq
      %v1028 = vshrl.u32 %v1027, 7
      %v1029 = vsub.s32 %v1026, %v1028
      %v1030 = vrot.slane %v1016, %v1029
      %v1031 = vcombine.low %v975, %v991
      %v1032 = vcombine.high %v975, %v991
      %v1034 = vunpack.c.l.s4 1934713408
      %v1035 = vunpack.c.0.s8 %v1034
      %v1036 = vlaneseq
      %v1037 = vshrl.u32 %v1036, 7
      %v1038 = vsub.s32 %v1035, %v1037
      %v1039 = vrot.slane %v1031, %v1038
      %v1041 = vunpack.c.l.s4 1934713408
      %v1042 = vunpack.c.0.s8 %v1041
      %v1043 = vlaneseq
      %v1044 = vshrl.u32 %v1043, 7
      %v1045 = vsub.s32 %v1042, %v1044
      %v1046 = vrot.slane %v1032, %v1045
      %v1047 = vcombine.low %v982, %v998
      %v1048 = vcombine.high %v982, %v998
      %v1050 = vunpack.c.l.s4 1934713408
      %v1051 = vunpack.c.0.s8 %v1050
      %v1052 = vlaneseq
      %v1053 = vshrl.u32 %v1052, 7
      %v1054 = vsub.s32 %v1051, %v1053
      %v1055 = vrot.slane %v1047, %v1054
      %v1057 = vunpack.c.l.s4 1934713408
      %v1058 = vunpack.c.0.s8 %v1057
      %v1059 = vlaneseq
      %v1060 = vshrl.u32 %v1059, 7
      %v1061 = vsub.s32 %v1058, %v1060
      %v1062 = vrot.slane %v1048, %v1061
      %v1063 = vcombine.low %v1007, %v1023
      %v1064 = vcombine.high %v1007, %v1023
      %v1066 = vunpack.c.l.s4 1934713408
      %v1067 = vunpack.c.0.s8 %v1066
      %v1068 = vlaneseq
      %v1069 = vshrl.u32 %v1068, 7
      %v1070 = vsub.s32 %v1067, %v1069
      %v1071 = vrot.slane %v1063, %v1070
      %v1073 = vunpack.c.l.s4 1934713408
      %v1074 = vunpack.c.0.s8 %v1073
      %v1075 = vlaneseq
      %v1076 = vshrl.u32 %v1075, 7
      %v1077 = vsub.s32 %v1074, %v1076
      %v1078 = vrot.slane %v1064, %v1077
      %v1079 = vcombine.low %v1014, %v1030
      %v1080 = vcombine.high %v1014, %v1030
      %v1082 = vunpack.c.l.s4 1934713408
      %v1083 = vunpack.c.0.s8 %v1082
      %v1084 = vlaneseq
      %v1085 = vshrl.u32 %v1084, 7
      %v1086 = vsub.s32 %v1083, %v1085
      %v1087 = vrot.slane %v1079, %v1086
      %v1089 = vunpack.c.l.s4 1934713408
      %v1090 = vunpack.c.0.s8 %v1089
      %v1091 = vlaneseq
      %v1092 = vshrl.u32 %v1091, 7
      %v1093 = vsub.s32 %v1090, %v1092
      %v1094 = vrot.slane %v1080, %v1093
      %v1095 = vcombine.low %v1039, %v1071
      %v1096 = vcombine.high %v1039, %v1071
      %v1097 = vcombine.low %v1046, %v1078
      %v1098 = vcombine.high %v1046, %v1078
      %v1099 = vcombine.low %v1055, %v1087
      %v1100 = vcombine.high %v1055, %v1087
      %v1101 = vcombine.low %v1062, %v1094
      %v1102 = vcombine.high %v1062, %v1094
      %v1103 = vcombine.low %v872, %v884
      %v1104 = vcombine.high %v872, %v884
      %v1106 = vunpack.c.l.s4 1983009808
      %v1107 = vunpack.c.0.s8 %v1106
      %v1108 = vlaneseq
      %v1109 = vshrl.u32 %v1108, 7
      %v1110 = vsub.s32 %v1107, %v1109
      %v1111 = vrot.slane %v1103, %v1110
      %v1113 = vunpack.c.l.s4 1983009808
      %v1114 = vunpack.c.0.s8 %v1113
      %v1115 = vlaneseq
      %v1116 = vshrl.u32 %v1115, 7
      %v1117 = vsub.s32 %v1114, %v1116
      %v1118 = vrot.slane %v1104, %v1117
      %v1119 = vcombine.low %v878, %v890
      %v1120 = vcombine.high %v878, %v890
      %v1122 = vunpack.c.l.s4 1983009808
      %v1123 = vunpack.c.0.s8 %v1122
      %v1124 = vlaneseq
      %v1125 = vshrl.u32 %v1124, 7
      %v1126 = vsub.s32 %v1123, %v1125
      %v1127 = vrot.slane %v1119, %v1126
      %v1129 = vunpack.c.l.s4 1983009808
      %v1130 = vunpack.c.0.s8 %v1129
      %v1131 = vlaneseq
      %v1132 = vshrl.u32 %v1131, 7
      %v1133 = vsub.s32 %v1130, %v1132
      %v1134 = vrot.slane %v1120, %v1133
      %v1135 = vcombine.low %v896, %v908
      %v1136 = vcombine.high %v896, %v908
      %v1138 = vunpack.c.l.s4 1983009808
      %v1139 = vunpack.c.0.s8 %v1138
      %v1140 = vlaneseq
      %v1141 = vshrl.u32 %v1140, 7
      %v1142 = vsub.s32 %v1139, %v1141
      %v1143 = vrot.slane %v1135, %v1142
      %v1145 = vunpack.c.l.s4 1983009808
      %v1146 = vunpack.c.0.s8 %v1145
      %v1147 = vlaneseq
      %v1148 = vshrl.u32 %v1147, 7
      %v1149 = vsub.s32 %v1146, %v1148
      %v1150 = vrot.slane %v1136, %v1149
      %v1151 = vcombine.low %v902, %v914
      %v1152 = vcombine.high %v902, %v914
      %v1154 = vunpack.c.l.s4 1983009808
      %v1155 = vunpack.c.0.s8 %v1154
      %v1156 = vlaneseq
      %v1157 = vshrl.u32 %v1156, 7
      %v1158 = vsub.s32 %v1155, %v1157
      %v1159 = vrot.slane %v1151, %v1158
      %v1161 = vunpack.c.l.s4 1983009808
      %v1162 = vunpack.c.0.s8 %v1161
      %v1163 = vlaneseq
      %v1164 = vshrl.u32 %v1163, 7
      %v1165 = vsub.s32 %v1162, %v1164
      %v1166 = vrot.slane %v1152, %v1165
      %v1167 = vcombine.low %v1111, %v1127
      %v1168 = vcombine.high %v1111, %v1127
      %v1170 = vunpack.c.l.s4 1934713408
      %v1171 = vunpack.c.0.s8 %v1170
      %v1172 = vlaneseq
      %v1173 = vshrl.u32 %v1172, 7
      %v1174 = vsub.s32 %v1171, %v1173
      %v1175 = vrot.slane %v1167, %v1174
      %v1177 = vunpack.c.l.s4 1934713408
      %v1178 = vunpack.c.0.s8 %v1177
      %v1179 = vlaneseq
      %v1180 = vshrl.u32 %v1179, 7
      %v1181 = vsub.s32 %v1178, %v1180
      %v1182 = vrot.slane %v1168, %v1181
      %v1183 = vcombine.low %v1118, %v1134
      %v1184 = vcombine.high %v1118, %v1134
      %v1186 = vunpack.c.l.s4 1934713408
      %v1187 = vunpack.c.0.s8 %v1186
      %v1188 = vlaneseq
      %v1189 = vshrl.u32 %v1188, 7
      %v1190 = vsub.s32 %v1187, %v1189
      %v1191 = vrot.slane %v1183, %v1190
      %v1193 = vunpack.c.l.s4 1934713408
      %v1194 = vunpack.c.0.s8 %v1193
      %v1195 = vlaneseq
      %v1196 = vshrl.u32 %v1195, 7
      %v1197 = vsub.s32 %v1194, %v1196
      %v1198 = vrot.slane %v1184, %v1197
      %v1199 = vcombine.low %v1143, %v1159
      %v1200 = vcombine.high %v1143, %v1159
      %v1202 = vunpack.c.l.s4 1934713408
      %v1203 = vunpack.c.0.s8 %v1202
      %v1204 = vlaneseq
      %v1205 = vshrl.u32 %v1204, 7
      %v1206 = vsub.s32 %v1203, %v1205
      %v1207 = vrot.slane %v1199, %v1206
      %v1209 = vunpack.c.l.s4 1934713408
      %v1210 = vunpack.c.0.s8 %v1209
      %v1211 = vlaneseq
      %v1212 = vshrl.u32 %v1211, 7
      %v1213 = vsub.s32 %v1210, %v1212
      %v1214 = vrot.slane %v1200, %v1213
      %v1215 = vcombine.low %v1150, %v1166
      %v1216 = vcombine.high %v1150, %v1166
      %v1218 = vunpack.c.l.s4 1934713408
      %v1219 = vunpack.c.0.s8 %v1218
      %v1220 = vlaneseq
      %v1221 = vshrl.u32 %v1220, 7
      %v1222 = vsub.s32 %v1219, %v1221
      %v1223 = vrot.slane %v1215, %v1222
      %v1225 = vunpack.c.l.s4 1934713408
      %v1226 = vunpack.c.0.s8 %v1225
      %v1227 = vlaneseq
      %v1228 = vshrl.u32 %v1227, 7
      %v1229 = vsub.s32 %v1226, %v1228
      %v1230 = vrot.slane %v1216, %v1229
      %v1231 = vcombine.low %v1175, %v1207
      %v1232 = vcombine.high %v1175, %v1207
      %v1233 = vcombine.low %v1182, %v1214
      %v1234 = vcombine.high %v1182, %v1214
      %v1235 = vcombine.low %v1191, %v1223
      %v1236 = vcombine.high %v1191, %v1223
      %v1237 = vcombine.low %v1198, %v1230
      %v1238 = vcombine.high %v1198, %v1230
      %v1239 = vcombine.low %v920, %v932
      %v1240 = vcombine.high %v920, %v932
      %v1242 = vunpack.c.l.s4 1983009808
      %v1243 = vunpack.c.0.s8 %v1242
      %v1244 = vlaneseq
      %v1245 = vshrl.u32 %v1244, 7
      %v1246 = vsub.s32 %v1243, %v1245
      %v1247 = vrot.slane %v1239, %v1246
      %v1249 = vunpack.c.l.s4 1983009808
      %v1250 = vunpack.c.0.s8 %v1249
      %v1251 = vlaneseq
      %v1252 = vshrl.u32 %v1251, 7
      %v1253 = vsub.s32 %v1250, %v1252
      %v1254 = vrot.slane %v1240, %v1253
      %v1255 = vcombine.low %v926, %v938
      %v1256 = vcombine.high %v926, %v938
      %v1258 = vunpack.c.l.s4 1983009808
      %v1259 = vunpack.c.0.s8 %v1258
      %v1260 = vlaneseq
      %v1261 = vshrl.u32 %v1260, 7
      %v1262 = vsub.s32 %v1259, %v1261
      %v1263 = vrot.slane %v1255, %v1262
      %v1265 = vunpack.c.l.s4 1983009808
      %v1266 = vunpack.c.0.s8 %v1265
      %v1267 = vlaneseq
      %v1268 = vshrl.u32 %v1267, 7
      %v1269 = vsub.s32 %v1266, %v1268
      %v1270 = vrot.slane %v1256, %v1269
      %v1271 = vcombine.low %v944, %v956
      %v1272 = vcombine.high %v944, %v956
      %v1274 = vunpack.c.l.s4 1983009808
      %v1275 = vunpack.c.0.s8 %v1274
      %v1276 = vlaneseq
      %v1277 = vshrl.u32 %v1276, 7
      %v1278 = vsub.s32 %v1275, %v1277
      %v1279 = vrot.slane %v1271, %v1278
      %v1281 = vunpack.c.l.s4 1983009808
      %v1282 = vunpack.c.0.s8 %v1281
      %v1283 = vlaneseq
      %v1284 = vshrl.u32 %v1283, 7
      %v1285 = vsub.s32 %v1282, %v1284
      %v1286 = vrot.slane %v1272, %v1285
      %v1287 = vcombine.low %v950, %v962
      %v1288 = vcombine.high %v950, %v962
      %v1290 = vunpack.c.l.s4 1983009808
      %v1291 = vunpack.c.0.s8 %v1290
      %v1292 = vlaneseq
      %v1293 = vshrl.u32 %v1292, 7
      %v1294 = vsub.s32 %v1291, %v1293
      %v1295 = vrot.slane %v1287, %v1294
      %v1297 = vunpack.c.l.s4 1983009808
      %v1298 = vunpack.c.0.s8 %v1297
      %v1299 = vlaneseq
      %v1300 = vshrl.u32 %v1299, 7
      %v1301 = vsub.s32 %v1298, %v1300
      %v1302 = vrot.slane %v1288, %v1301
      %v1303 = vcombine.low %v1247, %v1263
      %v1304 = vcombine.high %v1247, %v1263
      %v1306 = vunpack.c.l.s4 1934713408
      %v1307 = vunpack.c.0.s8 %v1306
      %v1308 = vlaneseq
      %v1309 = vshrl.u32 %v1308, 7
      %v1310 = vsub.s32 %v1307, %v1309
      %v1311 = vrot.slane %v1303, %v1310
      %v1313 = vunpack.c.l.s4 1934713408
      %v1314 = vunpack.c.0.s8 %v1313
      %v1315 = vlaneseq
      %v1316 = vshrl.u32 %v1315, 7
      %v1317 = vsub.s32 %v1314, %v1316
      %v1318 = vrot.slane %v1304, %v1317
      %v1319 = vcombine.low %v1254, %v1270
      %v1320 = vcombine.high %v1254, %v1270
      %v1322 = vunpack.c.l.s4 1934713408
      %v1323 = vunpack.c.0.s8 %v1322
      %v1324 = vlaneseq
      %v1325 = vshrl.u32 %v1324, 7
      %v1326 = vsub.s32 %v1323, %v1325
      %v1327 = vrot.slane %v1319, %v1326
      %v1329 = vunpack.c.l.s4 1934713408
      %v1330 = vunpack.c.0.s8 %v1329
      %v1331 = vlaneseq
      %v1332 = vshrl.u32 %v1331, 7
      %v1333 = vsub.s32 %v1330, %v1332
      %v1334 = vrot.slane %v1320, %v1333
      %v1335 = vcombine.low %v1279, %v1295
      %v1336 = vcombine.high %v1279, %v1295
      %v1338 = vunpack.c.l.s4 1934713408
      %v1339 = vunpack.c.0.s8 %v1338
      %v1340 = vlaneseq
      %v1341 = vshrl.u32 %v1340, 7
      %v1342 = vsub.s32 %v1339, %v1341
      %v1343 = vrot.slane %v1335, %v1342
      %v1345 = vunpack.c.l.s4 1934713408
      %v1346 = vunpack.c.0.s8 %v1345
      %v1347 = vlaneseq
      %v1348 = vshrl.u32 %v1347, 7
      %v1349 = vsub.s32 %v1346, %v1348
      %v1350 = vrot.slane %v1336, %v1349
      %v1351 = vcombine.low %v1286, %v1302
      %v1352 = vcombine.high %v1286, %v1302
      %v1354 = vunpack.c.l.s4 1934713408
      %v1355 = vunpack.c.0.s8 %v1354
      %v1356 = vlaneseq
      %v1357 = vshrl.u32 %v1356, 7
      %v1358 = vsub.s32 %v1355, %v1357
      %v1359 = vrot.slane %v1351, %v1358
      %v1361 = vunpack.c.l.s4 1934713408
      %v1362 = vunpack.c.0.s8 %v1361
      %v1363 = vlaneseq
      %v1364 = vshrl.u32 %v1363, 7
      %v1365 = vsub.s32 %v1362, %v1364
      %v1366 = vrot.slane %v1352, %v1365
      %v1367 = vcombine.low %v1311, %v1343
      %v1368 = vcombine.high %v1311, %v1343
      %v1369 = vcombine.low %v1318, %v1350
      %v1370 = vcombine.high %v1318, %v1350
      %v1371 = vcombine.low %v1327, %v1359
      %v1372 = vcombine.high %v1327, %v1359
      %v1373 = vcombine.low %v1334, %v1366
      %v1374 = vcombine.high %v1334, %v1366
      %v1375 = vcombine.low %v824, %v838
      %v1376 = vcombine.high %v824, %v838
      %v1378 = vunpack.c.l.s4 1983009808
      %v1379 = vunpack.c.0.s8 %v1378
      %v1380 = vlaneseq
      %v1381 = vshrl.u32 %v1380, 7
      %v1382 = vsub.s32 %v1379, %v1381
      %v1383 = vrot.slane %v1375, %v1382
      %v1385 = vunpack.c.l.s4 1983009808
      %v1386 = vunpack.c.0.s8 %v1385
      %v1387 = vlaneseq
      %v1388 = vshrl.u32 %v1387, 7
      %v1389 = vsub.s32 %v1386, %v1388
      %v1390 = vrot.slane %v1376, %v1389
      %v1391 = vcombine.low %v832, %v844
      %v1392 = vcombine.high %v832, %v844
      %v1394 = vunpack.c.l.s4 1983009808
      %v1395 = vunpack.c.0.s8 %v1394
      %v1396 = vlaneseq
      %v1397 = vshrl.u32 %v1396, 7
      %v1398 = vsub.s32 %v1395, %v1397
      %v1399 = vrot.slane %v1391, %v1398
      %v1401 = vunpack.c.l.s4 1983009808
      %v1402 = vunpack.c.0.s8 %v1401
      %v1403 = vlaneseq
      %v1404 = vshrl.u32 %v1403, 7
      %v1405 = vsub.s32 %v1402, %v1404
      %v1406 = vrot.slane %v1392, %v1405
      %v1407 = vcombine.low %v850, %v862
      %v1408 = vcombine.high %v850, %v862
      %v1410 = vunpack.c.l.s4 1983009808
      %v1411 = vunpack.c.0.s8 %v1410
      %v1412 = vlaneseq
      %v1413 = vshrl.u32 %v1412, 7
      %v1414 = vsub.s32 %v1411, %v1413
      %v1415 = vrot.slane %v1407, %v1414
      %v1417 = vunpack.c.l.s4 1983009808
      %v1418 = vunpack.c.0.s8 %v1417
      %v1419 = vlaneseq
      %v1420 = vshrl.u32 %v1419, 7
      %v1421 = vsub.s32 %v1418, %v1420
      %v1422 = vrot.slane %v1408, %v1421
      %v1423 = vcombine.low %v856, %v868
      %v1424 = vcombine.high %v856, %v868
      %v1426 = vunpack.c.l.s4 1983009808
      %v1427 = vunpack.c.0.s8 %v1426
      %v1428 = vlaneseq
      %v1429 = vshrl.u32 %v1428, 7
      %v1430 = vsub.s32 %v1427, %v1429
      %v1431 = vrot.slane %v1423, %v1430
      %v1433 = vunpack.c.l.s4 1983009808
      %v1434 = vunpack.c.0.s8 %v1433
      %v1435 = vlaneseq
      %v1436 = vshrl.u32 %v1435, 7
      %v1437 = vsub.s32 %v1434, %v1436
      %v1438 = vrot.slane %v1424, %v1437
      %v1439 = vcombine.low %v1383, %v1399
      %v1440 = vcombine.high %v1383, %v1399
      %v1442 = vunpack.c.l.s4 1934713408
      %v1443 = vunpack.c.0.s8 %v1442
      %v1444 = vlaneseq
      %v1445 = vshrl.u32 %v1444, 7
      %v1446 = vsub.s32 %v1443, %v1445
      %v1447 = vrot.slane %v1439, %v1446
      %v1449 = vunpack.c.l.s4 1934713408
      %v1450 = vunpack.c.0.s8 %v1449
      %v1451 = vlaneseq
      %v1452 = vshrl.u32 %v1451, 7
      %v1453 = vsub.s32 %v1450, %v1452
      %v1454 = vrot.slane %v1440, %v1453
      %v1455 = vcombine.low %v1390, %v1406
      %v1456 = vcombine.high %v1390, %v1406
      %v1458 = vunpack.c.l.s4 1934713408
      %v1459 = vunpack.c.0.s8 %v1458
      %v1460 = vlaneseq
      %v1461 = vshrl.u32 %v1460, 7
      %v1462 = vsub.s32 %v1459, %v1461
      %v1463 = vrot.slane %v1455, %v1462
      %v1465 = vunpack.c.l.s4 1934713408
      %v1466 = vunpack.c.0.s8 %v1465
      %v1467 = vlaneseq
      %v1468 = vshrl.u32 %v1467, 7
      %v1469 = vsub.s32 %v1466, %v1468
      %v1470 = vrot.slane %v1456, %v1469
      %v1471 = vcombine.low %v1415, %v1431
      %v1472 = vcombine.high %v1415, %v1431
      %v1474 = vunpack.c.l.s4 1934713408
      %v1475 = vunpack.c.0.s8 %v1474
      %v1476 = vlaneseq
      %v1477 = vshrl.u32 %v1476, 7
      %v1478 = vsub.s32 %v1475, %v1477
      %v1479 = vrot.slane %v1471, %v1478
      %v1481 = vunpack.c.l.s4 1934713408
      %v1482 = vunpack.c.0.s8 %v1481
      %v1483 = vlaneseq
      %v1484 = vshrl.u32 %v1483, 7
      %v1485 = vsub.s32 %v1482, %v1484
      %v1486 = vrot.slane %v1472, %v1485
      %v1487 = vcombine.low %v1422, %v1438
      %v1488 = vcombine.high %v1422, %v1438
      %v1490 = vunpack.c.l.s4 1934713408
      %v1491 = vunpack.c.0.s8 %v1490
      %v1492 = vlaneseq
      %v1493 = vshrl.u32 %v1492, 7
      %v1494 = vsub.s32 %v1491, %v1493
      %v1495 = vrot.slane %v1487, %v1494
      %v1497 = vunpack.c.l.s4 1934713408
      %v1498 = vunpack.c.0.s8 %v1497
      %v1499 = vlaneseq
      %v1500 = vshrl.u32 %v1499, 7
      %v1501 = vsub.s32 %v1498, %v1500
      %v1502 = vrot.slane %v1488, %v1501
      %v1503 = vcombine.low %v1447, %v1479
      %v1504 = vcombine.high %v1447, %v1479
      %v1505 = vcombine.low %v1454, %v1486
      %v1506 = vcombine.high %v1454, %v1486
      %v1507 = vcombine.low %v1463, %v1495
      %v1508 = vcombine.high %v1463, %v1495
      %v1509 = vcombine.low %v1470, %v1502
      %v1510 = vcombine.high %v1470, %v1502
      %v1511 = vcombine.low %v874, %v886
      %v1512 = vcombine.high %v874, %v886
      %v1514 = vunpack.c.l.s4 1983009808
      %v1515 = vunpack.c.0.s8 %v1514
      %v1516 = vlaneseq
      %v1517 = vshrl.u32 %v1516, 7
      %v1518 = vsub.s32 %v1515, %v1517
      %v1519 = vrot.slane %v1511, %v1518
      %v1521 = vunpack.c.l.s4 1983009808
      %v1522 = vunpack.c.0.s8 %v1521
      %v1523 = vlaneseq
      %v1524 = vshrl.u32 %v1523, 7
      %v1525 = vsub.s32 %v1522, %v1524
      %v1526 = vrot.slane %v1512, %v1525
      %v1527 = vcombine.low %v880, %v892
      %v1528 = vcombine.high %v880, %v892
      %v1530 = vunpack.c.l.s4 1983009808
      %v1531 = vunpack.c.0.s8 %v1530
      %v1532 = vlaneseq
      %v1533 = vshrl.u32 %v1532, 7
      %v1534 = vsub.s32 %v1531, %v1533
      %v1535 = vrot.slane %v1527, %v1534
      %v1537 = vunpack.c.l.s4 1983009808
      %v1538 = vunpack.c.0.s8 %v1537
      %v1539 = vlaneseq
      %v1540 = vshrl.u32 %v1539, 7
      %v1541 = vsub.s32 %v1538, %v1540
      %v1542 = vrot.slane %v1528, %v1541
      %v1543 = vcombine.low %v898, %v910
      %v1544 = vcombine.high %v898, %v910
      %v1546 = vunpack.c.l.s4 1983009808
      %v1547 = vunpack.c.0.s8 %v1546
      %v1548 = vlaneseq
      %v1549 = vshrl.u32 %v1548, 7
      %v1550 = vsub.s32 %v1547, %v1549
      %v1551 = vrot.slane %v1543, %v1550
      %v1553 = vunpack.c.l.s4 1983009808
      %v1554 = vunpack.c.0.s8 %v1553
      %v1555 = vlaneseq
      %v1556 = vshrl.u32 %v1555, 7
      %v1557 = vsub.s32 %v1554, %v1556
      %v1558 = vrot.slane %v1544, %v1557
      %v1559 = vcombine.low %v904, %v916
      %v1560 = vcombine.high %v904, %v916
      %v1562 = vunpack.c.l.s4 1983009808
      %v1563 = vunpack.c.0.s8 %v1562
      %v1564 = vlaneseq
      %v1565 = vshrl.u32 %v1564, 7
      %v1566 = vsub.s32 %v1563, %v1565
      %v1567 = vrot.slane %v1559, %v1566
      %v1569 = vunpack.c.l.s4 1983009808
      %v1570 = vunpack.c.0.s8 %v1569
      %v1571 = vlaneseq
      %v1572 = vshrl.u32 %v1571, 7
      %v1573 = vsub.s32 %v1570, %v1572
      %v1574 = vrot.slane %v1560, %v1573
      %v1575 = vcombine.low %v1519, %v1535
      %v1576 = vcombine.high %v1519, %v1535
      %v1578 = vunpack.c.l.s4 1934713408
      %v1579 = vunpack.c.0.s8 %v1578
      %v1580 = vlaneseq
      %v1581 = vshrl.u32 %v1580, 7
      %v1582 = vsub.s32 %v1579, %v1581
      %v1583 = vrot.slane %v1575, %v1582
      %v1585 = vunpack.c.l.s4 1934713408
      %v1586 = vunpack.c.0.s8 %v1585
      %v1587 = vlaneseq
      %v1588 = vshrl.u32 %v1587, 7
      %v1589 = vsub.s32 %v1586, %v1588
      %v1590 = vrot.slane %v1576, %v1589
      %v1591 = vcombine.low %v1526, %v1542
      %v1592 = vcombine.high %v1526, %v1542
      %v1594 = vunpack.c.l.s4 1934713408
      %v1595 = vunpack.c.0.s8 %v1594
      %v1596 = vlaneseq
      %v1597 = vshrl.u32 %v1596, 7
      %v1598 = vsub.s32 %v1595, %v1597
      %v1599 = vrot.slane %v1591, %v1598
      %v1601 = vunpack.c.l.s4 1934713408
      %v1602 = vunpack.c.0.s8 %v1601
      %v1603 = vlaneseq
      %v1604 = vshrl.u32 %v1603, 7
      %v1605 = vsub.s32 %v1602, %v1604
      %v1606 = vrot.slane %v1592, %v1605
      %v1607 = vcombine.low %v1551, %v1567
      %v1608 = vcombine.high %v1551, %v1567
      %v1610 = vunpack.c.l.s4 1934713408
      %v1611 = vunpack.c.0.s8 %v1610
      %v1612 = vlaneseq
      %v1613 = vshrl.u32 %v1612, 7
      %v1614 = vsub.s32 %v1611, %v1613
      %v1615 = vrot.slane %v1607, %v1614
      %v1617 = vunpack.c.l.s4 1934713408
      %v1618 = vunpack.c.0.s8 %v1617
      %v1619 = vlaneseq
      %v1620 = vshrl.u32 %v1619, 7
      %v1621 = vsub.s32 %v1618, %v1620
      %v1622 = vrot.slane %v1608, %v1621
      %v1623 = vcombine.low %v1558, %v1574
      %v1624 = vcombine.high %v1558, %v1574
      %v1626 = vunpack.c.l.s4 1934713408
      %v1627 = vunpack.c.0.s8 %v1626
      %v1628 = vlaneseq
      %v1629 = vshrl.u32 %v1628, 7
      %v1630 = vsub.s32 %v1627, %v1629
      %v1631 = vrot.slane %v1623, %v1630
      %v1633 = vunpack.c.l.s4 1934713408
      %v1634 = vunpack.c.0.s8 %v1633
      %v1635 = vlaneseq
      %v1636 = vshrl.u32 %v1635, 7
      %v1637 = vsub.s32 %v1634, %v1636
      %v1638 = vrot.slane %v1624, %v1637
      %v1639 = vcombine.low %v1583, %v1615
      %v1640 = vcombine.high %v1583, %v1615
      %v1641 = vcombine.low %v1590, %v1622
      %v1642 = vcombine.high %v1590, %v1622
      %v1643 = vcombine.low %v1599, %v1631
      %v1644 = vcombine.high %v1599, %v1631
      %v1645 = vcombine.low %v1606, %v1638
      %v1646 = vcombine.high %v1606, %v1638
      %v1647 = vcombine.low %v922, %v934
      %v1648 = vcombine.high %v922, %v934
      %v1650 = vunpack.c.l.s4 1983009808
      %v1651 = vunpack.c.0.s8 %v1650
      %v1652 = vlaneseq
      %v1653 = vshrl.u32 %v1652, 7
      %v1654 = vsub.s32 %v1651, %v1653
      %v1655 = vrot.slane %v1647, %v1654
      %v1657 = vunpack.c.l.s4 1983009808
      %v1658 = vunpack.c.0.s8 %v1657
      %v1659 = vlaneseq
      %v1660 = vshrl.u32 %v1659, 7
      %v1661 = vsub.s32 %v1658, %v1660
      %v1662 = vrot.slane %v1648, %v1661
      %v1663 = vcombine.low %v928, %v940
      %v1664 = vcombine.high %v928, %v940
      %v1666 = vunpack.c.l.s4 1983009808
      %v1667 = vunpack.c.0.s8 %v1666
      %v1668 = vlaneseq
      %v1669 = vshrl.u32 %v1668, 7
      %v1670 = vsub.s32 %v1667, %v1669
      %v1671 = vrot.slane %v1663, %v1670
      %v1673 = vunpack.c.l.s4 1983009808
      %v1674 = vunpack.c.0.s8 %v1673
      %v1675 = vlaneseq
      %v1676 = vshrl.u32 %v1675, 7
      %v1677 = vsub.s32 %v1674, %v1676
      %v1678 = vrot.slane %v1664, %v1677
      %v1679 = vcombine.low %v946, %v958
      %v1680 = vcombine.high %v946, %v958
      %v1682 = vunpack.c.l.s4 1983009808
      %v1683 = vunpack.c.0.s8 %v1682
      %v1684 = vlaneseq
      %v1685 = vshrl.u32 %v1684, 7
      %v1686 = vsub.s32 %v1683, %v1685
      %v1687 = vrot.slane %v1679, %v1686
      %v1689 = vunpack.c.l.s4 1983009808
      %v1690 = vunpack.c.0.s8 %v1689
      %v1691 = vlaneseq
      %v1692 = vshrl.u32 %v1691, 7
      %v1693 = vsub.s32 %v1690, %v1692
      %v1694 = vrot.slane %v1680, %v1693
      %v1695 = vcombine.low %v952, %v964
      %v1696 = vcombine.high %v952, %v964
      %v1698 = vunpack.c.l.s4 1983009808
      %v1699 = vunpack.c.0.s8 %v1698
      %v1700 = vlaneseq
      %v1701 = vshrl.u32 %v1700, 7
      %v1702 = vsub.s32 %v1699, %v1701
      %v1703 = vrot.slane %v1695, %v1702
      %v1705 = vunpack.c.l.s4 1983009808
      %v1706 = vunpack.c.0.s8 %v1705
      %v1707 = vlaneseq
      %v1708 = vshrl.u32 %v1707, 7
      %v1709 = vsub.s32 %v1706, %v1708
      %v1710 = vrot.slane %v1696, %v1709
      %v1711 = vcombine.low %v1655, %v1671
      %v1712 = vcombine.high %v1655, %v1671
      %v1714 = vunpack.c.l.s4 1934713408
      %v1715 = vunpack.c.0.s8 %v1714
      %v1716 = vlaneseq
      %v1717 = vshrl.u32 %v1716, 7
      %v1718 = vsub.s32 %v1715, %v1717
      %v1719 = vrot.slane %v1711, %v1718
      %v1721 = vunpack.c.l.s4 1934713408
      %v1722 = vunpack.c.0.s8 %v1721
      %v1723 = vlaneseq
      %v1724 = vshrl.u32 %v1723, 7
      %v1725 = vsub.s32 %v1722, %v1724
      %v1726 = vrot.slane %v1712, %v1725
      %v1727 = vcombine.low %v1662, %v1678
      %v1728 = vcombine.high %v1662, %v1678
      %v1730 = vunpack.c.l.s4 1934713408
      %v1731 = vunpack.c.0.s8 %v1730
      %v1732 = vlaneseq
      %v1733 = vshrl.u32 %v1732, 7
      %v1734 = vsub.s32 %v1731, %v1733
      %v1735 = vrot.slane %v1727, %v1734
      %v1737 = vunpack.c.l.s4 1934713408
      %v1738 = vunpack.c.0.s8 %v1737
      %v1739 = vlaneseq
      %v1740 = vshrl.u32 %v1739, 7
      %v1741 = vsub.s32 %v1738, %v1740
      %v1742 = vrot.slane %v1728, %v1741
      %v1743 = vcombine.low %v1687, %v1703
      %v1744 = vcombine.high %v1687, %v1703
      %v1746 = vunpack.c.l.s4 1934713408
      %v1747 = vunpack.c.0.s8 %v1746
      %v1748 = vlaneseq
      %v1749 = vshrl.u32 %v1748, 7
      %v1750 = vsub.s32 %v1747, %v1749
      %v1751 = vrot.slane %v1743, %v1750
      %v1753 = vunpack.c.l.s4 1934713408
      %v1754 = vunpack.c.0.s8 %v1753
      %v1755 = vlaneseq
      %v1756 = vshrl.u32 %v1755, 7
      %v1757 = vsub.s32 %v1754, %v1756
      %v1758 = vrot.slane %v1744, %v1757
      %v1759 = vcombine.low %v1694, %v1710
      %v1760 = vcombine.high %v1694, %v1710
      %v1762 = vunpack.c.l.s4 1934713408
      %v1763 = vunpack.c.0.s8 %v1762
      %v1764 = vlaneseq
      %v1765 = vshrl.u32 %v1764, 7
      %v1766 = vsub.s32 %v1763, %v1765
      %v1767 = vrot.slane %v1759, %v1766
      %v1769 = vunpack.c.l.s4 1934713408
      %v1770 = vunpack.c.0.s8 %v1769
      %v1771 = vlaneseq
      %v1772 = vshrl.u32 %v1771, 7
      %v1773 = vsub.s32 %v1770, %v1772
      %v1774 = vrot.slane %v1760, %v1773
      %v1775 = vcombine.low %v1719, %v1751
      %v1776 = vcombine.high %v1719, %v1751
      %v1777 = vcombine.low %v1726, %v1758
      %v1778 = vcombine.high %v1726, %v1758
      %v1779 = vcombine.low %v1735, %v1767
      %v1780 = vcombine.high %v1735, %v1767
      %v1781 = vcombine.low %v1742, %v1774
      %v1782 = vcombine.high %v1742, %v1774
      %v1783 = vcombine.low %v1095, %v1097
      %v1784 = vcombine.high %v1095, %v1097
      %v1786 = vunpack.c.l.s4 1983009808
      %v1787 = vunpack.c.0.s8 %v1786
      %v1788 = vlaneseq
      %v1789 = vshrl.u32 %v1788, 7
      %v1790 = vsub.s32 %v1787, %v1789
      %v1791 = vrot.slane %v1783, %v1790
      %v1793 = vunpack.c.l.s4 1983009808
      %v1794 = vunpack.c.0.s8 %v1793
      %v1795 = vlaneseq
      %v1796 = vshrl.u32 %v1795, 7
      %v1797 = vsub.s32 %v1794, %v1796
      %v1798 = vrot.slane %v1784, %v1797
      %v1799 = vcombine.low %v1096, %v1098
      %v1800 = vcombine.high %v1096, %v1098
      %v1802 = vunpack.c.l.s4 1983009808
      %v1803 = vunpack.c.0.s8 %v1802
      %v1804 = vlaneseq
      %v1805 = vshrl.u32 %v1804, 7
      %v1806 = vsub.s32 %v1803, %v1805
      %v1807 = vrot.slane %v1799, %v1806
      %v1809 = vunpack.c.l.s4 1983009808
      %v1810 = vunpack.c.0.s8 %v1809
      %v1811 = vlaneseq
      %v1812 = vshrl.u32 %v1811, 7
      %v1813 = vsub.s32 %v1810, %v1812
      %v1814 = vrot.slane %v1800, %v1813
      %v1815 = vcombine.low %v1099, %v1101
      %v1816 = vcombine.high %v1099, %v1101
      %v1818 = vunpack.c.l.s4 1983009808
      %v1819 = vunpack.c.0.s8 %v1818
      %v1820 = vlaneseq
      %v1821 = vshrl.u32 %v1820, 7
      %v1822 = vsub.s32 %v1819, %v1821
      %v1823 = vrot.slane %v1815, %v1822
      %v1825 = vunpack.c.l.s4 1983009808
      %v1826 = vunpack.c.0.s8 %v1825
      %v1827 = vlaneseq
      %v1828 = vshrl.u32 %v1827, 7
      %v1829 = vsub.s32 %v1826, %v1828
      %v1830 = vrot.slane %v1816, %v1829
      %v1831 = vcombine.low %v1100, %v1102
      %v1832 = vcombine.high %v1100, %v1102
      %v1834 = vunpack.c.l.s4 1983009808
      %v1835 = vunpack.c.0.s8 %v1834
      %v1836 = vlaneseq
      %v1837 = vshrl.u32 %v1836, 7
      %v1838 = vsub.s32 %v1835, %v1837
      %v1839 = vrot.slane %v1831, %v1838
      %v1841 = vunpack.c.l.s4 1983009808
      %v1842 = vunpack.c.0.s8 %v1841
      %v1843 = vlaneseq
      %v1844 = vshrl.u32 %v1843, 7
      %v1845 = vsub.s32 %v1842, %v1844
      %v1846 = vrot.slane %v1832, %v1845
      %v1847 = vcombine.low %v1791, %v1807
      %v1848 = vcombine.high %v1791, %v1807
      %v1850 = vunpack.c.l.s4 1934713408
      %v1851 = vunpack.c.0.s8 %v1850
      %v1852 = vlaneseq
      %v1853 = vshrl.u32 %v1852, 7
      %v1854 = vsub.s32 %v1851, %v1853
      %v1855 = vrot.slane %v1847, %v1854
      %v1857 = vunpack.c.l.s4 1934713408
      %v1858 = vunpack.c.0.s8 %v1857
      %v1859 = vlaneseq
      %v1860 = vshrl.u32 %v1859, 7
      %v1861 = vsub.s32 %v1858, %v1860
      %v1862 = vrot.slane %v1848, %v1861
      %v1863 = vcombine.low %v1798, %v1814
      %v1864 = vcombine.high %v1798, %v1814
      %v1866 = vunpack.c.l.s4 1934713408
      %v1867 = vunpack.c.0.s8 %v1866
      %v1868 = vlaneseq
      %v1869 = vshrl.u32 %v1868, 7
      %v1870 = vsub.s32 %v1867, %v1869
      %v1871 = vrot.slane %v1863, %v1870
      %v1873 = vunpack.c.l.s4 1934713408
      %v1874 = vunpack.c.0.s8 %v1873
      %v1875 = vlaneseq
      %v1876 = vshrl.u32 %v1875, 7
      %v1877 = vsub.s32 %v1874, %v1876
      %v1878 = vrot.slane %v1864, %v1877
      %v1879 = vcombine.low %v1823, %v1839
      %v1880 = vcombine.high %v1823, %v1839
      %v1882 = vunpack.c.l.s4 1934713408
      %v1883 = vunpack.c.0.s8 %v1882
      %v1884 = vlaneseq
      %v1885 = vshrl.u32 %v1884, 7
      %v1886 = vsub.s32 %v1883, %v1885
      %v1887 = vrot.slane %v1879, %v1886
      %v1889 = vunpack.c.l.s4 1934713408
      %v1890 = vunpack.c.0.s8 %v1889
      %v1891 = vlaneseq
      %v1892 = vshrl.u32 %v1891, 7
      %v1893 = vsub.s32 %v1890, %v1892
      %v1894 = vrot.slane %v1880, %v1893
      %v1895 = vcombine.low %v1830, %v1846
      %v1896 = vcombine.high %v1830, %v1846
      %v1898 = vunpack.c.l.s4 1934713408
      %v1899 = vunpack.c.0.s8 %v1898
      %v1900 = vlaneseq
      %v1901 = vshrl.u32 %v1900, 7
      %v1902 = vsub.s32 %v1899, %v1901
      %v1903 = vrot.slane %v1895, %v1902
      %v1905 = vunpack.c.l.s4 1934713408
      %v1906 = vunpack.c.0.s8 %v1905
      %v1907 = vlaneseq
      %v1908 = vshrl.u32 %v1907, 7
      %v1909 = vsub.s32 %v1906, %v1908
      %v1910 = vrot.slane %v1896, %v1909
      %v1911 = vcombine.low %v1855, %v1887
      %v1912 = vcombine.high %v1855, %v1887
      %v1913 = vcombine.low %v1862, %v1894
      %v1914 = vcombine.high %v1862, %v1894
      %v1915 = vcombine.low %v1871, %v1903
      %v1916 = vcombine.high %v1871, %v1903
      %v1917 = vcombine.low %v1878, %v1910
      %v1918 = vcombine.high %v1878, %v1910
      %v1919 = vcombine.low %v1503, %v1505
      %v1920 = vcombine.high %v1503, %v1505
      %v1922 = vunpack.c.l.s4 1983009808
      %v1923 = vunpack.c.0.s8 %v1922
      %v1924 = vlaneseq
      %v1925 = vshrl.u32 %v1924, 7
      %v1926 = vsub.s32 %v1923, %v1925
      %v1927 = vrot.slane %v1919, %v1926
      %v1929 = vunpack.c.l.s4 1983009808
      %v1930 = vunpack.c.0.s8 %v1929
      %v1931 = vlaneseq
      %v1932 = vshrl.u32 %v1931, 7
      %v1933 = vsub.s32 %v1930, %v1932
      %v1934 = vrot.slane %v1920, %v1933
      %v1935 = vcombine.low %v1504, %v1506
      %v1936 = vcombine.high %v1504, %v1506
      %v1938 = vunpack.c.l.s4 1983009808
      %v1939 = vunpack.c.0.s8 %v1938
      %v1940 = vlaneseq
      %v1941 = vshrl.u32 %v1940, 7
      %v1942 = vsub.s32 %v1939, %v1941
      %v1943 = vrot.slane %v1935, %v1942
      %v1945 = vunpack.c.l.s4 1983009808
      %v1946 = vunpack.c.0.s8 %v1945
      %v1947 = vlaneseq
      %v1948 = vshrl.u32 %v1947, 7
      %v1949 = vsub.s32 %v1946, %v1948
      %v1950 = vrot.slane %v1936, %v1949
      %v1951 = vcombine.low %v1507, %v1509
      %v1952 = vcombine.high %v1507, %v1509
      %v1954 = vunpack.c.l.s4 1983009808
      %v1955 = vunpack.c.0.s8 %v1954
      %v1956 = vlaneseq
      %v1957 = vshrl.u32 %v1956, 7
      %v1958 = vsub.s32 %v1955, %v1957
      %v1959 = vrot.slane %v1951, %v1958
      %v1961 = vunpack.c.l.s4 1983009808
      %v1962 = vunpack.c.0.s8 %v1961
      %v1963 = vlaneseq
      %v1964 = vshrl.u32 %v1963, 7
      %v1965 = vsub.s32 %v1962, %v1964
      %v1966 = vrot.slane %v1952, %v1965
      %v1967 = vcombine.low %v1508, %v1510
      %v1968 = vcombine.high %v1508, %v1510
      %v1970 = vunpack.c.l.s4 1983009808
      %v1971 = vunpack.c.0.s8 %v1970
      %v1972 = vlaneseq
      %v1973 = vshrl.u32 %v1972, 7
      %v1974 = vsub.s32 %v1971, %v1973
      %v1975 = vrot.slane %v1967, %v1974
      %v1977 = vunpack.c.l.s4 1983009808
      %v1978 = vunpack.c.0.s8 %v1977
      %v1979 = vlaneseq
      %v1980 = vshrl.u32 %v1979, 7
      %v1981 = vsub.s32 %v1978, %v1980
      %v1982 = vrot.slane %v1968, %v1981
      %v1983 = vcombine.low %v1927, %v1943
      %v1984 = vcombine.high %v1927, %v1943
      %v1986 = vunpack.c.l.s4 1934713408
      %v1987 = vunpack.c.0.s8 %v1986
      %v1988 = vlaneseq
      %v1989 = vshrl.u32 %v1988, 7
      %v1990 = vsub.s32 %v1987, %v1989
      %v1991 = vrot.slane %v1983, %v1990
      %v1993 = vunpack.c.l.s4 1934713408
      %v1994 = vunpack.c.0.s8 %v1993
      %v1995 = vlaneseq
      %v1996 = vshrl.u32 %v1995, 7
      %v1997 = vsub.s32 %v1994, %v1996
      %v1998 = vrot.slane %v1984, %v1997
      %v1999 = vcombine.low %v1934, %v1950
      %v2000 = vcombine.high %v1934, %v1950
      %v2002 = vunpack.c.l.s4 1934713408
      %v2003 = vunpack.c.0.s8 %v2002
      %v2004 = vlaneseq
      %v2005 = vshrl.u32 %v2004, 7
      %v2006 = vsub.s32 %v2003, %v2005
      %v2007 = vrot.slane %v1999, %v2006
      %v2009 = vunpack.c.l.s4 1934713408
      %v2010 = vunpack.c.0.s8 %v2009
      %v2011 = vlaneseq
      %v2012 = vshrl.u32 %v2011, 7
      %v2013 = vsub.s32 %v2010, %v2012
      %v2014 = vrot.slane %v2000, %v2013
      %v2015 = vcombine.low %v1959, %v1975
      %v2016 = vcombine.high %v1959, %v1975
      %v2018 = vunpack.c.l.s4 1934713408
      %v2019 = vunpack.c.0.s8 %v2018
      %v2020 = vlaneseq
      %v2021 = vshrl.u32 %v2020, 7
      %v2022 = vsub.s32 %v2019, %v2021
      %v2023 = vrot.slane %v2015, %v2022
      %v2025 = vunpack.c.l.s4 1934713408
      %v2026 = vunpack.c.0.s8 %v2025
      %v2027 = vlaneseq
      %v2028 = vshrl.u32 %v2027, 7
      %v2029 = vsub.s32 %v2026, %v2028
      %v2030 = vrot.slane %v2016, %v2029
      %v2031 = vcombine.low %v1966, %v1982
      %v2032 = vcombine.high %v1966, %v1982
      %v2034 = vunpack.c.l.s4 1934713408
      %v2035 = vunpack.c.0.s8 %v2034
      %v2036 = vlaneseq
      %v2037 = vshrl.u32 %v2036, 7
      %v2038 = vsub.s32 %v2035, %v2037
      %v2039 = vrot.slane %v2031, %v2038
      %v2041 = vunpack.c.l.s4 1934713408
      %v2042 = vunpack.c.0.s8 %v2041
      %v2043 = vlaneseq
      %v2044 = vshrl.u32 %v2043, 7
      %v2045 = vsub.s32 %v2042, %v2044
      %v2046 = vrot.slane %v2032, %v2045
      %v2047 = vcombine.low %v1991, %v2023
      %v2048 = vcombine.high %v1991, %v2023
      %v2049 = vcombine.low %v1998, %v2030
      %v2050 = vcombine.high %v1998, %v2030
      %v2051 = vcombine.low %v2007, %v2039
      %v2052 = vcombine.high %v2007, %v2039
      %v2053 = vcombine.low %v2014, %v2046
      %v2054 = vcombine.high %v2014, %v2046
      %v2055 = vcombine.low %v1231, %v1233
      %v2056 = vcombine.high %v1231, %v1233
      %v2058 = vunpack.c.l.s4 1983009808
      %v2059 = vunpack.c.0.s8 %v2058
      %v2060 = vlaneseq
      %v2061 = vshrl.u32 %v2060, 7
      %v2062 = vsub.s32 %v2059, %v2061
      %v2063 = vrot.slane %v2055, %v2062
      %v2065 = vunpack.c.l.s4 1983009808
      %v2066 = vunpack.c.0.s8 %v2065
      %v2067 = vlaneseq
      %v2068 = vshrl.u32 %v2067, 7
      %v2069 = vsub.s32 %v2066, %v2068
      %v2070 = vrot.slane %v2056, %v2069
      %v2071 = vcombine.low %v1232, %v1234
      %v2072 = vcombine.high %v1232, %v1234
      %v2074 = vunpack.c.l.s4 1983009808
      %v2075 = vunpack.c.0.s8 %v2074
      %v2076 = vlaneseq
      %v2077 = vshrl.u32 %v2076, 7
      %v2078 = vsub.s32 %v2075, %v2077
      %v2079 = vrot.slane %v2071, %v2078
      %v2081 = vunpack.c.l.s4 1983009808
      %v2082 = vunpack.c.0.s8 %v2081
      %v2083 = vlaneseq
      %v2084 = vshrl.u32 %v2083, 7
      %v2085 = vsub.s32 %v2082, %v2084
      %v2086 = vrot.slane %v2072, %v2085
      %v2087 = vcombine.low %v1235, %v1237
      %v2088 = vcombine.high %v1235, %v1237
      %v2090 = vunpack.c.l.s4 1983009808
      %v2091 = vunpack.c.0.s8 %v2090
      %v2092 = vlaneseq
      %v2093 = vshrl.u32 %v2092, 7
      %v2094 = vsub.s32 %v2091, %v2093
      %v2095 = vrot.slane %v2087, %v2094
      %v2097 = vunpack.c.l.s4 1983009808
      %v2098 = vunpack.c.0.s8 %v2097
      %v2099 = vlaneseq
      %v2100 = vshrl.u32 %v2099, 7
      %v2101 = vsub.s32 %v2098, %v2100
      %v2102 = vrot.slane %v2088, %v2101
      %v2103 = vcombine.low %v1236, %v1238
      %v2104 = vcombine.high %v1236, %v1238
      %v2106 = vunpack.c.l.s4 1983009808
      %v2107 = vunpack.c.0.s8 %v2106
      %v2108 = vlaneseq
      %v2109 = vshrl.u32 %v2108, 7
      %v2110 = vsub.s32 %v2107, %v2109
      %v2111 = vrot.slane %v2103, %v2110
      %v2113 = vunpack.c.l.s4 1983009808
      %v2114 = vunpack.c.0.s8 %v2113
      %v2115 = vlaneseq
      %v2116 = vshrl.u32 %v2115, 7
      %v2117 = vsub.s32 %v2114, %v2116
      %v2118 = vrot.slane %v2104, %v2117
      %v2119 = vcombine.low %v2063, %v2079
      %v2120 = vcombine.high %v2063, %v2079
      %v2122 = vunpack.c.l.s4 1934713408
      %v2123 = vunpack.c.0.s8 %v2122
      %v2124 = vlaneseq
      %v2125 = vshrl.u32 %v2124, 7
      %v2126 = vsub.s32 %v2123, %v2125
      %v2127 = vrot.slane %v2119, %v2126
      %v2129 = vunpack.c.l.s4 1934713408
      %v2130 = vunpack.c.0.s8 %v2129
      %v2131 = vlaneseq
      %v2132 = vshrl.u32 %v2131, 7
      %v2133 = vsub.s32 %v2130, %v2132
      %v2134 = vrot.slane %v2120, %v2133
      %v2135 = vcombine.low %v2070, %v2086
      %v2136 = vcombine.high %v2070, %v2086
      %v2138 = vunpack.c.l.s4 1934713408
      %v2139 = vunpack.c.0.s8 %v2138
      %v2140 = vlaneseq
      %v2141 = vshrl.u32 %v2140, 7
      %v2142 = vsub.s32 %v2139, %v2141
      %v2143 = vrot.slane %v2135, %v2142
      %v2145 = vunpack.c.l.s4 1934713408
      %v2146 = vunpack.c.0.s8 %v2145
      %v2147 = vlaneseq
      %v2148 = vshrl.u32 %v2147, 7
      %v2149 = vsub.s32 %v2146, %v2148
      %v2150 = vrot.slane %v2136, %v2149
      %v2151 = vcombine.low %v2095, %v2111
      %v2152 = vcombine.high %v2095, %v2111
      %v2154 = vunpack.c.l.s4 1934713408
      %v2155 = vunpack.c.0.s8 %v2154
      %v2156 = vlaneseq
      %v2157 = vshrl.u32 %v2156, 7
      %v2158 = vsub.s32 %v2155, %v2157
      %v2159 = vrot.slane %v2151, %v2158
      %v2161 = vunpack.c.l.s4 1934713408
      %v2162 = vunpack.c.0.s8 %v2161
      %v2163 = vlaneseq
      %v2164 = vshrl.u32 %v2163, 7
      %v2165 = vsub.s32 %v2162, %v2164
      %v2166 = vrot.slane %v2152, %v2165
      %v2167 = vcombine.low %v2102, %v2118
      %v2168 = vcombine.high %v2102, %v2118
      %v2170 = vunpack.c.l.s4 1934713408
      %v2171 = vunpack.c.0.s8 %v2170
      %v2172 = vlaneseq
      %v2173 = vshrl.u32 %v2172, 7
      %v2174 = vsub.s32 %v2171, %v2173
      %v2175 = vrot.slane %v2167, %v2174
      %v2177 = vunpack.c.l.s4 1934713408
      %v2178 = vunpack.c.0.s8 %v2177
      %v2179 = vlaneseq
      %v2180 = vshrl.u32 %v2179, 7
      %v2181 = vsub.s32 %v2178, %v2180
      %v2182 = vrot.slane %v2168, %v2181
      %v2183 = vcombine.low %v2127, %v2159
      %v2184 = vcombine.high %v2127, %v2159
      %v2185 = vcombine.low %v2134, %v2166
      %v2186 = vcombine.high %v2134, %v2166
      %v2187 = vcombine.low %v2143, %v2175
      %v2188 = vcombine.high %v2143, %v2175
      %v2189 = vcombine.low %v2150, %v2182
      %v2190 = vcombine.high %v2150, %v2182
      %v2191 = vcombine.low %v1639, %v1641
      %v2192 = vcombine.high %v1639, %v1641
      %v2194 = vunpack.c.l.s4 1983009808
      %v2195 = vunpack.c.0.s8 %v2194
      %v2196 = vlaneseq
      %v2197 = vshrl.u32 %v2196, 7
      %v2198 = vsub.s32 %v2195, %v2197
      %v2199 = vrot.slane %v2191, %v2198
      %v2201 = vunpack.c.l.s4 1983009808
      %v2202 = vunpack.c.0.s8 %v2201
      %v2203 = vlaneseq
      %v2204 = vshrl.u32 %v2203, 7
      %v2205 = vsub.s32 %v2202, %v2204
      %v2206 = vrot.slane %v2192, %v2205
      %v2207 = vcombine.low %v1640, %v1642
      %v2208 = vcombine.high %v1640, %v1642
      %v2210 = vunpack.c.l.s4 1983009808
      %v2211 = vunpack.c.0.s8 %v2210
      %v2212 = vlaneseq
      %v2213 = vshrl.u32 %v2212, 7
      %v2214 = vsub.s32 %v2211, %v2213
      %v2215 = vrot.slane %v2207, %v2214
      %v2217 = vunpack.c.l.s4 1983009808
      %v2218 = vunpack.c.0.s8 %v2217
      %v2219 = vlaneseq
      %v2220 = vshrl.u32 %v2219, 7
      %v2221 = vsub.s32 %v2218, %v2220
      %v2222 = vrot.slane %v2208, %v2221
      %v2223 = vcombine.low %v1643, %v1645
      %v2224 = vcombine.high %v1643, %v1645
      %v2226 = vunpack.c.l.s4 1983009808
      %v2227 = vunpack.c.0.s8 %v2226
      %v2228 = vlaneseq
      %v2229 = vshrl.u32 %v2228, 7
      %v2230 = vsub.s32 %v2227, %v2229
      %v2231 = vrot.slane %v2223, %v2230
      %v2233 = vunpack.c.l.s4 1983009808
      %v2234 = vunpack.c.0.s8 %v2233
      %v2235 = vlaneseq
      %v2236 = vshrl.u32 %v2235, 7
      %v2237 = vsub.s32 %v2234, %v2236
      %v2238 = vrot.slane %v2224, %v2237
      %v2239 = vcombine.low %v1644, %v1646
      %v2240 = vcombine.high %v1644, %v1646
      %v2242 = vunpack.c.l.s4 1983009808
      %v2243 = vunpack.c.0.s8 %v2242
      %v2244 = vlaneseq
      %v2245 = vshrl.u32 %v2244, 7
      %v2246 = vsub.s32 %v2243, %v2245
      %v2247 = vrot.slane %v2239, %v2246
      %v2249 = vunpack.c.l.s4 1983009808
      %v2250 = vunpack.c.0.s8 %v2249
      %v2251 = vlaneseq
      %v2252 = vshrl.u32 %v2251, 7
      %v2253 = vsub.s32 %v2250, %v2252
      %v2254 = vrot.slane %v2240, %v2253
      %v2255 = vcombine.low %v2199, %v2215
      %v2256 = vcombine.high %v2199, %v2215
      %v2258 = vunpack.c.l.s4 1934713408
      %v2259 = vunpack.c.0.s8 %v2258
      %v2260 = vlaneseq
      %v2261 = vshrl.u32 %v2260, 7
      %v2262 = vsub.s32 %v2259, %v2261
      %v2263 = vrot.slane %v2255, %v2262
      %v2265 = vunpack.c.l.s4 1934713408
      %v2266 = vunpack.c.0.s8 %v2265
      %v2267 = vlaneseq
      %v2268 = vshrl.u32 %v2267, 7
      %v2269 = vsub.s32 %v2266, %v2268
      %v2270 = vrot.slane %v2256, %v2269
      %v2271 = vcombine.low %v2206, %v2222
      %v2272 = vcombine.high %v2206, %v2222
      %v2274 = vunpack.c.l.s4 1934713408
      %v2275 = vunpack.c.0.s8 %v2274
      %v2276 = vlaneseq
      %v2277 = vshrl.u32 %v2276, 7
      %v2278 = vsub.s32 %v2275, %v2277
      %v2279 = vrot.slane %v2271, %v2278
      %v2281 = vunpack.c.l.s4 1934713408
      %v2282 = vunpack.c.0.s8 %v2281
      %v2283 = vlaneseq
      %v2284 = vshrl.u32 %v2283, 7
      %v2285 = vsub.s32 %v2282, %v2284
      %v2286 = vrot.slane %v2272, %v2285
      %v2287 = vcombine.low %v2231, %v2247
      %v2288 = vcombine.high %v2231, %v2247
      %v2290 = vunpack.c.l.s4 1934713408
      %v2291 = vunpack.c.0.s8 %v2290
      %v2292 = vlaneseq
      %v2293 = vshrl.u32 %v2292, 7
      %v2294 = vsub.s32 %v2291, %v2293
      %v2295 = vrot.slane %v2287, %v2294
      %v2297 = vunpack.c.l.s4 1934713408
      %v2298 = vunpack.c.0.s8 %v2297
      %v2299 = vlaneseq
      %v2300 = vshrl.u32 %v2299, 7
      %v2301 = vsub.s32 %v2298, %v2300
      %v2302 = vrot.slane %v2288, %v2301
      %v2303 = vcombine.low %v2238, %v2254
      %v2304 = vcombine.high %v2238, %v2254
      %v2306 = vunpack.c.l.s4 1934713408
      %v2307 = vunpack.c.0.s8 %v2306
      %v2308 = vlaneseq
      %v2309 = vshrl.u32 %v2308, 7
      %v2310 = vsub.s32 %v2307, %v2309
      %v2311 = vrot.slane %v2303, %v2310
      %v2313 = vunpack.c.l.s4 1934713408
      %v2314 = vunpack.c.0.s8 %v2313
      %v2315 = vlaneseq
      %v2316 = vshrl.u32 %v2315, 7
      %v2317 = vsub.s32 %v2314, %v2316
      %v2318 = vrot.slane %v2304, %v2317
      %v2319 = vcombine.low %v2263, %v2295
      %v2320 = vcombine.high %v2263, %v2295
      %v2321 = vcombine.low %v2270, %v2302
      %v2322 = vcombine.high %v2270, %v2302
      %v2323 = vcombine.low %v2279, %v2311
      %v2324 = vcombine.high %v2279, %v2311
      %v2325 = vcombine.low %v2286, %v2318
      %v2326 = vcombine.high %v2286, %v2318
      %v2327 = vcombine.low %v1367, %v1369
      %v2328 = vcombine.high %v1367, %v1369
      %v2330 = vunpack.c.l.s4 1983009808
      %v2331 = vunpack.c.0.s8 %v2330
      %v2332 = vlaneseq
      %v2333 = vshrl.u32 %v2332, 7
      %v2334 = vsub.s32 %v2331, %v2333
      %v2335 = vrot.slane %v2327, %v2334
      %v2337 = vunpack.c.l.s4 1983009808
      %v2338 = vunpack.c.0.s8 %v2337
      %v2339 = vlaneseq
      %v2340 = vshrl.u32 %v2339, 7
      %v2341 = vsub.s32 %v2338, %v2340
      %v2342 = vrot.slane %v2328, %v2341
      %v2343 = vcombine.low %v1368, %v1370
      %v2344 = vcombine.high %v1368, %v1370
      %v2346 = vunpack.c.l.s4 1983009808
      %v2347 = vunpack.c.0.s8 %v2346
      %v2348 = vlaneseq
      %v2349 = vshrl.u32 %v2348, 7
      %v2350 = vsub.s32 %v2347, %v2349
      %v2351 = vrot.slane %v2343, %v2350
      %v2353 = vunpack.c.l.s4 1983009808
      %v2354 = vunpack.c.0.s8 %v2353
      %v2355 = vlaneseq
      %v2356 = vshrl.u32 %v2355, 7
      %v2357 = vsub.s32 %v2354, %v2356
      %v2358 = vrot.slane %v2344, %v2357
      %v2359 = vcombine.low %v1371, %v1373
      %v2360 = vcombine.high %v1371, %v1373
      %v2362 = vunpack.c.l.s4 1983009808
      %v2363 = vunpack.c.0.s8 %v2362
      %v2364 = vlaneseq
      %v2365 = vshrl.u32 %v2364, 7
      %v2366 = vsub.s32 %v2363, %v2365
      %v2367 = vrot.slane %v2359, %v2366
      %v2369 = vunpack.c.l.s4 1983009808
      %v2370 = vunpack.c.0.s8 %v2369
      %v2371 = vlaneseq
      %v2372 = vshrl.u32 %v2371, 7
      %v2373 = vsub.s32 %v2370, %v2372
      %v2374 = vrot.slane %v2360, %v2373
      %v2375 = vcombine.low %v1372, %v1374
      %v2376 = vcombine.high %v1372, %v1374
      %v2378 = vunpack.c.l.s4 1983009808
      %v2379 = vunpack.c.0.s8 %v2378
      %v2380 = vlaneseq
      %v2381 = vshrl.u32 %v2380, 7
      %v2382 = vsub.s32 %v2379, %v2381
      %v2383 = vrot.slane %v2375, %v2382
      %v2385 = vunpack.c.l.s4 1983009808
      %v2386 = vunpack.c.0.s8 %v2385
      %v2387 = vlaneseq
      %v2388 = vshrl.u32 %v2387, 7
      %v2389 = vsub.s32 %v2386, %v2388
      %v2390 = vrot.slane %v2376, %v2389
      %v2391 = vcombine.low %v2335, %v2351
      %v2392 = vcombine.high %v2335, %v2351
      %v2394 = vunpack.c.l.s4 1934713408
      %v2395 = vunpack.c.0.s8 %v2394
      %v2396 = vlaneseq
      %v2397 = vshrl.u32 %v2396, 7
      %v2398 = vsub.s32 %v2395, %v2397
      %v2399 = vrot.slane %v2391, %v2398
      %v2401 = vunpack.c.l.s4 1934713408
      %v2402 = vunpack.c.0.s8 %v2401
      %v2403 = vlaneseq
      %v2404 = vshrl.u32 %v2403, 7
      %v2405 = vsub.s32 %v2402, %v2404
      %v2406 = vrot.slane %v2392, %v2405
      %v2407 = vcombine.low %v2342, %v2358
      %v2408 = vcombine.high %v2342, %v2358
      %v2410 = vunpack.c.l.s4 1934713408
      %v2411 = vunpack.c.0.s8 %v2410
      %v2412 = vlaneseq
      %v2413 = vshrl.u32 %v2412, 7
      %v2414 = vsub.s32 %v2411, %v2413
      %v2415 = vrot.slane %v2407, %v2414
      %v2417 = vunpack.c.l.s4 1934713408
      %v2418 = vunpack.c.0.s8 %v2417
      %v2419 = vlaneseq
      %v2420 = vshrl.u32 %v2419, 7
      %v2421 = vsub.s32 %v2418, %v2420
      %v2422 = vrot.slane %v2408, %v2421
      %v2423 = vcombine.low %v2367, %v2383
      %v2424 = vcombine.high %v2367, %v2383
      %v2426 = vunpack.c.l.s4 1934713408
      %v2427 = vunpack.c.0.s8 %v2426
      %v2428 = vlaneseq
      %v2429 = vshrl.u32 %v2428, 7
      %v2430 = vsub.s32 %v2427, %v2429
      %v2431 = vrot.slane %v2423, %v2430
      %v2433 = vunpack.c.l.s4 1934713408
      %v2434 = vunpack.c.0.s8 %v2433
      %v2435 = vlaneseq
      %v2436 = vshrl.u32 %v2435, 7
      %v2437 = vsub.s32 %v2434, %v2436
      %v2438 = vrot.slane %v2424, %v2437
      %v2439 = vcombine.low %v2374, %v2390
      %v2440 = vcombine.high %v2374, %v2390
      %v2442 = vunpack.c.l.s4 1934713408
      %v2443 = vunpack.c.0.s8 %v2442
      %v2444 = vlaneseq
      %v2445 = vshrl.u32 %v2444, 7
      %v2446 = vsub.s32 %v2443, %v2445
      %v2447 = vrot.slane %v2439, %v2446
      %v2449 = vunpack.c.l.s4 1934713408
      %v2450 = vunpack.c.0.s8 %v2449
      %v2451 = vlaneseq
      %v2452 = vshrl.u32 %v2451, 7
      %v2453 = vsub.s32 %v2450, %v2452
      %v2454 = vrot.slane %v2440, %v2453
      %v2455 = vcombine.low %v2399, %v2431
      %v2456 = vcombine.high %v2399, %v2431
      %v2457 = vcombine.low %v2406, %v2438
      %v2458 = vcombine.high %v2406, %v2438
      %v2459 = vcombine.low %v2415, %v2447
      %v2460 = vcombine.high %v2415, %v2447
      %v2461 = vcombine.low %v2422, %v2454
      %v2462 = vcombine.high %v2422, %v2454
      %v2463 = vcombine.low %v1775, %v1777
      %v2464 = vcombine.high %v1775, %v1777
      %v2466 = vunpack.c.l.s4 1983009808
      %v2467 = vunpack.c.0.s8 %v2466
      %v2468 = vlaneseq
      %v2469 = vshrl.u32 %v2468, 7
      %v2470 = vsub.s32 %v2467, %v2469
      %v2471 = vrot.slane %v2463, %v2470
      %v2473 = vunpack.c.l.s4 1983009808
      %v2474 = vunpack.c.0.s8 %v2473
      %v2475 = vlaneseq
      %v2476 = vshrl.u32 %v2475, 7
      %v2477 = vsub.s32 %v2474, %v2476
      %v2478 = vrot.slane %v2464, %v2477
      %v2479 = vcombine.low %v1776, %v1778
      %v2480 = vcombine.high %v1776, %v1778
      %v2482 = vunpack.c.l.s4 1983009808
      %v2483 = vunpack.c.0.s8 %v2482
      %v2484 = vlaneseq
      %v2485 = vshrl.u32 %v2484, 7
      %v2486 = vsub.s32 %v2483, %v2485
      %v2487 = vrot.slane %v2479, %v2486
      %v2489 = vunpack.c.l.s4 1983009808
      %v2490 = vunpack.c.0.s8 %v2489
      %v2491 = vlaneseq
      %v2492 = vshrl.u32 %v2491, 7
      %v2493 = vsub.s32 %v2490, %v2492
      %v2494 = vrot.slane %v2480, %v2493
      %v2495 = vcombine.low %v1779, %v1781
      %v2496 = vcombine.high %v1779, %v1781
      %v2498 = vunpack.c.l.s4 1983009808
      %v2499 = vunpack.c.0.s8 %v2498
      %v2500 = vlaneseq
      %v2501 = vshrl.u32 %v2500, 7
      %v2502 = vsub.s32 %v2499, %v2501
      %v2503 = vrot.slane %v2495, %v2502
      %v2505 = vunpack.c.l.s4 1983009808
      %v2506 = vunpack.c.0.s8 %v2505
      %v2507 = vlaneseq
      %v2508 = vshrl.u32 %v2507, 7
      %v2509 = vsub.s32 %v2506, %v2508
      %v2510 = vrot.slane %v2496, %v2509
      %v2511 = vcombine.low %v1780, %v1782
      %v2512 = vcombine.high %v1780, %v1782
      %v2514 = vunpack.c.l.s4 1983009808
      %v2515 = vunpack.c.0.s8 %v2514
      %v2516 = vlaneseq
      %v2517 = vshrl.u32 %v2516, 7
      %v2518 = vsub.s32 %v2515, %v2517
      %v2519 = vrot.slane %v2511, %v2518
      %v2521 = vunpack.c.l.s4 1983009808
      %v2522 = vunpack.c.0.s8 %v2521
      %v2523 = vlaneseq
      %v2524 = vshrl.u32 %v2523, 7
      %v2525 = vsub.s32 %v2522, %v2524
      %v2526 = vrot.slane %v2512, %v2525
      %v2527 = vcombine.low %v2471, %v2487
      %v2528 = vcombine.high %v2471, %v2487
      %v2530 = vunpack.c.l.s4 1934713408
      %v2531 = vunpack.c.0.s8 %v2530
      %v2532 = vlaneseq
      %v2533 = vshrl.u32 %v2532, 7
      %v2534 = vsub.s32 %v2531, %v2533
      %v2535 = vrot.slane %v2527, %v2534
      %v2537 = vunpack.c.l.s4 1934713408
      %v2538 = vunpack.c.0.s8 %v2537
      %v2539 = vlaneseq
      %v2540 = vshrl.u32 %v2539, 7
      %v2541 = vsub.s32 %v2538, %v2540
      %v2542 = vrot.slane %v2528, %v2541
      %v2543 = vcombine.low %v2478, %v2494
      %v2544 = vcombine.high %v2478, %v2494
      %v2546 = vunpack.c.l.s4 1934713408
      %v2547 = vunpack.c.0.s8 %v2546
      %v2548 = vlaneseq
      %v2549 = vshrl.u32 %v2548, 7
      %v2550 = vsub.s32 %v2547, %v2549
      %v2551 = vrot.slane %v2543, %v2550
      %v2553 = vunpack.c.l.s4 1934713408
      %v2554 = vunpack.c.0.s8 %v2553
      %v2555 = vlaneseq
      %v2556 = vshrl.u32 %v2555, 7
      %v2557 = vsub.s32 %v2554, %v2556
      %v2558 = vrot.slane %v2544, %v2557
      %v2559 = vcombine.low %v2503, %v2519
      %v2560 = vcombine.high %v2503, %v2519
      %v2562 = vunpack.c.l.s4 1934713408
      %v2563 = vunpack.c.0.s8 %v2562
      %v2564 = vlaneseq
      %v2565 = vshrl.u32 %v2564, 7
      %v2566 = vsub.s32 %v2563, %v2565
      %v2567 = vrot.slane %v2559, %v2566
      %v2569 = vunpack.c.l.s4 1934713408
      %v2570 = vunpack.c.0.s8 %v2569
      %v2571 = vlaneseq
      %v2572 = vshrl.u32 %v2571, 7
      %v2573 = vsub.s32 %v2570, %v2572
      %v2574 = vrot.slane %v2560, %v2573
      %v2575 = vcombine.low %v2510, %v2526
      %v2576 = vcombine.high %v2510, %v2526
      %v2578 = vunpack.c.l.s4 1934713408
      %v2579 = vunpack.c.0.s8 %v2578
      %v2580 = vlaneseq
      %v2581 = vshrl.u32 %v2580, 7
      %v2582 = vsub.s32 %v2579, %v2581
      %v2583 = vrot.slane %v2575, %v2582
      %v2585 = vunpack.c.l.s4 1934713408
      %v2586 = vunpack.c.0.s8 %v2585
      %v2587 = vlaneseq
      %v2588 = vshrl.u32 %v2587, 7
      %v2589 = vsub.s32 %v2586, %v2588
      %v2590 = vrot.slane %v2576, %v2589
      %v2591 = vcombine.low %v2535, %v2567
      %v2592 = vcombine.high %v2535, %v2567
      %v2593 = vcombine.low %v2542, %v2574
      %v2594 = vcombine.high %v2542, %v2574
      %v2595 = vcombine.low %v2551, %v2583
      %v2596 = vcombine.high %v2551, %v2583
      %v2597 = vcombine.low %v2558, %v2590
      %v2598 = vcombine.high %v2558, %v2590
      %v2599 = vpack.c.bf16 %v2047, %v1911
      %v2600 = vpack.c.bf16 %v2048, %v1912
      %v2601 = vpack.c.bf16 %v2049, %v1913
      %v2602 = vpack.c.bf16 %v2050, %v1914
      %v2603 = vpack.c.bf16 %v2051, %v1915
      %v2604 = vpack.c.bf16 %v2052, %v1916
      %v2605 = vpack.c.bf16 %v2053, %v1917
      %v2606 = vpack.c.bf16 %v2054, %v1918
      %v2607 = vpack.c.bf16 %v2319, %v2183
      %v2608 = vpack.c.bf16 %v2320, %v2184
      %v2609 = vpack.c.bf16 %v2321, %v2185
      %v2610 = vpack.c.bf16 %v2322, %v2186
      %v2611 = vpack.c.bf16 %v2323, %v2187
      %v2612 = vpack.c.bf16 %v2324, %v2188
      %v2613 = vpack.c.bf16 %v2325, %v2189
      %v2614 = vpack.c.bf16 %v2326, %v2190
      %v2615 = vpack.c.bf16 %v2591, %v2455
      %v2616 = vpack.c.bf16 %v2592, %v2456
      %v2617 = vpack.c.bf16 %v2593, %v2457
      %v2618 = vpack.c.bf16 %v2594, %v2458
      %v2619 = vpack.c.bf16 %v2595, %v2459
      %v2620 = vpack.c.bf16 %v2596, %v2460
      %v2621 = vpack.c.bf16 %v2597, %v2461
      %v2622 = vpack.c.bf16 %v2598, %v2462
      %vm2623 = vcmask 31744
      %v2625 = vsel %vm2623, %v2599, 0
      %v2628 = vsel %vm2623, %v2607, 0
      %2630 = vmatprep.subr.bf16.mxu0 0
      %2631 = vmatpush1.bf16.xpose.msra.mxu0 %v2628
      %2632 = vmatprep.subr.bf16.mxu0 0
      %2633 = vmatpush1.bf16.xpose.msra.mxu0 0
      %2634 = vmatprep.subr.bf16.mxu0 0
      %2635 = vmatpush1.bf16.xpose.msra.mxu0 0
      %2636 = vmatprep.subr.bf16.mxu0 0
      %2637 = vmatpush1.bf16.xpose.msra.mxu0 0
      %2638 = vmatprep.subr.bf16.mxu0 0
      %2639 = vmatpush1.bf16.xpose.msra.mxu0 0
      %2640 = vmatprep.subr.bf16.mxu0 0
      %2641 = vmatpush1.bf16.xpose.msra.mxu0 0
      %2642 = vmatprep.subr.bf16.mxu0 0
      %2643 = vmatpush1.bf16.xpose.msra.mxu0 0
      %2644 = vmatprep.subr.bf16.mxu0 0
      %2645 = vmatpush1.bf16.xpose.msra.mxu0 0
      %2646 = vmatprep.subr.bf16.mxu0 0
      %2647 = vmatpush1.bf16.xpose.msra.mxu0 0
      %2648 = vmatprep.subr.bf16.mxu0 0
      %2649 = vmatpush1.bf16.xpose.msra.mxu0 0
      %2650 = vmatprep.subr.bf16.mxu0 0
      %2651 = vmatpush1.bf16.xpose.msra.mxu0 0
      %2652 = vmatprep.subr.bf16.mxu0 0
      %2653 = vmatpush1.bf16.xpose.msra.mxu0 0
      %2654 = vmatprep.subr.bf16.mxu0 0
      %2655 = vmatpush1.bf16.xpose.msra.mxu0 0
      %2656 = vmatprep.subr.bf16.mxu0 0
      %2657 = vmatpush1.bf16.xpose.msra.mxu0 0
      %2658 = vmatprep.subr.bf16.mxu0 0
      %2659 = vmatpush1.bf16.xpose.msra.mxu0 0
      %2660 = vmatprep.subr.bf16.mxu0 0
      %2661 = vmatpush1.bf16.xpose.msra.mxu0 0
      %2662 = vmatprep.mubr.bf16.mxu0 0
      %2663 = vmatmul.mubr.bf16.gmra.mrb[0].mxu0 %v2625
      %v2664 = vpop.f32.mrb[0].mxu0
      %v2665 = vadd.f32 0.0, %v2664
      %v2666 = vpop.f32.mrb[0].mxu0
      %v2667 = vpop.f32.mrb[0].mxu0
      %v2668 = vadd.f32 0.0, %v2667
      %v2669 = vpop.f32.mrb[0].mxu0
      %2670 = vdwg.mxu0
      %v2672 = vsel %vm2623, %v2600, 0
      %v2675 = vsel %vm2623, %v2608, 0
      %2677 = vmatprep.subr.bf16.mxu0 0
      %2678 = vmatpush1.bf16.xpose.msra.mxu0 %v2675
      %2679 = vmatprep.subr.bf16.mxu0 0
      %2680 = vmatpush1.bf16.xpose.msra.mxu0 0
      %2681 = vmatprep.subr.bf16.mxu0 0
      %2682 = vmatpush1.bf16.xpose.msra.mxu0 0
      %2683 = vmatprep.subr.bf16.mxu0 0
      %2684 = vmatpush1.bf16.xpose.msra.mxu0 0
      %2685 = vmatprep.subr.bf16.mxu0 0
      %2686 = vmatpush1.bf16.xpose.msra.mxu0 0
      %2687 = vmatprep.subr.bf16.mxu0 0
      %2688 = vmatpush1.bf16.xpose.msra.mxu0 0
      %2689 = vmatprep.subr.bf16.mxu0 0
      %2690 = vmatpush1.bf16.xpose.msra.mxu0 0
      %2691 = vmatprep.subr.bf16.mxu0 0
      %2692 = vmatpush1.bf16.xpose.msra.mxu0 0
      %2693 = vmatprep.subr.bf16.mxu0 0
      %2694 = vmatpush1.bf16.xpose.msra.mxu0 0
      %2695 = vmatprep.subr.bf16.mxu0 0
      %2696 = vmatpush1.bf16.xpose.msra.mxu0 0
      %2697 = vmatprep.subr.bf16.mxu0 0
      %2698 = vmatpush1.bf16.xpose.msra.mxu0 0
      %2699 = vmatprep.subr.bf16.mxu0 0
      %2700 = vmatpush1.bf16.xpose.msra.mxu0 0
      %2701 = vmatprep.subr.bf16.mxu0 0
      %2702 = vmatpush1.bf16.xpose.msra.mxu0 0
      %2703 = vmatprep.subr.bf16.mxu0 0
      %2704 = vmatpush1.bf16.xpose.msra.mxu0 0
      %2705 = vmatprep.subr.bf16.mxu0 0
      %2706 = vmatpush1.bf16.xpose.msra.mxu0 0
      %2707 = vmatprep.subr.bf16.mxu0 0
      %2708 = vmatpush1.bf16.xpose.msra.mxu0 0
      %2709 = vmatprep.mubr.bf16.mxu0 0
      %2710 = vmatmul.mubr.bf16.gmra.mrb[0].mxu0 %v2672
      %v2711 = vpop.f32.mrb[0].mxu0
      %v2712 = vadd.f32 0.0, %v2711
      %v2713 = vpop.f32.mrb[0].mxu0
      %v2714 = vpop.f32.mrb[0].mxu0
      %v2715 = vadd.f32 0.0, %v2714
      %v2716 = vpop.f32.mrb[0].mxu0
      %2717 = vdwg.mxu0
      %v2719 = vsel %vm2623, %v2601, 0
      %v2722 = vsel %vm2623, %v2609, 0
      %2724 = vmatprep.subr.bf16.mxu0 0
      %2725 = vmatpush1.bf16.xpose.msra.mxu0 %v2722
      %2726 = vmatprep.subr.bf16.mxu0 0
      %2727 = vmatpush1.bf16.xpose.msra.mxu0 0
      %2728 = vmatprep.subr.bf16.mxu0 0
      %2729 = vmatpush1.bf16.xpose.msra.mxu0 0
      %2730 = vmatprep.subr.bf16.mxu0 0
      %2731 = vmatpush1.bf16.xpose.msra.mxu0 0
      %2732 = vmatprep.subr.bf16.mxu0 0
      %2733 = vmatpush1.bf16.xpose.msra.mxu0 0
      %2734 = vmatprep.subr.bf16.mxu0 0
      %2735 = vmatpush1.bf16.xpose.msra.mxu0 0
      %2736 = vmatprep.subr.bf16.mxu0 0
      %2737 = vmatpush1.bf16.xpose.msra.mxu0 0
      %2738 = vmatprep.subr.bf16.mxu0 0
      %2739 = vmatpush1.bf16.xpose.msra.mxu0 0
      %2740 = vmatprep.subr.bf16.mxu0 0
      %2741 = vmatpush1.bf16.xpose.msra.mxu0 0
      %2742 = vmatprep.subr.bf16.mxu0 0
      %2743 = vmatpush1.bf16.xpose.msra.mxu0 0
      %2744 = vmatprep.subr.bf16.mxu0 0
      %2745 = vmatpush1.bf16.xpose.msra.mxu0 0
      %2746 = vmatprep.subr.bf16.mxu0 0
      %2747 = vmatpush1.bf16.xpose.msra.mxu0 0
      %2748 = vmatprep.subr.bf16.mxu0 0
      %2749 = vmatpush1.bf16.xpose.msra.mxu0 0
      %2750 = vmatprep.subr.bf16.mxu0 0
      %2751 = vmatpush1.bf16.xpose.msra.mxu0 0
      %2752 = vmatprep.subr.bf16.mxu0 0
      %2753 = vmatpush1.bf16.xpose.msra.mxu0 0
      %2754 = vmatprep.subr.bf16.mxu0 0
      %2755 = vmatpush1.bf16.xpose.msra.mxu0 0
      %2756 = vmatprep.mubr.bf16.mxu0 0
      %2757 = vmatmul.mubr.bf16.gmra.mrb[0].mxu0 %v2719
      %v2758 = vpop.f32.mrb[0].mxu0
      %v2759 = vadd.f32 0.0, %v2758
      %v2760 = vpop.f32.mrb[0].mxu0
      %v2761 = vpop.f32.mrb[0].mxu0
      %v2762 = vadd.f32 0.0, %v2761
      %v2763 = vpop.f32.mrb[0].mxu0
      %2764 = vdwg.mxu0
      %v2766 = vsel %vm2623, %v2602, 0
      %v2769 = vsel %vm2623, %v2610, 0
      %2771 = vmatprep.subr.bf16.mxu0 0
      %2772 = vmatpush1.bf16.xpose.msra.mxu0 %v2769
      %2773 = vmatprep.subr.bf16.mxu0 0
      %2774 = vmatpush1.bf16.xpose.msra.mxu0 0
      %2775 = vmatprep.subr.bf16.mxu0 0
      %2776 = vmatpush1.bf16.xpose.msra.mxu0 0
      %2777 = vmatprep.subr.bf16.mxu0 0
      %2778 = vmatpush1.bf16.xpose.msra.mxu0 0
      %2779 = vmatprep.subr.bf16.mxu0 0
      %2780 = vmatpush1.bf16.xpose.msra.mxu0 0
      %2781 = vmatprep.subr.bf16.mxu0 0
      %2782 = vmatpush1.bf16.xpose.msra.mxu0 0
      %2783 = vmatprep.subr.bf16.mxu0 0
      %2784 = vmatpush1.bf16.xpose.msra.mxu0 0
      %2785 = vmatprep.subr.bf16.mxu0 0
      %2786 = vmatpush1.bf16.xpose.msra.mxu0 0
      %2787 = vmatprep.subr.bf16.mxu0 0
      %2788 = vmatpush1.bf16.xpose.msra.mxu0 0
      %2789 = vmatprep.subr.bf16.mxu0 0
      %2790 = vmatpush1.bf16.xpose.msra.mxu0 0
      %2791 = vmatprep.subr.bf16.mxu0 0
      %2792 = vmatpush1.bf16.xpose.msra.mxu0 0
      %2793 = vmatprep.subr.bf16.mxu0 0
      %2794 = vmatpush1.bf16.xpose.msra.mxu0 0
      %2795 = vmatprep.subr.bf16.mxu0 0
      %2796 = vmatpush1.bf16.xpose.msra.mxu0 0
      %2797 = vmatprep.subr.bf16.mxu0 0
      %2798 = vmatpush1.bf16.xpose.msra.mxu0 0
      %2799 = vmatprep.subr.bf16.mxu0 0
      %2800 = vmatpush1.bf16.xpose.msra.mxu0 0
      %2801 = vmatprep.subr.bf16.mxu0 0
      %2802 = vmatpush1.bf16.xpose.msra.mxu0 0
      %2803 = vmatprep.mubr.bf16.mxu0 0
      %2804 = vmatmul.mubr.bf16.gmra.mrb[0].mxu0 %v2766
      %v2805 = vpop.f32.mrb[0].mxu0
      %v2806 = vadd.f32 0.0, %v2805
      %v2807 = vpop.f32.mrb[0].mxu0
      %v2808 = vpop.f32.mrb[0].mxu0
      %v2809 = vadd.f32 0.0, %v2808
      %v2810 = vpop.f32.mrb[0].mxu0
      %2811 = vdwg.mxu0
      %v2813 = vsel %vm2623, %v2603, 0
      %v2816 = vsel %vm2623, %v2611, 0
      %2818 = vmatprep.subr.bf16.mxu0 0
      %2819 = vmatpush1.bf16.xpose.msra.mxu0 %v2816
      %2820 = vmatprep.subr.bf16.mxu0 0
      %2821 = vmatpush1.bf16.xpose.msra.mxu0 0
      %2822 = vmatprep.subr.bf16.mxu0 0
      %2823 = vmatpush1.bf16.xpose.msra.mxu0 0
      %2824 = vmatprep.subr.bf16.mxu0 0
      %2825 = vmatpush1.bf16.xpose.msra.mxu0 0
      %2826 = vmatprep.subr.bf16.mxu0 0
      %2827 = vmatpush1.bf16.xpose.msra.mxu0 0
      %2828 = vmatprep.subr.bf16.mxu0 0
      %2829 = vmatpush1.bf16.xpose.msra.mxu0 0
      %2830 = vmatprep.subr.bf16.mxu0 0
      %2831 = vmatpush1.bf16.xpose.msra.mxu0 0
      %2832 = vmatprep.subr.bf16.mxu0 0
      %2833 = vmatpush1.bf16.xpose.msra.mxu0 0
      %2834 = vmatprep.subr.bf16.mxu0 0
      %2835 = vmatpush1.bf16.xpose.msra.mxu0 0
      %2836 = vmatprep.subr.bf16.mxu0 0
      %2837 = vmatpush1.bf16.xpose.msra.mxu0 0
      %2838 = vmatprep.subr.bf16.mxu0 0
      %2839 = vmatpush1.bf16.xpose.msra.mxu0 0
      %2840 = vmatprep.subr.bf16.mxu0 0
      %2841 = vmatpush1.bf16.xpose.msra.mxu0 0
      %2842 = vmatprep.subr.bf16.mxu0 0
      %2843 = vmatpush1.bf16.xpose.msra.mxu0 0
      %2844 = vmatprep.subr.bf16.mxu0 0
      %2845 = vmatpush1.bf16.xpose.msra.mxu0 0
      %2846 = vmatprep.subr.bf16.mxu0 0
      %2847 = vmatpush1.bf16.xpose.msra.mxu0 0
      %2848 = vmatprep.subr.bf16.mxu0 0
      %2849 = vmatpush1.bf16.xpose.msra.mxu0 0
      %2850 = vmatprep.mubr.bf16.mxu0 0
      %2851 = vmatmul.mubr.bf16.gmra.mrb[0].mxu0 %v2813
      %v2852 = vpop.f32.mrb[0].mxu0
      %v2853 = vadd.f32 0.0, %v2852
      %v2854 = vpop.f32.mrb[0].mxu0
      %v2855 = vpop.f32.mrb[0].mxu0
      %v2856 = vadd.f32 0.0, %v2855
      %v2857 = vpop.f32.mrb[0].mxu0
      %2858 = vdwg.mxu0
      %v2860 = vsel %vm2623, %v2604, 0
      %v2863 = vsel %vm2623, %v2612, 0
      %2865 = vmatprep.subr.bf16.mxu0 0
      %2866 = vmatpush1.bf16.xpose.msra.mxu0 %v2863
      %2867 = vmatprep.subr.bf16.mxu0 0
      %2868 = vmatpush1.bf16.xpose.msra.mxu0 0
      %2869 = vmatprep.subr.bf16.mxu0 0
      %2870 = vmatpush1.bf16.xpose.msra.mxu0 0
      %2871 = vmatprep.subr.bf16.mxu0 0
      %2872 = vmatpush1.bf16.xpose.msra.mxu0 0
      %2873 = vmatprep.subr.bf16.mxu0 0
      %2874 = vmatpush1.bf16.xpose.msra.mxu0 0
      %2875 = vmatprep.subr.bf16.mxu0 0
      %2876 = vmatpush1.bf16.xpose.msra.mxu0 0
      %2877 = vmatprep.subr.bf16.mxu0 0
      %2878 = vmatpush1.bf16.xpose.msra.mxu0 0
      %2879 = vmatprep.subr.bf16.mxu0 0
      %2880 = vmatpush1.bf16.xpose.msra.mxu0 0
      %2881 = vmatprep.subr.bf16.mxu0 0
      %2882 = vmatpush1.bf16.xpose.msra.mxu0 0
      %2883 = vmatprep.subr.bf16.mxu0 0
      %2884 = vmatpush1.bf16.xpose.msra.mxu0 0
      %2885 = vmatprep.subr.bf16.mxu0 0
      %2886 = vmatpush1.bf16.xpose.msra.mxu0 0
      %2887 = vmatprep.subr.bf16.mxu0 0
      %2888 = vmatpush1.bf16.xpose.msra.mxu0 0
      %2889 = vmatprep.subr.bf16.mxu0 0
      %2890 = vmatpush1.bf16.xpose.msra.mxu0 0
      %2891 = vmatprep.subr.bf16.mxu0 0
      %2892 = vmatpush1.bf16.xpose.msra.mxu0 0
      %2893 = vmatprep.subr.bf16.mxu0 0
      %2894 = vmatpush1.bf16.xpose.msra.mxu0 0
      %2895 = vmatprep.subr.bf16.mxu0 0
      %2896 = vmatpush1.bf16.xpose.msra.mxu0 0
      %2897 = vmatprep.mubr.bf16.mxu0 0
      %2898 = vmatmul.mubr.bf16.gmra.mrb[0].mxu0 %v2860
      %v2899 = vpop.f32.mrb[0].mxu0
      %v2900 = vadd.f32 0.0, %v2899
      %v2901 = vpop.f32.mrb[0].mxu0
      %v2902 = vpop.f32.mrb[0].mxu0
      %v2903 = vadd.f32 0.0, %v2902
      %v2904 = vpop.f32.mrb[0].mxu0
      %2905 = vdwg.mxu0
      %v2907 = vsel %vm2623, %v2605, 0
      %v2910 = vsel %vm2623, %v2613, 0
      %2912 = vmatprep.subr.bf16.mxu0 0
      %2913 = vmatpush1.bf16.xpose.msra.mxu0 %v2910
      %2914 = vmatprep.subr.bf16.mxu0 0
      %2915 = vmatpush1.bf16.xpose.msra.mxu0 0
      %2916 = vmatprep.subr.bf16.mxu0 0
      %2917 = vmatpush1.bf16.xpose.msra.mxu0 0
      %2918 = vmatprep.subr.bf16.mxu0 0
      %2919 = vmatpush1.bf16.xpose.msra.mxu0 0
      %2920 = vmatprep.subr.bf16.mxu0 0
      %2921 = vmatpush1.bf16.xpose.msra.mxu0 0
      %2922 = vmatprep.subr.bf16.mxu0 0
      %2923 = vmatpush1.bf16.xpose.msra.mxu0 0
      %2924 = vmatprep.subr.bf16.mxu0 0
      %2925 = vmatpush1.bf16.xpose.msra.mxu0 0
      %2926 = vmatprep.subr.bf16.mxu0 0
      %2927 = vmatpush1.bf16.xpose.msra.mxu0 0
      %2928 = vmatprep.subr.bf16.mxu0 0
      %2929 = vmatpush1.bf16.xpose.msra.mxu0 0
      %2930 = vmatprep.subr.bf16.mxu0 0
      %2931 = vmatpush1.bf16.xpose.msra.mxu0 0
      %2932 = vmatprep.subr.bf16.mxu0 0
      %2933 = vmatpush1.bf16.xpose.msra.mxu0 0
      %2934 = vmatprep.subr.bf16.mxu0 0
      %2935 = vmatpush1.bf16.xpose.msra.mxu0 0
      %2936 = vmatprep.subr.bf16.mxu0 0
      %2937 = vmatpush1.bf16.xpose.msra.mxu0 0
      %2938 = vmatprep.subr.bf16.mxu0 0
      %2939 = vmatpush1.bf16.xpose.msra.mxu0 0
      %2940 = vmatprep.subr.bf16.mxu0 0
      %2941 = vmatpush1.bf16.xpose.msra.mxu0 0
      %2942 = vmatprep.subr.bf16.mxu0 0
      %2943 = vmatpush1.bf16.xpose.msra.mxu0 0
      %2944 = vmatprep.mubr.bf16.mxu0 0
      %2945 = vmatmul.mubr.bf16.gmra.mrb[0].mxu0 %v2907
      %v2946 = vpop.f32.mrb[0].mxu0
      %v2947 = vadd.f32 0.0, %v2946
      %v2948 = vpop.f32.mrb[0].mxu0
      %v2949 = vpop.f32.mrb[0].mxu0
      %v2950 = vadd.f32 0.0, %v2949
      %v2951 = vpop.f32.mrb[0].mxu0
      %2952 = vdwg.mxu0
      %v2954 = vsel %vm2623, %v2606, 0
      %v2957 = vsel %vm2623, %v2614, 0
      %2959 = vmatprep.subr.bf16.mxu0 0
      %2960 = vmatpush1.bf16.xpose.msra.mxu0 %v2957
      %2961 = vmatprep.subr.bf16.mxu0 0
      %2962 = vmatpush1.bf16.xpose.msra.mxu0 0
      %2963 = vmatprep.subr.bf16.mxu0 0
      %2964 = vmatpush1.bf16.xpose.msra.mxu0 0
      %2965 = vmatprep.subr.bf16.mxu0 0
      %2966 = vmatpush1.bf16.xpose.msra.mxu0 0
      %2967 = vmatprep.subr.bf16.mxu0 0
      %2968 = vmatpush1.bf16.xpose.msra.mxu0 0
      %2969 = vmatprep.subr.bf16.mxu0 0
      %2970 = vmatpush1.bf16.xpose.msra.mxu0 0
      %2971 = vmatprep.subr.bf16.mxu0 0
      %2972 = vmatpush1.bf16.xpose.msra.mxu0 0
      %2973 = vmatprep.subr.bf16.mxu0 0
      %2974 = vmatpush1.bf16.xpose.msra.mxu0 0
      %2975 = vmatprep.subr.bf16.mxu0 0
      %2976 = vmatpush1.bf16.xpose.msra.mxu0 0
      %2977 = vmatprep.subr.bf16.mxu0 0
      %2978 = vmatpush1.bf16.xpose.msra.mxu0 0
      %2979 = vmatprep.subr.bf16.mxu0 0
      %2980 = vmatpush1.bf16.xpose.msra.mxu0 0
      %2981 = vmatprep.subr.bf16.mxu0 0
      %2982 = vmatpush1.bf16.xpose.msra.mxu0 0
      %2983 = vmatprep.subr.bf16.mxu0 0
      %2984 = vmatpush1.bf16.xpose.msra.mxu0 0
      %2985 = vmatprep.subr.bf16.mxu0 0
      %2986 = vmatpush1.bf16.xpose.msra.mxu0 0
      %2987 = vmatprep.subr.bf16.mxu0 0
      %2988 = vmatpush1.bf16.xpose.msra.mxu0 0
      %2989 = vmatprep.subr.bf16.mxu0 0
      %2990 = vmatpush1.bf16.xpose.msra.mxu0 0
      %2991 = vmatprep.mubr.bf16.mxu0 0
      %2992 = vmatmul.mubr.bf16.gmra.mrb[0].mxu0 %v2954
      %v2993 = vpop.f32.mrb[0].mxu0
      %v2994 = vadd.f32 0.0, %v2993
      %v2995 = vpop.f32.mrb[0].mxu0
      %v2996 = vpop.f32.mrb[0].mxu0
      %v2997 = vadd.f32 0.0, %v2996
      %v2998 = vpop.f32.mrb[0].mxu0
      %2999 = vdwg.mxu0
      %vm3000 = vcmask 130048
      %v3001 = vsel %vm3000, %v2665, -inf
      %3002 = vmax.xlane.f32.xlu0 %v3001
      %v3003 = vpop.xlane.xlu0 %3002
      %v3004 = vsel %vm3000, %v2668, -inf
      %3005 = vmax.xlane.f32.xlu0 %v3004
      %v3006 = vpop.xlane.xlu0 %3005
      %v3007 = vsel %vm3000, %v2712, -inf
      %3008 = vmax.xlane.f32.xlu0 %v3007
      %v3009 = vpop.xlane.xlu0 %3008
      %v3010 = vsel %vm3000, %v2715, -inf
      %3011 = vmax.xlane.f32.xlu0 %v3010
      %v3012 = vpop.xlane.xlu0 %3011
      %v3013 = vsel %vm3000, %v2759, -inf
      %3014 = vmax.xlane.f32.xlu0 %v3013
      %v3015 = vpop.xlane.xlu0 %3014
      %v3016 = vsel %vm3000, %v2762, -inf
      %3017 = vmax.xlane.f32.xlu0 %v3016
      %v3018 = vpop.xlane.xlu0 %3017
      %v3019 = vsel %vm3000, %v2806, -inf
      %3020 = vmax.xlane.f32.xlu0 %v3019
      %v3021 = vpop.xlane.xlu0 %3020
      %v3022 = vsel %vm3000, %v2809, -inf
      %3023 = vmax.xlane.f32.xlu0 %v3022
      %v3024 = vpop.xlane.xlu0 %3023
      %v3025 = vsel %vm3000, %v2853, -inf
      %3026 = vmax.xlane.f32.xlu0 %v3025
      %v3027 = vpop.xlane.xlu0 %3026
      %v3028 = vsel %vm3000, %v2856, -inf
      %3029 = vmax.xlane.f32.xlu0 %v3028
      %v3030 = vpop.xlane.xlu0 %3029
      %v3031 = vsel %vm3000, %v2900, -inf
      %3032 = vmax.xlane.f32.xlu0 %v3031
      %v3033 = vpop.xlane.xlu0 %3032
      %v3034 = vsel %vm3000, %v2903, -inf
      %3035 = vmax.xlane.f32.xlu0 %v3034
      %v3036 = vpop.xlane.xlu0 %3035
      %v3037 = vsel %vm3000, %v2947, -inf
      %3038 = vmax.xlane.f32.xlu0 %v3037
      %v3039 = vpop.xlane.xlu0 %3038
      %v3040 = vsel %vm3000, %v2950, -inf
      %3041 = vmax.xlane.f32.xlu0 %v3040
      %v3042 = vpop.xlane.xlu0 %3041
      %v3043 = vsel %vm3000, %v2994, -inf
      %3044 = vmax.xlane.f32.xlu0 %v3043
      %v3045 = vpop.xlane.xlu0 %3044
      %v3046 = vsel %vm3000, %v2997, -inf
      %3047 = vmax.xlane.f32.xlu0 %v3046
      %v3048 = vpop.xlane.xlu0 %3047
      %v3049 = vsub.f32 %v2665, %v3003
      %v3050 = vsub.f32 %v2668, %v3006
      %v3051 = vsub.f32 %v2712, %v3009
      %v3052 = vsub.f32 %v2715, %v3012
      %v3053 = vsub.f32 %v2759, %v3015
      %v3054 = vsub.f32 %v2762, %v3018
      %v3055 = vsub.f32 %v2806, %v3021
      %v3056 = vsub.f32 %v2809, %v3024
      %v3057 = vsub.f32 %v2853, %v3027
      %v3058 = vsub.f32 %v2856, %v3030
      %v3059 = vsub.f32 %v2900, %v3033
      %v3060 = vsub.f32 %v2903, %v3036
      %v3061 = vsub.f32 %v2947, %v3039
      %v3062 = vsub.f32 %v2950, %v3042
      %v3063 = vsub.f32 %v2994, %v3045
      %v3064 = vsub.f32 %v2997, %v3048
      %v3065 = vmul.f32 %v3049, 1.442695
      %v3066 = vpow.pop %v3065
      %v3067 = vmul.f32 %v3050, 1.442695
      %v3068 = vpow.pop %v3067
      %v3069 = vmul.f32 %v3051, 1.442695
      %v3070 = vpow.pop %v3069
      %v3071 = vmul.f32 %v3052, 1.442695
      %v3072 = vpow.pop %v3071
      %v3073 = vmul.f32 %v3053, 1.442695
      %v3074 = vpow.pop %v3073
      %v3075 = vmul.f32 %v3054, 1.442695
      %v3076 = vpow.pop %v3075
      %v3077 = vmul.f32 %v3055, 1.442695
      %v3078 = vpow.pop %v3077
      %v3079 = vmul.f32 %v3056, 1.442695
      %v3080 = vpow.pop %v3079
      %v3081 = vmul.f32 %v3057, 1.442695
      %v3082 = vpow.pop %v3081
      %v3083 = vmul.f32 %v3058, 1.442695
      %v3084 = vpow.pop %v3083
      %v3085 = vmul.f32 %v3059, 1.442695
      %v3086 = vpow.pop %v3085
      %v3087 = vmul.f32 %v3060, 1.442695
      %v3088 = vpow.pop %v3087
      %v3089 = vmul.f32 %v3061, 1.442695
      %v3090 = vpow.pop %v3089
      %v3091 = vmul.f32 %v3062, 1.442695
      %v3092 = vpow.pop %v3091
      %v3093 = vmul.f32 %v3063, 1.442695
      %v3094 = vpow.pop %v3093
      %v3095 = vmul.f32 %v3064, 1.442695
      %v3096 = vpow.pop %v3095
      %v3097 = vsel %vm3000, %v3066, 0.0
      %3098 = vadd.xlane.f32.xlu0 %v3097
      %v3099 = vpop.xlane.xlu0 %3098
      %v3100 = vsel %vm3000, %v3068, 0.0
      %3101 = vadd.xlane.f32.xlu0 %v3100
      %v3102 = vpop.xlane.xlu0 %3101
      %v3103 = vsel %vm3000, %v3070, 0.0
      %3104 = vadd.xlane.f32.xlu0 %v3103
      %v3105 = vpop.xlane.xlu0 %3104
      %v3106 = vsel %vm3000, %v3072, 0.0
      %3107 = vadd.xlane.f32.xlu0 %v3106
      %v3108 = vpop.xlane.xlu0 %3107
      %v3109 = vsel %vm3000, %v3074, 0.0
      %3110 = vadd.xlane.f32.xlu0 %v3109
      %v3111 = vpop.xlane.xlu0 %3110
      %v3112 = vsel %vm3000, %v3076, 0.0
      %3113 = vadd.xlane.f32.xlu0 %v3112
      %v3114 = vpop.xlane.xlu0 %3113
      %v3115 = vsel %vm3000, %v3078, 0.0
      %3116 = vadd.xlane.f32.xlu0 %v3115
      %v3117 = vpop.xlane.xlu0 %3116
      %v3118 = vsel %vm3000, %v3080, 0.0
      %3119 = vadd.xlane.f32.xlu0 %v3118
      %v3120 = vpop.xlane.xlu0 %3119
      %v3121 = vsel %vm3000, %v3082, 0.0
      %3122 = vadd.xlane.f32.xlu0 %v3121
      %v3123 = vpop.xlane.xlu0 %3122
      %v3124 = vsel %vm3000, %v3084, 0.0
      %3125 = vadd.xlane.f32.xlu0 %v3124
      %v3126 = vpop.xlane.xlu0 %3125
      %v3127 = vsel %vm3000, %v3086, 0.0
      %3128 = vadd.xlane.f32.xlu0 %v3127
      %v3129 = vpop.xlane.xlu0 %3128
      %v3130 = vsel %vm3000, %v3088, 0.0
      %3131 = vadd.xlane.f32.xlu0 %v3130
      %v3132 = vpop.xlane.xlu0 %3131
      %v3133 = vsel %vm3000, %v3090, 0.0
      %3134 = vadd.xlane.f32.xlu0 %v3133
      %v3135 = vpop.xlane.xlu0 %3134
      %v3136 = vsel %vm3000, %v3092, 0.0
      %3137 = vadd.xlane.f32.xlu0 %v3136
      %v3138 = vpop.xlane.xlu0 %3137
      %v3139 = vsel %vm3000, %v3094, 0.0
      %3140 = vadd.xlane.f32.xlu0 %v3139
      %v3141 = vpop.xlane.xlu0 %3140
      %v3142 = vsel %vm3000, %v3096, 0.0
      %3143 = vadd.xlane.f32.xlu0 %v3142
      %v3144 = vpop.xlane.xlu0 %3143
      %v3145 = vrcp.pop %v3099
      %v3146 = vrcp.pop %v3102
      %v3147 = vrcp.pop %v3105
      %v3148 = vrcp.pop %v3108
      %v3149 = vrcp.pop %v3111
      %v3150 = vrcp.pop %v3114
      %v3151 = vrcp.pop %v3117
      %v3152 = vrcp.pop %v3120
      %v3153 = vrcp.pop %v3123
      %v3154 = vrcp.pop %v3126
      %v3155 = vrcp.pop %v3129
      %v3156 = vrcp.pop %v3132
      %v3157 = vrcp.pop %v3135
      %v3158 = vrcp.pop %v3138
      %v3159 = vrcp.pop %v3141
      %v3160 = vrcp.pop %v3144
      %v3161 = vmul.f32 %v3066, %v3145
      %v3162 = vmul.f32 %v3068, %v3146
      %v3163 = vmul.f32 %v3070, %v3147
      %v3164 = vmul.f32 %v3072, %v3148
      %v3165 = vmul.f32 %v3074, %v3149
      %v3166 = vmul.f32 %v3076, %v3150
      %v3167 = vmul.f32 %v3078, %v3151
      %v3168 = vmul.f32 %v3080, %v3152
      %v3169 = vmul.f32 %v3082, %v3153
      %v3170 = vmul.f32 %v3084, %v3154
      %v3171 = vmul.f32 %v3086, %v3155
      %v3172 = vmul.f32 %v3088, %v3156
      %v3173 = vmul.f32 %v3090, %v3157
      %v3174 = vmul.f32 %v3092, %v3158
      %v3175 = vmul.f32 %v3094, %v3159
      %v3176 = vmul.f32 %v3096, %v3160
      %v3177 = vpack.c.bf16 %v3162, %v3161
      %v3178 = vpack.c.bf16 %v3164, %v3163
      %v3179 = vpack.c.bf16 %v3166, %v3165
      %v3180 = vpack.c.bf16 %v3168, %v3167
      %v3181 = vpack.c.bf16 %v3170, %v3169
      %v3182 = vpack.c.bf16 %v3172, %v3171
      %v3183 = vpack.c.bf16 %v3174, %v3173
      %v3184 = vpack.c.bf16 %v3176, %v3175
      %v3186 = vsel %vm3000, %v3177, 0
      %3188 = vmatprep.subr.bf16.mxu0 0
      %3189 = vmatpush1.bf16.msra.mxu0 %v2615
      %3190 = vmatprep.subr.bf16.mxu0 0
      %3191 = vmatpush1.bf16.msra.mxu0 0
      %3192 = vmatprep.subr.bf16.mxu0 0
      %3193 = vmatpush1.bf16.msra.mxu0 0
      %3194 = vmatprep.subr.bf16.mxu0 0
      %3195 = vmatpush1.bf16.msra.mxu0 0
      %3196 = vmatprep.subr.bf16.mxu0 0
      %3197 = vmatpush1.bf16.msra.mxu0 0
      %3198 = vmatprep.subr.bf16.mxu0 0
      %3199 = vmatpush1.bf16.msra.mxu0 0
      %3200 = vmatprep.subr.bf16.mxu0 0
      %3201 = vmatpush1.bf16.msra.mxu0 0
      %3202 = vmatprep.subr.bf16.mxu0 0
      %3203 = vmatpush1.bf16.msra.mxu0 0
      %3204 = vmatprep.subr.bf16.mxu0 0
      %3205 = vmatpush1.bf16.msra.mxu0 0
      %3206 = vmatprep.subr.bf16.mxu0 0
      %3207 = vmatpush1.bf16.msra.mxu0 0
      %3208 = vmatprep.subr.bf16.mxu0 0
      %3209 = vmatpush1.bf16.msra.mxu0 0
      %3210 = vmatprep.subr.bf16.mxu0 0
      %3211 = vmatpush1.bf16.msra.mxu0 0
      %3212 = vmatprep.subr.bf16.mxu0 0
      %3213 = vmatpush1.bf16.msra.mxu0 0
      %3214 = vmatprep.subr.bf16.mxu0 0
      %3215 = vmatpush1.bf16.msra.mxu0 0
      %3216 = vmatprep.subr.bf16.mxu0 0
      %3217 = vmatpush1.bf16.msra.mxu0 0
      %3218 = vmatprep.subr.bf16.mxu0 0
      %3219 = vmatpush1.bf16.msra.mxu0 0
      %3220 = vmatprep.mubr.bf16.mxu0 0
      %3221 = vmatmul.mubr.bf16.gmra.mrb[0].mxu0 %v3186
      %v3222 = vpop.f32.mrb[0].mxu0
      %v3223 = vadd.f32 0.0, %v3222
      %v3224 = vpop.f32.mrb[0].mxu0
      %v3225 = vpop.f32.mrb[0].mxu0
      %v3226 = vadd.f32 0.0, %v3225
      %v3227 = vpop.f32.mrb[0].mxu0
      %3228 = vdwg.mxu0
      %v3230 = vsel %vm3000, %v3178, 0
      %3232 = vmatprep.subr.bf16.mxu0 0
      %3233 = vmatpush1.bf16.msra.mxu0 %v2616
      %3234 = vmatprep.subr.bf16.mxu0 0
      %3235 = vmatpush1.bf16.msra.mxu0 0
      %3236 = vmatprep.subr.bf16.mxu0 0
      %3237 = vmatpush1.bf16.msra.mxu0 0
      %3238 = vmatprep.subr.bf16.mxu0 0
      %3239 = vmatpush1.bf16.msra.mxu0 0
      %3240 = vmatprep.subr.bf16.mxu0 0
      %3241 = vmatpush1.bf16.msra.mxu0 0
      %3242 = vmatprep.subr.bf16.mxu0 0
      %3243 = vmatpush1.bf16.msra.mxu0 0
      %3244 = vmatprep.subr.bf16.mxu0 0
      %3245 = vmatpush1.bf16.msra.mxu0 0
      %3246 = vmatprep.subr.bf16.mxu0 0
      %3247 = vmatpush1.bf16.msra.mxu0 0
      %3248 = vmatprep.subr.bf16.mxu0 0
      %3249 = vmatpush1.bf16.msra.mxu0 0
      %3250 = vmatprep.subr.bf16.mxu0 0
      %3251 = vmatpush1.bf16.msra.mxu0 0
      %3252 = vmatprep.subr.bf16.mxu0 0
      %3253 = vmatpush1.bf16.msra.mxu0 0
      %3254 = vmatprep.subr.bf16.mxu0 0
      %3255 = vmatpush1.bf16.msra.mxu0 0
      %3256 = vmatprep.subr.bf16.mxu0 0
      %3257 = vmatpush1.bf16.msra.mxu0 0
      %3258 = vmatprep.subr.bf16.mxu0 0
      %3259 = vmatpush1.bf16.msra.mxu0 0
      %3260 = vmatprep.subr.bf16.mxu0 0
      %3261 = vmatpush1.bf16.msra.mxu0 0
      %3262 = vmatprep.subr.bf16.mxu0 0
      %3263 = vmatpush1.bf16.msra.mxu0 0
      %3264 = vmatprep.mubr.bf16.mxu0 0
      %3265 = vmatmul.mubr.bf16.gmra.mrb[0].mxu0 %v3230
      %v3266 = vpop.f32.mrb[0].mxu0
      %v3267 = vadd.f32 0.0, %v3266
      %v3268 = vpop.f32.mrb[0].mxu0
      %v3269 = vpop.f32.mrb[0].mxu0
      %v3270 = vadd.f32 0.0, %v3269
      %v3271 = vpop.f32.mrb[0].mxu0
      %3272 = vdwg.mxu0
      %v3274 = vsel %vm3000, %v3179, 0
      %3276 = vmatprep.subr.bf16.mxu0 0
      %3277 = vmatpush1.bf16.msra.mxu0 %v2617
      %3278 = vmatprep.subr.bf16.mxu0 0
      %3279 = vmatpush1.bf16.msra.mxu0 0
      %3280 = vmatprep.subr.bf16.mxu0 0
      %3281 = vmatpush1.bf16.msra.mxu0 0
      %3282 = vmatprep.subr.bf16.mxu0 0
      %3283 = vmatpush1.bf16.msra.mxu0 0
      %3284 = vmatprep.subr.bf16.mxu0 0
      %3285 = vmatpush1.bf16.msra.mxu0 0
      %3286 = vmatprep.subr.bf16.mxu0 0
      %3287 = vmatpush1.bf16.msra.mxu0 0
      %3288 = vmatprep.subr.bf16.mxu0 0
      %3289 = vmatpush1.bf16.msra.mxu0 0
      %3290 = vmatprep.subr.bf16.mxu0 0
      %3291 = vmatpush1.bf16.msra.mxu0 0
      %3292 = vmatprep.subr.bf16.mxu0 0
      %3293 = vmatpush1.bf16.msra.mxu0 0
      %3294 = vmatprep.subr.bf16.mxu0 0
      %3295 = vmatpush1.bf16.msra.mxu0 0
      %3296 = vmatprep.subr.bf16.mxu0 0
      %3297 = vmatpush1.bf16.msra.mxu0 0
      %3298 = vmatprep.subr.bf16.mxu0 0
      %3299 = vmatpush1.bf16.msra.mxu0 0
      %3300 = vmatprep.subr.bf16.mxu0 0
      %3301 = vmatpush1.bf16.msra.mxu0 0
      %3302 = vmatprep.subr.bf16.mxu0 0
      %3303 = vmatpush1.bf16.msra.mxu0 0
      %3304 = vmatprep.subr.bf16.mxu0 0
      %3305 = vmatpush1.bf16.msra.mxu0 0
      %3306 = vmatprep.subr.bf16.mxu0 0
      %3307 = vmatpush1.bf16.msra.mxu0 0
      %3308 = vmatprep.mubr.bf16.mxu0 0
      %3309 = vmatmul.mubr.bf16.gmra.mrb[0].mxu0 %v3274
      %v3310 = vpop.f32.mrb[0].mxu0
      %v3311 = vadd.f32 0.0, %v3310
      %v3312 = vpop.f32.mrb[0].mxu0
      %v3313 = vpop.f32.mrb[0].mxu0
      %v3314 = vadd.f32 0.0, %v3313
      %v3315 = vpop.f32.mrb[0].mxu0
      %3316 = vdwg.mxu0
      %v3318 = vsel %vm3000, %v3180, 0
      %3320 = vmatprep.subr.bf16.mxu0 0
      %3321 = vmatpush1.bf16.msra.mxu0 %v2618
      %3322 = vmatprep.subr.bf16.mxu0 0
      %3323 = vmatpush1.bf16.msra.mxu0 0
      %3324 = vmatprep.subr.bf16.mxu0 0
      %3325 = vmatpush1.bf16.msra.mxu0 0
      %3326 = vmatprep.subr.bf16.mxu0 0
      %3327 = vmatpush1.bf16.msra.mxu0 0
      %3328 = vmatprep.subr.bf16.mxu0 0
      %3329 = vmatpush1.bf16.msra.mxu0 0
      %3330 = vmatprep.subr.bf16.mxu0 0
      %3331 = vmatpush1.bf16.msra.mxu0 0
      %3332 = vmatprep.subr.bf16.mxu0 0
      %3333 = vmatpush1.bf16.msra.mxu0 0
      %3334 = vmatprep.subr.bf16.mxu0 0
      %3335 = vmatpush1.bf16.msra.mxu0 0
      %3336 = vmatprep.subr.bf16.mxu0 0
      %3337 = vmatpush1.bf16.msra.mxu0 0
      %3338 = vmatprep.subr.bf16.mxu0 0
      %3339 = vmatpush1.bf16.msra.mxu0 0
      %3340 = vmatprep.subr.bf16.mxu0 0
      %3341 = vmatpush1.bf16.msra.mxu0 0
      %3342 = vmatprep.subr.bf16.mxu0 0
      %3343 = vmatpush1.bf16.msra.mxu0 0
      %3344 = vmatprep.subr.bf16.mxu0 0
      %3345 = vmatpush1.bf16.msra.mxu0 0
      %3346 = vmatprep.subr.bf16.mxu0 0
      %3347 = vmatpush1.bf16.msra.mxu0 0
      %3348 = vmatprep.subr.bf16.mxu0 0
      %3349 = vmatpush1.bf16.msra.mxu0 0
      %3350 = vmatprep.subr.bf16.mxu0 0
      %3351 = vmatpush1.bf16.msra.mxu0 0
      %3352 = vmatprep.mubr.bf16.mxu0 0
      %3353 = vmatmul.mubr.bf16.gmra.mrb[0].mxu0 %v3318
      %v3354 = vpop.f32.mrb[0].mxu0
      %v3355 = vadd.f32 0.0, %v3354
      %v3356 = vpop.f32.mrb[0].mxu0
      %v3357 = vpop.f32.mrb[0].mxu0
      %v3358 = vadd.f32 0.0, %v3357
      %v3359 = vpop.f32.mrb[0].mxu0
      %3360 = vdwg.mxu0
      %v3362 = vsel %vm3000, %v3181, 0
      %3364 = vmatprep.subr.bf16.mxu0 0
      %3365 = vmatpush1.bf16.msra.mxu0 %v2619
      %3366 = vmatprep.subr.bf16.mxu0 0
      %3367 = vmatpush1.bf16.msra.mxu0 0
      %3368 = vmatprep.subr.bf16.mxu0 0
      %3369 = vmatpush1.bf16.msra.mxu0 0
      %3370 = vmatprep.subr.bf16.mxu0 0
      %3371 = vmatpush1.bf16.msra.mxu0 0
      %3372 = vmatprep.subr.bf16.mxu0 0
      %3373 = vmatpush1.bf16.msra.mxu0 0
      %3374 = vmatprep.subr.bf16.mxu0 0
      %3375 = vmatpush1.bf16.msra.mxu0 0
      %3376 = vmatprep.subr.bf16.mxu0 0
      %3377 = vmatpush1.bf16.msra.mxu0 0
      %3378 = vmatprep.subr.bf16.mxu0 0
      %3379 = vmatpush1.bf16.msra.mxu0 0
      %3380 = vmatprep.subr.bf16.mxu0 0
      %3381 = vmatpush1.bf16.msra.mxu0 0
      %3382 = vmatprep.subr.bf16.mxu0 0
      %3383 = vmatpush1.bf16.msra.mxu0 0
      %3384 = vmatprep.subr.bf16.mxu0 0
      %3385 = vmatpush1.bf16.msra.mxu0 0
      %3386 = vmatprep.subr.bf16.mxu0 0
      %3387 = vmatpush1.bf16.msra.mxu0 0
      %3388 = vmatprep.subr.bf16.mxu0 0
      %3389 = vmatpush1.bf16.msra.mxu0 0
      %3390 = vmatprep.subr.bf16.mxu0 0
      %3391 = vmatpush1.bf16.msra.mxu0 0
      %3392 = vmatprep.subr.bf16.mxu0 0
      %3393 = vmatpush1.bf16.msra.mxu0 0
      %3394 = vmatprep.subr.bf16.mxu0 0
      %3395 = vmatpush1.bf16.msra.mxu0 0
      %3396 = vmatprep.mubr.bf16.mxu0 0
      %3397 = vmatmul.mubr.bf16.gmra.mrb[0].mxu0 %v3362
      %v3398 = vpop.f32.mrb[0].mxu0
      %v3399 = vadd.f32 0.0, %v3398
      %v3400 = vpop.f32.mrb[0].mxu0
      %v3401 = vpop.f32.mrb[0].mxu0
      %v3402 = vadd.f32 0.0, %v3401
      %v3403 = vpop.f32.mrb[0].mxu0
      %3404 = vdwg.mxu0
      %v3406 = vsel %vm3000, %v3182, 0
      %3408 = vmatprep.subr.bf16.mxu0 0
      %3409 = vmatpush1.bf16.msra.mxu0 %v2620
      %3410 = vmatprep.subr.bf16.mxu0 0
      %3411 = vmatpush1.bf16.msra.mxu0 0
      %3412 = vmatprep.subr.bf16.mxu0 0
      %3413 = vmatpush1.bf16.msra.mxu0 0
      %3414 = vmatprep.subr.bf16.mxu0 0
      %3415 = vmatpush1.bf16.msra.mxu0 0
      %3416 = vmatprep.subr.bf16.mxu0 0
      %3417 = vmatpush1.bf16.msra.mxu0 0
      %3418 = vmatprep.subr.bf16.mxu0 0
      %3419 = vmatpush1.bf16.msra.mxu0 0
      %3420 = vmatprep.subr.bf16.mxu0 0
      %3421 = vmatpush1.bf16.msra.mxu0 0
      %3422 = vmatprep.subr.bf16.mxu0 0
      %3423 = vmatpush1.bf16.msra.mxu0 0
      %3424 = vmatprep.subr.bf16.mxu0 0
      %3425 = vmatpush1.bf16.msra.mxu0 0
      %3426 = vmatprep.subr.bf16.mxu0 0
      %3427 = vmatpush1.bf16.msra.mxu0 0
      %3428 = vmatprep.subr.bf16.mxu0 0
      %3429 = vmatpush1.bf16.msra.mxu0 0
      %3430 = vmatprep.subr.bf16.mxu0 0
      %3431 = vmatpush1.bf16.msra.mxu0 0
      %3432 = vmatprep.subr.bf16.mxu0 0
      %3433 = vmatpush1.bf16.msra.mxu0 0
      %3434 = vmatprep.subr.bf16.mxu0 0
      %3435 = vmatpush1.bf16.msra.mxu0 0
      %3436 = vmatprep.subr.bf16.mxu0 0
      %3437 = vmatpush1.bf16.msra.mxu0 0
      %3438 = vmatprep.subr.bf16.mxu0 0
      %3439 = vmatpush1.bf16.msra.mxu0 0
      %3440 = vmatprep.mubr.bf16.mxu0 0
      %3441 = vmatmul.mubr.bf16.gmra.mrb[0].mxu0 %v3406
      %v3442 = vpop.f32.mrb[0].mxu0
      %v3443 = vadd.f32 0.0, %v3442
      %v3444 = vpop.f32.mrb[0].mxu0
      %v3445 = vpop.f32.mrb[0].mxu0
      %v3446 = vadd.f32 0.0, %v3445
      %v3447 = vpop.f32.mrb[0].mxu0
      %3448 = vdwg.mxu0
      %v3450 = vsel %vm3000, %v3183, 0
      %3452 = vmatprep.subr.bf16.mxu0 0
      %3453 = vmatpush1.bf16.msra.mxu0 %v2621
      %3454 = vmatprep.subr.bf16.mxu0 0
      %3455 = vmatpush1.bf16.msra.mxu0 0
      %3456 = vmatprep.subr.bf16.mxu0 0
      %3457 = vmatpush1.bf16.msra.mxu0 0
      %3458 = vmatprep.subr.bf16.mxu0 0
      %3459 = vmatpush1.bf16.msra.mxu0 0
      %3460 = vmatprep.subr.bf16.mxu0 0
      %3461 = vmatpush1.bf16.msra.mxu0 0
      %3462 = vmatprep.subr.bf16.mxu0 0
      %3463 = vmatpush1.bf16.msra.mxu0 0
      %3464 = vmatprep.subr.bf16.mxu0 0
      %3465 = vmatpush1.bf16.msra.mxu0 0
      %3466 = vmatprep.subr.bf16.mxu0 0
      %3467 = vmatpush1.bf16.msra.mxu0 0
      %3468 = vmatprep.subr.bf16.mxu0 0
      %3469 = vmatpush1.bf16.msra.mxu0 0
      %3470 = vmatprep.subr.bf16.mxu0 0
      %3471 = vmatpush1.bf16.msra.mxu0 0
      %3472 = vmatprep.subr.bf16.mxu0 0
      %3473 = vmatpush1.bf16.msra.mxu0 0
      %3474 = vmatprep.subr.bf16.mxu0 0
      %3475 = vmatpush1.bf16.msra.mxu0 0
      %3476 = vmatprep.subr.bf16.mxu0 0
      %3477 = vmatpush1.bf16.msra.mxu0 0
      %3478 = vmatprep.subr.bf16.mxu0 0
      %3479 = vmatpush1.bf16.msra.mxu0 0
      %3480 = vmatprep.subr.bf16.mxu0 0
      %3481 = vmatpush1.bf16.msra.mxu0 0
      %3482 = vmatprep.subr.bf16.mxu0 0
      %3483 = vmatpush1.bf16.msra.mxu0 0
      %3484 = vmatprep.mubr.bf16.mxu0 0
      %3485 = vmatmul.mubr.bf16.gmra.mrb[0].mxu0 %v3450
      %v3486 = vpop.f32.mrb[0].mxu0
      %v3487 = vadd.f32 0.0, %v3486
      %v3488 = vpop.f32.mrb[0].mxu0
      %v3489 = vpop.f32.mrb[0].mxu0
      %v3490 = vadd.f32 0.0, %v3489
      %v3491 = vpop.f32.mrb[0].mxu0
      %3492 = vdwg.mxu0
      %v3494 = vsel %vm3000, %v3184, 0
      %3496 = vmatprep.subr.bf16.mxu0 0
      %3497 = vmatpush1.bf16.msra.mxu0 %v2622
      %3498 = vmatprep.subr.bf16.mxu0 0
      %3499 = vmatpush1.bf16.msra.mxu0 0
      %3500 = vmatprep.subr.bf16.mxu0 0
      %3501 = vmatpush1.bf16.msra.mxu0 0
      %3502 = vmatprep.subr.bf16.mxu0 0
      %3503 = vmatpush1.bf16.msra.mxu0 0
      %3504 = vmatprep.subr.bf16.mxu0 0
      %3505 = vmatpush1.bf16.msra.mxu0 0
      %3506 = vmatprep.subr.bf16.mxu0 0
      %3507 = vmatpush1.bf16.msra.mxu0 0
      %3508 = vmatprep.subr.bf16.mxu0 0
      %3509 = vmatpush1.bf16.msra.mxu0 0
      %3510 = vmatprep.subr.bf16.mxu0 0
      %3511 = vmatpush1.bf16.msra.mxu0 0
      %3512 = vmatprep.subr.bf16.mxu0 0
      %3513 = vmatpush1.bf16.msra.mxu0 0
      %3514 = vmatprep.subr.bf16.mxu0 0
      %3515 = vmatpush1.bf16.msra.mxu0 0
      %3516 = vmatprep.subr.bf16.mxu0 0
      %3517 = vmatpush1.bf16.msra.mxu0 0
      %3518 = vmatprep.subr.bf16.mxu0 0
      %3519 = vmatpush1.bf16.msra.mxu0 0
      %3520 = vmatprep.subr.bf16.mxu0 0
      %3521 = vmatpush1.bf16.msra.mxu0 0
      %3522 = vmatprep.subr.bf16.mxu0 0
      %3523 = vmatpush1.bf16.msra.mxu0 0
      %3524 = vmatprep.subr.bf16.mxu0 0
      %3525 = vmatpush1.bf16.msra.mxu0 0
      %3526 = vmatprep.subr.bf16.mxu0 0
      %3527 = vmatpush1.bf16.msra.mxu0 0
      %3528 = vmatprep.mubr.bf16.mxu0 0
      %3529 = vmatmul.mubr.bf16.gmra.mrb[0].mxu0 %v3494
      %v3530 = vpop.f32.mrb[0].mxu0
      %v3531 = vadd.f32 0.0, %v3530
      %v3532 = vpop.f32.mrb[0].mxu0
      %v3533 = vpop.f32.mrb[0].mxu0
      %v3534 = vadd.f32 0.0, %v3533
      %v3535 = vpop.f32.mrb[0].mxu0
      %3536 = vdwg.mxu0
      %v3537 = vcombine.low %v3223, %v3311
      %v3538 = vcombine.high %v3223, %v3311
      %v3540 = vunpack.c.l.s4 1983009808
      %v3541 = vunpack.c.0.s8 %v3540
      %v3542 = vlaneseq
      %v3543 = vshrl.u32 %v3542, 7
      %v3544 = vsub.s32 %v3541, %v3543
      %v3545 = vrot.slane %v3537, %v3544
      %v3547 = vunpack.c.l.s4 1983009808
      %v3548 = vunpack.c.0.s8 %v3547
      %v3549 = vlaneseq
      %v3550 = vshrl.u32 %v3549, 7
      %v3551 = vsub.s32 %v3548, %v3550
      %v3552 = vrot.slane %v3538, %v3551
      %v3553 = vcombine.low %v3267, %v3355
      %v3554 = vcombine.high %v3267, %v3355
      %v3556 = vunpack.c.l.s4 1983009808
      %v3557 = vunpack.c.0.s8 %v3556
      %v3558 = vlaneseq
      %v3559 = vshrl.u32 %v3558, 7
      %v3560 = vsub.s32 %v3557, %v3559
      %v3561 = vrot.slane %v3553, %v3560
      %v3563 = vunpack.c.l.s4 1983009808
      %v3564 = vunpack.c.0.s8 %v3563
      %v3565 = vlaneseq
      %v3566 = vshrl.u32 %v3565, 7
      %v3567 = vsub.s32 %v3564, %v3566
      %v3568 = vrot.slane %v3554, %v3567
      %v3569 = vcombine.low %v3399, %v3487
      %v3570 = vcombine.high %v3399, %v3487
      %v3572 = vunpack.c.l.s4 1983009808
      %v3573 = vunpack.c.0.s8 %v3572
      %v3574 = vlaneseq
      %v3575 = vshrl.u32 %v3574, 7
      %v3576 = vsub.s32 %v3573, %v3575
      %v3577 = vrot.slane %v3569, %v3576
      %v3579 = vunpack.c.l.s4 1983009808
      %v3580 = vunpack.c.0.s8 %v3579
      %v3581 = vlaneseq
      %v3582 = vshrl.u32 %v3581, 7
      %v3583 = vsub.s32 %v3580, %v3582
      %v3584 = vrot.slane %v3570, %v3583
      %v3585 = vcombine.low %v3443, %v3531
      %v3586 = vcombine.high %v3443, %v3531
      %v3588 = vunpack.c.l.s4 1983009808
      %v3589 = vunpack.c.0.s8 %v3588
      %v3590 = vlaneseq
      %v3591 = vshrl.u32 %v3590, 7
      %v3592 = vsub.s32 %v3589, %v3591
      %v3593 = vrot.slane %v3585, %v3592
      %v3595 = vunpack.c.l.s4 1983009808
      %v3596 = vunpack.c.0.s8 %v3595
      %v3597 = vlaneseq
      %v3598 = vshrl.u32 %v3597, 7
      %v3599 = vsub.s32 %v3596, %v3598
      %v3600 = vrot.slane %v3586, %v3599
      %v3601 = vcombine.low %v3545, %v3561
      %v3602 = vcombine.high %v3545, %v3561
      %v3604 = vunpack.c.l.s4 1934713408
      %v3605 = vunpack.c.0.s8 %v3604
      %v3606 = vlaneseq
      %v3607 = vshrl.u32 %v3606, 7
      %v3608 = vsub.s32 %v3605, %v3607
      %v3609 = vrot.slane %v3601, %v3608
      %v3611 = vunpack.c.l.s4 1934713408
      %v3612 = vunpack.c.0.s8 %v3611
      %v3613 = vlaneseq
      %v3614 = vshrl.u32 %v3613, 7
      %v3615 = vsub.s32 %v3612, %v3614
      %v3616 = vrot.slane %v3602, %v3615
      %v3617 = vcombine.low %v3552, %v3568
      %v3618 = vcombine.high %v3552, %v3568
      %v3620 = vunpack.c.l.s4 1934713408
      %v3621 = vunpack.c.0.s8 %v3620
      %v3622 = vlaneseq
      %v3623 = vshrl.u32 %v3622, 7
      %v3624 = vsub.s32 %v3621, %v3623
      %v3625 = vrot.slane %v3617, %v3624
      %v3627 = vunpack.c.l.s4 1934713408
      %v3628 = vunpack.c.0.s8 %v3627
      %v3629 = vlaneseq
      %v3630 = vshrl.u32 %v3629, 7
      %v3631 = vsub.s32 %v3628, %v3630
      %v3632 = vrot.slane %v3618, %v3631
      %v3633 = vcombine.low %v3577, %v3593
      %v3634 = vcombine.high %v3577, %v3593
      %v3636 = vunpack.c.l.s4 1934713408
      %v3637 = vunpack.c.0.s8 %v3636
      %v3638 = vlaneseq
      %v3639 = vshrl.u32 %v3638, 7
      %v3640 = vsub.s32 %v3637, %v3639
      %v3641 = vrot.slane %v3633, %v3640
      %v3643 = vunpack.c.l.s4 1934713408
      %v3644 = vunpack.c.0.s8 %v3643
      %v3645 = vlaneseq
      %v3646 = vshrl.u32 %v3645, 7
      %v3647 = vsub.s32 %v3644, %v3646
      %v3648 = vrot.slane %v3634, %v3647
      %v3649 = vcombine.low %v3584, %v3600
      %v3650 = vcombine.high %v3584, %v3600
      %v3652 = vunpack.c.l.s4 1934713408
      %v3653 = vunpack.c.0.s8 %v3652
      %v3654 = vlaneseq
      %v3655 = vshrl.u32 %v3654, 7
      %v3656 = vsub.s32 %v3653, %v3655
      %v3657 = vrot.slane %v3649, %v3656
      %v3659 = vunpack.c.l.s4 1934713408
      %v3660 = vunpack.c.0.s8 %v3659
      %v3661 = vlaneseq
      %v3662 = vshrl.u32 %v3661, 7
      %v3663 = vsub.s32 %v3660, %v3662
      %v3664 = vrot.slane %v3650, %v3663
      %v3665 = vcombine.low %v3609, %v3641
      %v3666 = vcombine.high %v3609, %v3641
      %v3667 = vcombine.low %v3616, %v3648
      %v3668 = vcombine.high %v3616, %v3648
      %v3669 = vcombine.low %v3625, %v3657
      %v3670 = vcombine.high %v3625, %v3657
      %v3671 = vcombine.low %v3632, %v3664
      %v3672 = vcombine.high %v3632, %v3664
      %v3673 = vcombine.low %v3226, %v3314
      %v3674 = vcombine.high %v3226, %v3314
      %v3676 = vunpack.c.l.s4 1983009808
      %v3677 = vunpack.c.0.s8 %v3676
      %v3678 = vlaneseq
      %v3679 = vshrl.u32 %v3678, 7
      %v3680 = vsub.s32 %v3677, %v3679
      %v3681 = vrot.slane %v3673, %v3680
      %v3683 = vunpack.c.l.s4 1983009808
      %v3684 = vunpack.c.0.s8 %v3683
      %v3685 = vlaneseq
      %v3686 = vshrl.u32 %v3685, 7
      %v3687 = vsub.s32 %v3684, %v3686
      %v3688 = vrot.slane %v3674, %v3687
      %v3689 = vcombine.low %v3270, %v3358
      %v3690 = vcombine.high %v3270, %v3358
      %v3692 = vunpack.c.l.s4 1983009808
      %v3693 = vunpack.c.0.s8 %v3692
      %v3694 = vlaneseq
      %v3695 = vshrl.u32 %v3694, 7
      %v3696 = vsub.s32 %v3693, %v3695
      %v3697 = vrot.slane %v3689, %v3696
      %v3699 = vunpack.c.l.s4 1983009808
      %v3700 = vunpack.c.0.s8 %v3699
      %v3701 = vlaneseq
      %v3702 = vshrl.u32 %v3701, 7
      %v3703 = vsub.s32 %v3700, %v3702
      %v3704 = vrot.slane %v3690, %v3703
      %v3705 = vcombine.low %v3402, %v3490
      %v3706 = vcombine.high %v3402, %v3490
      %v3708 = vunpack.c.l.s4 1983009808
      %v3709 = vunpack.c.0.s8 %v3708
      %v3710 = vlaneseq
      %v3711 = vshrl.u32 %v3710, 7
      %v3712 = vsub.s32 %v3709, %v3711
      %v3713 = vrot.slane %v3705, %v3712
      %v3715 = vunpack.c.l.s4 1983009808
      %v3716 = vunpack.c.0.s8 %v3715
      %v3717 = vlaneseq
      %v3718 = vshrl.u32 %v3717, 7
      %v3719 = vsub.s32 %v3716, %v3718
      %v3720 = vrot.slane %v3706, %v3719
      %v3721 = vcombine.low %v3446, %v3534
      %v3722 = vcombine.high %v3446, %v3534
      %v3724 = vunpack.c.l.s4 1983009808
      %v3725 = vunpack.c.0.s8 %v3724
      %v3726 = vlaneseq
      %v3727 = vshrl.u32 %v3726, 7
      %v3728 = vsub.s32 %v3725, %v3727
      %v3729 = vrot.slane %v3721, %v3728
      %v3731 = vunpack.c.l.s4 1983009808
      %v3732 = vunpack.c.0.s8 %v3731
      %v3733 = vlaneseq
      %v3734 = vshrl.u32 %v3733, 7
      %v3735 = vsub.s32 %v3732, %v3734
      %v3736 = vrot.slane %v3722, %v3735
      %v3737 = vcombine.low %v3681, %v3697
      %v3738 = vcombine.high %v3681, %v3697
      %v3740 = vunpack.c.l.s4 1934713408
      %v3741 = vunpack.c.0.s8 %v3740
      %v3742 = vlaneseq
      %v3743 = vshrl.u32 %v3742, 7
      %v3744 = vsub.s32 %v3741, %v3743
      %v3745 = vrot.slane %v3737, %v3744
      %v3747 = vunpack.c.l.s4 1934713408
      %v3748 = vunpack.c.0.s8 %v3747
      %v3749 = vlaneseq
      %v3750 = vshrl.u32 %v3749, 7
      %v3751 = vsub.s32 %v3748, %v3750
      %v3752 = vrot.slane %v3738, %v3751
      %v3753 = vcombine.low %v3688, %v3704
      %v3754 = vcombine.high %v3688, %v3704
      %v3756 = vunpack.c.l.s4 1934713408
      %v3757 = vunpack.c.0.s8 %v3756
      %v3758 = vlaneseq
      %v3759 = vshrl.u32 %v3758, 7
      %v3760 = vsub.s32 %v3757, %v3759
      %v3761 = vrot.slane %v3753, %v3760
      %v3763 = vunpack.c.l.s4 1934713408
      %v3764 = vunpack.c.0.s8 %v3763
      %v3765 = vlaneseq
      %v3766 = vshrl.u32 %v3765, 7
      %v3767 = vsub.s32 %v3764, %v3766
      %v3768 = vrot.slane %v3754, %v3767
      %v3769 = vcombine.low %v3713, %v3729
      %v3770 = vcombine.high %v3713, %v3729
      %v3772 = vunpack.c.l.s4 1934713408
      %v3773 = vunpack.c.0.s8 %v3772
      %v3774 = vlaneseq
      %v3775 = vshrl.u32 %v3774, 7
      %v3776 = vsub.s32 %v3773, %v3775
      %v3777 = vrot.slane %v3769, %v3776
      %v3779 = vunpack.c.l.s4 1934713408
      %v3780 = vunpack.c.0.s8 %v3779
      %v3781 = vlaneseq
      %v3782 = vshrl.u32 %v3781, 7
      %v3783 = vsub.s32 %v3780, %v3782
      %v3784 = vrot.slane %v3770, %v3783
      %v3785 = vcombine.low %v3720, %v3736
      %v3786 = vcombine.high %v3720, %v3736
      %v3788 = vunpack.c.l.s4 1934713408
      %v3789 = vunpack.c.0.s8 %v3788
      %v3790 = vlaneseq
      %v3791 = vshrl.u32 %v3790, 7
      %v3792 = vsub.s32 %v3789, %v3791
      %v3793 = vrot.slane %v3785, %v3792
      %v3795 = vunpack.c.l.s4 1934713408
      %v3796 = vunpack.c.0.s8 %v3795
      %v3797 = vlaneseq
      %v3798 = vshrl.u32 %v3797, 7
      %v3799 = vsub.s32 %v3796, %v3798
      %v3800 = vrot.slane %v3786, %v3799
      %v3801 = vcombine.low %v3745, %v3777
      %v3802 = vcombine.high %v3745, %v3777
      %v3803 = vcombine.low %v3752, %v3784
      %v3804 = vcombine.high %v3752, %v3784
      %v3805 = vcombine.low %v3761, %v3793
      %v3806 = vcombine.high %v3761, %v3793
      %v3807 = vcombine.low %v3768, %v3800
      %v3808 = vcombine.high %v3768, %v3800
      %v3809 = vcombine.low %v3665, %v3667
      %v3810 = vcombine.high %v3665, %v3667
      %v3812 = vunpack.c.l.s4 1983009808
      %v3813 = vunpack.c.0.s8 %v3812
      %v3814 = vlaneseq
      %v3815 = vshrl.u32 %v3814, 7
      %v3816 = vsub.s32 %v3813, %v3815
      %v3817 = vrot.slane %v3809, %v3816
      %v3819 = vunpack.c.l.s4 1983009808
      %v3820 = vunpack.c.0.s8 %v3819
      %v3821 = vlaneseq
      %v3822 = vshrl.u32 %v3821, 7
      %v3823 = vsub.s32 %v3820, %v3822
      %v3824 = vrot.slane %v3810, %v3823
      %v3825 = vcombine.low %v3666, %v3668
      %v3826 = vcombine.high %v3666, %v3668
      %v3828 = vunpack.c.l.s4 1983009808
      %v3829 = vunpack.c.0.s8 %v3828
      %v3830 = vlaneseq
      %v3831 = vshrl.u32 %v3830, 7
      %v3832 = vsub.s32 %v3829, %v3831
      %v3833 = vrot.slane %v3825, %v3832
      %v3835 = vunpack.c.l.s4 1983009808
      %v3836 = vunpack.c.0.s8 %v3835
      %v3837 = vlaneseq
      %v3838 = vshrl.u32 %v3837, 7
      %v3839 = vsub.s32 %v3836, %v3838
      %v3840 = vrot.slane %v3826, %v3839
      %v3841 = vcombine.low %v3669, %v3671
      %v3842 = vcombine.high %v3669, %v3671
      %v3844 = vunpack.c.l.s4 1983009808
      %v3845 = vunpack.c.0.s8 %v3844
      %v3846 = vlaneseq
      %v3847 = vshrl.u32 %v3846, 7
      %v3848 = vsub.s32 %v3845, %v3847
      %v3849 = vrot.slane %v3841, %v3848
      %v3851 = vunpack.c.l.s4 1983009808
      %v3852 = vunpack.c.0.s8 %v3851
      %v3853 = vlaneseq
      %v3854 = vshrl.u32 %v3853, 7
      %v3855 = vsub.s32 %v3852, %v3854
      %v3856 = vrot.slane %v3842, %v3855
      %v3857 = vcombine.low %v3670, %v3672
      %v3858 = vcombine.high %v3670, %v3672
      %v3860 = vunpack.c.l.s4 1983009808
      %v3861 = vunpack.c.0.s8 %v3860
      %v3862 = vlaneseq
      %v3863 = vshrl.u32 %v3862, 7
      %v3864 = vsub.s32 %v3861, %v3863
      %v3865 = vrot.slane %v3857, %v3864
      %v3867 = vunpack.c.l.s4 1983009808
      %v3868 = vunpack.c.0.s8 %v3867
      %v3869 = vlaneseq
      %v3870 = vshrl.u32 %v3869, 7
      %v3871 = vsub.s32 %v3868, %v3870
      %v3872 = vrot.slane %v3858, %v3871
      %v3873 = vcombine.low %v3817, %v3833
      %v3874 = vcombine.high %v3817, %v3833
      %v3876 = vunpack.c.l.s4 1934713408
      %v3877 = vunpack.c.0.s8 %v3876
      %v3878 = vlaneseq
      %v3879 = vshrl.u32 %v3878, 7
      %v3880 = vsub.s32 %v3877, %v3879
      %v3881 = vrot.slane %v3873, %v3880
      %v3883 = vunpack.c.l.s4 1934713408
      %v3884 = vunpack.c.0.s8 %v3883
      %v3885 = vlaneseq
      %v3886 = vshrl.u32 %v3885, 7
      %v3887 = vsub.s32 %v3884, %v3886
      %v3888 = vrot.slane %v3874, %v3887
      %v3889 = vcombine.low %v3824, %v3840
      %v3890 = vcombine.high %v3824, %v3840
      %v3892 = vunpack.c.l.s4 1934713408
      %v3893 = vunpack.c.0.s8 %v3892
      %v3894 = vlaneseq
      %v3895 = vshrl.u32 %v3894, 7
      %v3896 = vsub.s32 %v3893, %v3895
      %v3897 = vrot.slane %v3889, %v3896
      %v3899 = vunpack.c.l.s4 1934713408
      %v3900 = vunpack.c.0.s8 %v3899
      %v3901 = vlaneseq
      %v3902 = vshrl.u32 %v3901, 7
      %v3903 = vsub.s32 %v3900, %v3902
      %v3904 = vrot.slane %v3890, %v3903
      %v3905 = vcombine.low %v3849, %v3865
      %v3906 = vcombine.high %v3849, %v3865
      %v3908 = vunpack.c.l.s4 1934713408
      %v3909 = vunpack.c.0.s8 %v3908
      %v3910 = vlaneseq
      %v3911 = vshrl.u32 %v3910, 7
      %v3912 = vsub.s32 %v3909, %v3911
      %v3913 = vrot.slane %v3905, %v3912
      %v3915 = vunpack.c.l.s4 1934713408
      %v3916 = vunpack.c.0.s8 %v3915
      %v3917 = vlaneseq
      %v3918 = vshrl.u32 %v3917, 7
      %v3919 = vsub.s32 %v3916, %v3918
      %v3920 = vrot.slane %v3906, %v3919
      %v3921 = vcombine.low %v3856, %v3872
      %v3922 = vcombine.high %v3856, %v3872
      %v3924 = vunpack.c.l.s4 1934713408
      %v3925 = vunpack.c.0.s8 %v3924
      %v3926 = vlaneseq
      %v3927 = vshrl.u32 %v3926, 7
      %v3928 = vsub.s32 %v3925, %v3927
      %v3929 = vrot.slane %v3921, %v3928
      %v3931 = vunpack.c.l.s4 1934713408
      %v3932 = vunpack.c.0.s8 %v3931
      %v3933 = vlaneseq
      %v3934 = vshrl.u32 %v3933, 7
      %v3935 = vsub.s32 %v3932, %v3934
      %v3936 = vrot.slane %v3922, %v3935
      %v3937 = vcombine.low %v3881, %v3913
      %v3938 = vcombine.high %v3881, %v3913
      %v3939 = vcombine.low %v3888, %v3920
      %v3940 = vcombine.high %v3888, %v3920
      %v3941 = vcombine.low %v3897, %v3929
      %v3942 = vcombine.high %v3897, %v3929
      %v3943 = vcombine.low %v3904, %v3936
      %v3944 = vcombine.high %v3904, %v3936
      %v3945 = vcombine.low %v3801, %v3803
      %v3946 = vcombine.high %v3801, %v3803
      %v3948 = vunpack.c.l.s4 1983009808
      %v3949 = vunpack.c.0.s8 %v3948
      %v3950 = vlaneseq
      %v3951 = vshrl.u32 %v3950, 7
      %v3952 = vsub.s32 %v3949, %v3951
      %v3953 = vrot.slane %v3945, %v3952
      %v3955 = vunpack.c.l.s4 1983009808
      %v3956 = vunpack.c.0.s8 %v3955
      %v3957 = vlaneseq
      %v3958 = vshrl.u32 %v3957, 7
      %v3959 = vsub.s32 %v3956, %v3958
      %v3960 = vrot.slane %v3946, %v3959
      %v3961 = vcombine.low %v3802, %v3804
      %v3962 = vcombine.high %v3802, %v3804
      %v3964 = vunpack.c.l.s4 1983009808
      %v3965 = vunpack.c.0.s8 %v3964
      %v3966 = vlaneseq
      %v3967 = vshrl.u32 %v3966, 7
      %v3968 = vsub.s32 %v3965, %v3967
      %v3969 = vrot.slane %v3961, %v3968
      %v3971 = vunpack.c.l.s4 1983009808
      %v3972 = vunpack.c.0.s8 %v3971
      %v3973 = vlaneseq
      %v3974 = vshrl.u32 %v3973, 7
      %v3975 = vsub.s32 %v3972, %v3974
      %v3976 = vrot.slane %v3962, %v3975
      %v3977 = vcombine.low %v3805, %v3807
      %v3978 = vcombine.high %v3805, %v3807
      %v3980 = vunpack.c.l.s4 1983009808
      %v3981 = vunpack.c.0.s8 %v3980
      %v3982 = vlaneseq
      %v3983 = vshrl.u32 %v3982, 7
      %v3984 = vsub.s32 %v3981, %v3983
      %v3985 = vrot.slane %v3977, %v3984
      %v3987 = vunpack.c.l.s4 1983009808
      %v3988 = vunpack.c.0.s8 %v3987
      %v3989 = vlaneseq
      %v3990 = vshrl.u32 %v3989, 7
      %v3991 = vsub.s32 %v3988, %v3990
      %v3992 = vrot.slane %v3978, %v3991
      %v3993 = vcombine.low %v3806, %v3808
      %v3994 = vcombine.high %v3806, %v3808
      %v3996 = vunpack.c.l.s4 1983009808
      %v3997 = vunpack.c.0.s8 %v3996
      %v3998 = vlaneseq
      %v3999 = vshrl.u32 %v3998, 7
      %v4000 = vsub.s32 %v3997, %v3999
      %v4001 = vrot.slane %v3993, %v4000
      %v4003 = vunpack.c.l.s4 1983009808
      %v4004 = vunpack.c.0.s8 %v4003
      %v4005 = vlaneseq
      %v4006 = vshrl.u32 %v4005, 7
      %v4007 = vsub.s32 %v4004, %v4006
      %v4008 = vrot.slane %v3994, %v4007
      %v4009 = vcombine.low %v3953, %v3969
      %v4010 = vcombine.high %v3953, %v3969
      %v4012 = vunpack.c.l.s4 1934713408
      %v4013 = vunpack.c.0.s8 %v4012
      %v4014 = vlaneseq
      %v4015 = vshrl.u32 %v4014, 7
      %v4016 = vsub.s32 %v4013, %v4015
      %v4017 = vrot.slane %v4009, %v4016
      %v4019 = vunpack.c.l.s4 1934713408
      %v4020 = vunpack.c.0.s8 %v4019
      %v4021 = vlaneseq
      %v4022 = vshrl.u32 %v4021, 7
      %v4023 = vsub.s32 %v4020, %v4022
      %v4024 = vrot.slane %v4010, %v4023
      %v4025 = vcombine.low %v3960, %v3976
      %v4026 = vcombine.high %v3960, %v3976
      %v4028 = vunpack.c.l.s4 1934713408
      %v4029 = vunpack.c.0.s8 %v4028
      %v4030 = vlaneseq
      %v4031 = vshrl.u32 %v4030, 7
      %v4032 = vsub.s32 %v4029, %v4031
      %v4033 = vrot.slane %v4025, %v4032
      %v4035 = vunpack.c.l.s4 1934713408
      %v4036 = vunpack.c.0.s8 %v4035
      %v4037 = vlaneseq
      %v4038 = vshrl.u32 %v4037, 7
      %v4039 = vsub.s32 %v4036, %v4038
      %v4040 = vrot.slane %v4026, %v4039
      %v4041 = vcombine.low %v3985, %v4001
      %v4042 = vcombine.high %v3985, %v4001
      %v4044 = vunpack.c.l.s4 1934713408
      %v4045 = vunpack.c.0.s8 %v4044
      %v4046 = vlaneseq
      %v4047 = vshrl.u32 %v4046, 7
      %v4048 = vsub.s32 %v4045, %v4047
      %v4049 = vrot.slane %v4041, %v4048
      %v4051 = vunpack.c.l.s4 1934713408
      %v4052 = vunpack.c.0.s8 %v4051
      %v4053 = vlaneseq
      %v4054 = vshrl.u32 %v4053, 7
      %v4055 = vsub.s32 %v4052, %v4054
      %v4056 = vrot.slane %v4042, %v4055
      %v4057 = vcombine.low %v3992, %v4008
      %v4058 = vcombine.high %v3992, %v4008
      %v4060 = vunpack.c.l.s4 1934713408
      %v4061 = vunpack.c.0.s8 %v4060
      %v4062 = vlaneseq
      %v4063 = vshrl.u32 %v4062, 7
      %v4064 = vsub.s32 %v4061, %v4063
      %v4065 = vrot.slane %v4057, %v4064
      %v4067 = vunpack.c.l.s4 1934713408
      %v4068 = vunpack.c.0.s8 %v4067
      %v4069 = vlaneseq
      %v4070 = vshrl.u32 %v4069, 7
      %v4071 = vsub.s32 %v4068, %v4070
      %v4072 = vrot.slane %v4058, %v4071
      %v4073 = vcombine.low %v4017, %v4049
      %v4074 = vcombine.high %v4017, %v4049
      %v4075 = vcombine.low %v4024, %v4056
      %v4076 = vcombine.high %v4024, %v4056
      %v4077 = vcombine.low %v4033, %v4065
      %v4078 = vcombine.high %v4033, %v4065
      %v4079 = vcombine.low %v4040, %v4072
      %v4080 = vcombine.high %v4040, %v4072
      %4083 = vrot.lane.b32.xlu0 %v3938, 4
      %v4084 = vpop.permute.xlu0 %4083
      %4085 = vrot.lane.b32.xlu0 %v4074, 4
      %v4086 = vpop.permute.xlu0 %4085
      %4091 = vrot.lane.b32.xlu0 %v3939, 8
      %v4092 = vpop.permute.xlu0 %4091
      %4093 = vrot.lane.b32.xlu0 %v4075, 8
      %v4094 = vpop.permute.xlu0 %4093
      %4099 = vrot.lane.b32.xlu0 %v3940, 12
      %v4100 = vpop.permute.xlu0 %4099
      %4101 = vrot.lane.b32.xlu0 %v4076, 12
      %v4102 = vpop.permute.xlu0 %4101
      %4107 = vrot.lane.b32.xlu0 %v3941, 16
      %v4108 = vpop.permute.xlu0 %4107
      %4109 = vrot.lane.b32.xlu0 %v4077, 16
      %v4110 = vpop.permute.xlu0 %4109
      %4115 = vrot.lane.b32.xlu0 %v3942, 20
      %v4116 = vpop.permute.xlu0 %4115
      %4117 = vrot.lane.b32.xlu0 %v4078, 20
      %v4118 = vpop.permute.xlu0 %4117
      %4123 = vrot.lane.b32.xlu0 %v3943, 24
      %v4124 = vpop.permute.xlu0 %4123
      %4125 = vrot.lane.b32.xlu0 %v4079, 24
      %v4126 = vpop.permute.xlu0 %4125
      %4131 = vrot.lane.b32.xlu0 %v3944, 28
      %v4132 = vpop.permute.xlu0 %4131
      %4133 = vrot.lane.b32.xlu0 %v4080, 28
      %v4134 = vpop.permute.xlu0 %4133
      %v4137 = vsel %vm2623, %v3937, %v4084
      %v4138 = vsel %vm2623, %v4073, %v4086
      %vm4139 = vcmask 64512
      %v4140 = vsel %vm4139, %v4137, %v4092
      %v4141 = vsel %vm4139, %v4138, %v4094
      %vm4142 = vcmask 97280
      %v4143 = vsel %vm4142, %v4140, %v4100
      %v4144 = vsel %vm4142, %v4141, %v4102
      %v4145 = vsel %vm3000, %v4143, %v4108
      %v4146 = vsel %vm3000, %v4144, %v4110
      %vm4147 = vcmask 162816
      %v4148 = vsel %vm4147, %v4145, %v4116
      %v4149 = vsel %vm4147, %v4146, %v4118
      %vm4150 = vcmask 195584
      %v4151 = vsel %vm4150, %v4148, %v4124
      %v4152 = vsel %vm4150, %v4149, %v4126
      %vm4153 = vcmask 228352
      %v4154 = vsel %vm4153, %v4151, %v4132
      %v4155 = vsel %vm4153, %v4152, %v4134
      %v4156 = vpack.c.bf16 %v4155, %v4154
      %v4157 = vld [vmem:[%s668] sm:$0xf]
      %v4158 = vld [vmem:[%s668 + $0x4] sm:$0xf]
      %v4159 = vld [vmem:[%s668 + $0x8] sm:$0xf]
      %v4160 = vld [vmem:[%s668 + $0xc] sm:$0xf]
      %v4165 = vunpack.c.l.b16 %v4157
      %v4166 = vunpack.c.l.b16 %v4158
      %v4167 = vunpack.c.l.b16 %v4159
      %v4168 = vunpack.c.l.b16 %v4160
      %v4169 = vpack.c.b16 %v4166, %v4165
      %v4170 = vpack.c.b16 %v4168, %v4167
      %v4174 = vsel %vm715, %v4156, 0
      %4176 = vmatprep.subr.bf16.mxu0 0
      %4177 = vmatpush1.bf16.msra.mxu0 %v4169
      %4178 = vmatprep.subr.bf16.mxu0 0
      %4179 = vmatpush1.bf16.msra.mxu0 %v4170
      %4180 = vmatprep.subr.bf16.mxu0 0
      %4181 = vmatpush1.bf16.msra.mxu0 0
      %4182 = vmatprep.subr.bf16.mxu0 0
      %4183 = vmatpush1.bf16.msra.mxu0 0
      %4184 = vmatprep.subr.bf16.mxu0 0
      %4185 = vmatpush1.bf16.msra.mxu0 0
      %4186 = vmatprep.subr.bf16.mxu0 0
      %4187 = vmatpush1.bf16.msra.mxu0 0
      %4188 = vmatprep.subr.bf16.mxu0 0
      %4189 = vmatpush1.bf16.msra.mxu0 0
      %4190 = vmatprep.subr.bf16.mxu0 0
      %4191 = vmatpush1.bf16.msra.mxu0 0
      %4192 = vmatprep.subr.bf16.mxu0 0
      %4193 = vmatpush1.bf16.msra.mxu0 0
      %4194 = vmatprep.subr.bf16.mxu0 0
      %4195 = vmatpush1.bf16.msra.mxu0 0
      %4196 = vmatprep.subr.bf16.mxu0 0
      %4197 = vmatpush1.bf16.msra.mxu0 0
      %4198 = vmatprep.subr.bf16.mxu0 0
      %4199 = vmatpush1.bf16.msra.mxu0 0
      %4200 = vmatprep.subr.bf16.mxu0 0
      %4201 = vmatpush1.bf16.msra.mxu0 0
      %4202 = vmatprep.subr.bf16.mxu0 0
      %4203 = vmatpush1.bf16.msra.mxu0 0
      %4204 = vmatprep.subr.bf16.mxu0 0
      %4205 = vmatpush1.bf16.msra.mxu0 0
      %4206 = vmatprep.subr.bf16.mxu0 0
      %4207 = vmatpush1.bf16.msra.mxu0 0
      %4208 = vmatprep.mubr.bf16.mxu0 0
      %4209 = vmatmul.mubr.bf16.gmra.mrb[0].mxu0 %v4174
      %v4210 = vpop.f32.mrb[0].mxu0
      %v4211 = vadd.f32 0.0, %v4210
      %v4212 = vpop.f32.mrb[0].mxu0
      %v4213 = vpop.f32.mrb[0].mxu0
      %v4214 = vadd.f32 0.0, %v4213
      %v4215 = vpop.f32.mrb[0].mxu0
      %4216 = vdwg.mxu0
      %v4217 = vadd.f32 %v711, %v4211
      %v4218 = vadd.f32 %v712, %v4214
      %v4219 = vld [vmem:[%s671] sm:$0x1]
      %v4221 = vlaneseq
      %v4222 = vshrl.u32 %v4221, 7
      %v4223 = vsub.s32 0, %v4222
      %v4224 = vrot.slane %v4219, %v4223
      %v4226 = vadd.f32 %v4217, %v4224
      %v4227 = vadd.f32 %v4218, %v4224
      %v4228 = vld [vmem:[%s674] sm:$0x1]
      %v4229 = vld [vmem:[%s677] sm:$0x1]
      %v4230 = vsel %vm715, %v4226, 0.0
      %4231 = vadd.xlane.f32.xlu0 %v4230
      %v4232 = vpop.xlane.xlu0 %4231
      %v4233 = vsel %vm715, %v4227, 0.0
      %4234 = vadd.xlane.f32.xlu0 %v4233
      %v4235 = vpop.xlane.xlu0 %4234
      %v4236 = vmul.f32 %v4232, %v722
      %v4237 = vmul.f32 %v4235, %v722
      %v4238 = vsub.f32 %v4226, %v4236
      %v4239 = vsub.f32 %v4227, %v4237
      %v4240 = vmul.f32 %v4238, %v4238
      %v4241 = vmul.f32 %v4239, %v4239
      %v4242 = vsel %vm715, %v4240, 0.0
      %4243 = vadd.xlane.f32.xlu0 %v4242
      %v4244 = vpop.xlane.xlu0 %4243
      %v4245 = vsel %vm715, %v4241, 0.0
      %4246 = vadd.xlane.f32.xlu0 %v4245
      %v4247 = vpop.xlane.xlu0 %4246
      %v4248 = vmul.f32 %v4244, %v722
      %v4249 = vmul.f32 %v4247, %v722
      %v4250 = vadd.f32 %v4248, 1e-05
      %v4251 = vadd.f32 %v4249, 1e-05
      %v4252 = vrsqrt.pop %v4250
      %v4253 = vrsqrt.pop %v4251
      %v4254 = vmul.f32 %v4238, %v4252
      %v4255 = vmul.f32 %v4239, %v4253
      %v4257 = vlaneseq
      %v4258 = vshrl.u32 %v4257, 7
      %v4259 = vsub.s32 0, %v4258
      %v4260 = vrot.slane %v4228, %v4259
      %v4262 = vmul.f32 %v4254, %v4260
      %v4263 = vmul.f32 %v4255, %v4260
      %v4265 = vlaneseq
      %v4266 = vshrl.u32 %v4265, 7
      %v4267 = vsub.s32 0, %v4266
      %v4268 = vrot.slane %v4229, %v4267
      %v4270 = vadd.f32 %v4262, %v4268
      %v4271 = vadd.f32 %v4263, %v4268
      %v4272 = vpack.c.bf16 %v4271, %v4270
      %v4273 = vld [vmem:[%s682] sm:$0xf]
      %v4274 = vld [vmem:[%s682 + $0x4] sm:$0xf]
      %v4275 = vld [vmem:[%s682 + $0x8] sm:$0xf]
      %v4276 = vld [vmem:[%s682 + $0xc] sm:$0xf]
      %v4277 = vld [vmem:[%s685] sm:$0x1]
      %v4279 = vlaneseq
      %v4280 = vshrl.u32 %v4279, 7
      %v4281 = vsub.s32 0, %v4280
      %v4282 = vrot.slane %v4277, %v4281
      %v4288 = vunpack.c.l.b16 %v4273
      %v4289 = vunpack.c.l.b16 %v4274
      %v4290 = vunpack.c.l.b16 %v4275
      %v4291 = vunpack.c.l.b16 %v4276
      %v4292 = vpack.c.b16 %v4289, %v4288
      %v4293 = vpack.c.b16 %v4291, %v4290
      %v4297 = vsel %vm715, %v4272, 0
      %4299 = vmatprep.subr.bf16.mxu0 0
      %4300 = vmatpush1.bf16.msra.mxu0 %v4292
      %4301 = vmatprep.subr.bf16.mxu0 0
      %4302 = vmatpush1.bf16.msra.mxu0 %v4293
      %4303 = vmatprep.subr.bf16.mxu0 0
      %4304 = vmatpush1.bf16.msra.mxu0 0
      %4305 = vmatprep.subr.bf16.mxu0 0
      %4306 = vmatpush1.bf16.msra.mxu0 0
      %4307 = vmatprep.subr.bf16.mxu0 0
      %4308 = vmatpush1.bf16.msra.mxu0 0
      %4309 = vmatprep.subr.bf16.mxu0 0
      %4310 = vmatpush1.bf16.msra.mxu0 0
      %4311 = vmatprep.subr.bf16.mxu0 0
      %4312 = vmatpush1.bf16.msra.mxu0 0
      %4313 = vmatprep.subr.bf16.mxu0 0
      %4314 = vmatpush1.bf16.msra.mxu0 0
      %4315 = vmatprep.subr.bf16.mxu0 0
      %4316 = vmatpush1.bf16.msra.mxu0 0
      %4317 = vmatprep.subr.bf16.mxu0 0
      %4318 = vmatpush1.bf16.msra.mxu0 0
      %4319 = vmatprep.subr.bf16.mxu0 0
      %4320 = vmatpush1.bf16.msra.mxu0 0
      %4321 = vmatprep.subr.bf16.mxu0 0
      %4322 = vmatpush1.bf16.msra.mxu0 0
      %4323 = vmatprep.subr.bf16.mxu0 0
      %4324 = vmatpush1.bf16.msra.mxu0 0
      %4325 = vmatprep.subr.bf16.mxu0 0
      %4326 = vmatpush1.bf16.msra.mxu0 0
      %4327 = vmatprep.subr.bf16.mxu0 0
      %4328 = vmatpush1.bf16.msra.mxu0 0
      %4329 = vmatprep.subr.bf16.mxu0 0
      %4330 = vmatpush1.bf16.msra.mxu0 0
      %4331 = vmatprep.mubr.bf16.mxu0 0
      %4332 = vmatmul.mubr.bf16.gmra.mrb[0].mxu0 %v4297
      %v4333 = vpop.f32.mrb[0].mxu0
      %v4334 = vadd.f32 %v4282, %v4333
      %v4335 = vpop.f32.mrb[0].mxu0
      %v4336 = vpop.f32.mrb[0].mxu0
      %v4337 = vadd.f32 %v4282, %v4336
      %v4338 = vpop.f32.mrb[0].mxu0
      %4339 = vdwg.mxu0
      %v4340 = vxor.u32 %v4334, 2147483648
      %v4341 = vxor.u32 %v4337, 2147483648
      %v4342 = vmul.f32 %v4340, 1.442695
      %v4343 = vpow.pop %v4342
      %v4344 = vmul.f32 %v4341, 1.442695
      %v4345 = vpow.pop %v4344
      %v4346 = vadd.f32 %v4343, 1.0
      %v4347 = vadd.f32 %v4345, 1.0
      %v4348 = vrcp.pop %v4346
      %v4349 = vmul.f32 1.0, %v4348
      %v4350 = vrcp.pop %v4347
      %v4351 = vmul.f32 1.0, %v4350
      %v4352 = vmul.f32 %v4334, %v4349
      %v4353 = vmul.f32 %v4337, %v4351
      %v4354 = vpack.c.bf16 %v4353, %v4352
      %v4355 = vld [vmem:[%s690] sm:$0xf]
      %v4356 = vld [vmem:[%s690 + $0x4] sm:$0xf]
      %v4357 = vld [vmem:[%s690 + $0x8] sm:$0xf]
      %v4358 = vld [vmem:[%s690 + $0xc] sm:$0xf]
      %v4359 = vld [vmem:[%s690 + $0x10] sm:$0xf]
      %v4360 = vld [vmem:[%s690 + $0x14] sm:$0xf]
      %v4361 = vld [vmem:[%s690 + $0x18] sm:$0xf]
      %v4362 = vld [vmem:[%s690 + $0x1c] sm:$0xf]
      %v4363 = vld [vmem:[%s693] sm:$0x1]
      %v4365 = vlaneseq
      %v4366 = vshrl.u32 %v4365, 7
      %v4367 = vsub.s32 0, %v4366
      %v4368 = vrot.slane %v4363, %v4367
      %v4378 = vunpack.c.l.b16 %v4355
      %v4379 = vunpack.c.l.b16 %v4356
      %v4380 = vunpack.c.l.b16 %v4357
      %v4381 = vunpack.c.l.b16 %v4358
      %v4382 = vunpack.c.l.b16 %v4359
      %v4383 = vunpack.c.l.b16 %v4360
      %v4384 = vunpack.c.l.b16 %v4361
      %v4385 = vunpack.c.l.b16 %v4362
      %v4386 = vpack.c.b16 %v4379, %v4378
      %v4387 = vpack.c.b16 %v4381, %v4380
      %v4388 = vpack.c.b16 %v4383, %v4382
      %v4389 = vpack.c.b16 %v4385, %v4384
      %vm4394 = vcmask 523264
      %v4396 = vsel %vm4394, %v4354, 0
      %4398 = vmatprep.subr.bf16.mxu0 0
      %4399 = vmatpush1.bf16.msra.mxu0 %v4386
      %4400 = vmatprep.subr.bf16.mxu0 0
      %4401 = vmatpush1.bf16.msra.mxu0 %v4387
      %4402 = vmatprep.subr.bf16.mxu0 0
      %4403 = vmatpush1.bf16.msra.mxu0 %v4388
      %4404 = vmatprep.subr.bf16.mxu0 0
      %4405 = vmatpush1.bf16.msra.mxu0 %v4389
      %4406 = vmatprep.subr.bf16.mxu0 0
      %4407 = vmatpush1.bf16.msra.mxu0 0
      %4408 = vmatprep.subr.bf16.mxu0 0
      %4409 = vmatpush1.bf16.msra.mxu0 0
      %4410 = vmatprep.subr.bf16.mxu0 0
      %4411 = vmatpush1.bf16.msra.mxu0 0
      %4412 = vmatprep.subr.bf16.mxu0 0
      %4413 = vmatpush1.bf16.msra.mxu0 0
      %4414 = vmatprep.subr.bf16.mxu0 0
      %4415 = vmatpush1.bf16.msra.mxu0 0
      %4416 = vmatprep.subr.bf16.mxu0 0
      %4417 = vmatpush1.bf16.msra.mxu0 0
      %4418 = vmatprep.subr.bf16.mxu0 0
      %4419 = vmatpush1.bf16.msra.mxu0 0
      %4420 = vmatprep.subr.bf16.mxu0 0
      %4421 = vmatpush1.bf16.msra.mxu0 0
      %4422 = vmatprep.subr.bf16.mxu0 0
      %4423 = vmatpush1.bf16.msra.mxu0 0
      %4424 = vmatprep.subr.bf16.mxu0 0
      %4425 = vmatpush1.bf16.msra.mxu0 0
      %4426 = vmatprep.subr.bf16.mxu0 0
      %4427 = vmatpush1.bf16.msra.mxu0 0
      %4428 = vmatprep.subr.bf16.mxu0 0
      %4429 = vmatpush1.bf16.msra.mxu0 0
      %4430 = vmatprep.mubr.bf16.mxu0 0
      %4431 = vmatmul.mubr.bf16.gmra.mrb[0].mxu0 %v4396
      %v4432 = vpop.f32.mrb[0].mxu0
      %v4433 = vadd.f32 %v4368, %v4432
      %v4434 = vpop.f32.mrb[0].mxu0
      %v4435 = vpop.f32.mrb[0].mxu0
      %v4436 = vadd.f32 %v4368, %v4435
      %v4437 = vpop.f32.mrb[0].mxu0
      %4438 = vdwg.mxu0
      %v4439 = vadd.f32 %v4226, %v4433
      %v4440 = vadd.f32 %v4227, %v4436
      %4441 = vst.msk [vmem:[#allocation2] sm:$0xff] %vm715, %v4439
      %4442 = vst.msk [vmem:[#allocation2 + $0x8] sm:$0xff] %vm715, %v4440
      %p4443 = scmp.eq.s32.totalorder %s31, 1
      // Predicated region
      $region85: #{svtr_encoder_forward.4} parent=79 // pred_check
        %p4444 = pneg %p4443
      $region86: #{svtr_encoder_forward.4} parent=79 // pred_check_branch
        %4446 = sbr.rel (%p4444) target = $region88
      $region87: #{svtr_encoder_forward.4} parent=79 // pred_region
        %v4447 = vld [vmem:[%s13] sm:$0x1]
        %v4448 = vld [vmem:[%s14] sm:$0x1]
        %v4449 = vsel %vm715, %v4439, 0.0
        %4450 = vadd.xlane.f32.xlu0 %v4449
        %v4451 = vpop.xlane.xlu0 %4450
        %v4452 = vsel %vm715, %v4440, 0.0
        %4453 = vadd.xlane.f32.xlu0 %v4452
        %v4454 = vpop.xlane.xlu0 %4453
        %v4455 = vmul.f32 %v4451, %v722
        %v4456 = vmul.f32 %v4454, %v722
        %v4457 = vsub.f32 %v4439, %v4455
        %v4458 = vsub.f32 %v4440, %v4456
        %v4459 = vmul.f32 %v4457, %v4457
        %v4460 = vmul.f32 %v4458, %v4458
        %v4461 = vsel %vm715, %v4459, 0.0
        %4462 = vadd.xlane.f32.xlu0 %v4461
        %v4463 = vpop.xlane.xlu0 %4462
        %v4464 = vsel %vm715, %v4460, 0.0
        %4465 = vadd.xlane.f32.xlu0 %v4464
        %v4466 = vpop.xlane.xlu0 %4465
        %v4467 = vmul.f32 %v4463, %v722
        %v4468 = vmul.f32 %v4466, %v722
        %v4469 = vadd.f32 %v4467, 1e-06
        %v4470 = vadd.f32 %v4468, 1e-06
        %v4471 = vrsqrt.pop %v4469
        %v4472 = vrsqrt.pop %v4470
        %v4473 = vmul.f32 %v4457, %v4471
        %v4474 = vmul.f32 %v4458, %v4472
        %v4476 = vlaneseq
        %v4477 = vshrl.u32 %v4476, 7
        %v4478 = vsub.s32 0, %v4477
        %v4479 = vrot.slane %v4447, %v4478
        %v4481 = vmul.f32 %v4473, %v4479
        %v4482 = vmul.f32 %v4474, %v4479
        %v4484 = vlaneseq
        %v4485 = vshrl.u32 %v4484, 7
        %v4486 = vsub.s32 0, %v4485
        %v4487 = vrot.slane %v4448, %v4486
        %v4489 = vadd.f32 %v4481, %v4487
        %v4490 = vadd.f32 %v4482, %v4487
        %v4491 = vpack.c.bf16 %v4490, %v4489
        %v4493 = vunpack.c.l.b16 %v4491
        %v4494 = vunpack.c.h.b16 %v4491
        %v4495 = vpack.c.b16 %v4493, %v4493
        %v4496 = vpack.c.b16 %v4494, %v4494
        %vm4499 = vcmask 257024
        %4500 = vst.msk [vmem:[%s698] sm:$0xf] %vm4499, %v4495
        %4501 = vst.msk [vmem:[%s698 + $0x4] sm:$0xf] %vm4499, %v4496
      $region88: #{svtr_encoder_forward.4} parent=79 // pred_fallthru
        _
      %p4502 = scmp.lt.s32.totalorder %s30, 1
      %s4503 = scalar_select %p4502, %s30, 1
      %s4504 = smul.addr %s4503, 2
      %s4505 = smul.addr %s4504, 4
      %s4506 = scalar_lea.vmem %s15, %s4505
      // Predicated region
      $region89: #{svtr_encoder_forward.4} parent=79 // pred_check
        %p4507 = pneg %p436
      $region90: #{svtr_encoder_forward.4} parent=79 // pred_check_branch
        %4509 = sbr.rel (%p4507) target = $region92
      $region91: #{svtr_encoder_forward.4} parent=79 // pred_region
        _
      $region92: #{svtr_encoder_forward.4} parent=79 // pred_fallthru
        _
    $region80: #{svtr_encoder_forward.4} parent=5 // pred_fallthru
      _
    %p4510 = scmp.le.s32.totalorder 2, %s21
    // Predicated region
    $region93: #{svtr_encoder_forward.4} parent=5 // pred_check
      %p4511 = pneg %p4510
    $region94: #{svtr_encoder_forward.4} parent=5 // pred_check_branch
      %4513 = sbr.rel (%p4511) target = $region96
    $region95: #{svtr_encoder_forward.4} parent=5 // pred_region
      %s4514 = ssub.s32 %s21, 2
      // Predicated region
      $region97: #{svtr_encoder_forward.4} parent=95 // pred_check
        %p4515 = pneg %p442
      $region98: #{svtr_encoder_forward.4} parent=95 // pred_check_branch
        %4517 = sbr.rel (%p4515) target = $region100
      $region99: #{svtr_encoder_forward.4} parent=95 // pred_region
        %p4518 = scmp.lt.s32.totalorder %s32, 1
        %s4519 = scalar_select %p4518, %s32, 1
        %s4520 = smul.addr %s4519, 2
        %s4521 = smul.addr %s4520, 4
        %s4522 = scalar_lea.vmem %s15, %s4521
      $region100: #{svtr_encoder_forward.4} parent=95 // pred_fallthru
        _
    $region96: #{svtr_encoder_forward.4} parent=5 // pred_fallthru
      _
  $region6: #{svtr_encoder_forward.4} parent=0 // loop_footer
    %s25 = sadd.s32 1, %s21
  $region7: #{svtr_encoder_forward.4} parent=0 // loop_footer_branch
    %20 = sbr.rel target = $region3
  $region8: #{svtr_encoder_forward.4} parent=0 // loop_exit
    _

</llo_original>
